<compile_context>
chip_gen: v7x
topology: tpu7x:2x2x1
jax: 0.10.0
libtpu: 0.0.40
codegen_flags: <defaults>
</compile_context>

<pallas_src>
import functools

import jax
import jax.numpy as jnp
import numpy as np
from jax.experimental import pallas as pl
from jax.experimental.pallas import tpu as pltpu

# synthetic config (the original `config` module is external)
LSTM_HIDDEN_DIM = 32     # config.lstm_hidden_dim
INPUT_DIM = 16           # input_dim passed to SSENet.__init__
SEQ_LEN = 8
BATCH = 2


def _round8(n):
  return (n + 7) // 8 * 8


def _pack_offsets(D, H):
  """Row offsets of each weight block inside the packed (rows, 8H) slab."""
  off = {}
  r = 0
  for name, rows in (("wih0", D), ("whh0", H), ("w1a", H), ("w1b", H),
                     ("whh1", H), ("wh1", 2 * H), ("wh2", H), ("bias", 8)):
    off[name] = r
    r += _round8(rows)
  off["total"] = r
  return off


# ----------------------------------------------------------------------------
# Fused Pallas kernel: 2-layer bi-LSTM + ReLU MLP head, all VMEM-resident
# ----------------------------------------------------------------------------
def _ssenet_fused_kernel(xin_ref, wp_ref, out_ref,
                         gx_s, a0_s, asr0_s, a1_s, asr1_s,
                         *, T, B, P, H, D):
  f32 = jnp.float32
  G4, G8 = 4 * H, 8 * H
  off = _pack_offsets(D, H)

  # ---- carve the packed weight slab (static, 8-aligned row offsets) ----
  wih0 = wp_ref[off["wih0"]:off["wih0"] + D, :]            # (D, 8H)  [Wih_f^T | Wih_b^T]
  whh0 = wp_ref[off["whh0"]:off["whh0"] + H, :]            # (H, 8H)  [Whh_f^T | Whh_b^T]
  w1a = wp_ref[off["w1a"]:off["w1a"] + H, :]               # (H, 8H)
  w1b = wp_ref[off["w1b"]:off["w1b"] + H, :]               # (H, 8H)
  whh1 = wp_ref[off["whh1"]:off["whh1"] + H, :]            # (H, 8H)
  wh1 = wp_ref[off["wh1"]:off["wh1"] + 2 * H, :][:, :H]    # (2H, H)  hidden2label1^T
  wh2 = wp_ref[off["wh2"]:off["wh2"] + H, :][:, :2 * H]    # (H, 2H)  hidden2label2^T, lanes 2: zero
  bias = wp_ref[off["bias"]:off["bias"] + 8, :]            # (8, 8H)
  b0 = bias[0:1, :]                                        # layer-0 [b_f | b_b]
  b1c = bias[1:2, :]                                       # layer-1 [b_f | b_b]
  bh1 = bias[2:3, :H]
  bh2 = bias[3:4, :2 * H]

  # ---- hoisted constants ----
  row = jax.lax.broadcasted_iota(jnp.int32, (P, G4), 0)
  fwd_rows = row < B                          # rows 0:B carry the forward direction
  lane = jax.lax.broadcasted_iota(jnp.int32, (P, G4), 1)
  is_g = (lane >= 2 * H) & (lane < 3 * H)     # tanh ("g") gate block
  # single-tanh gate activation: sigmoid(x) = 0.5*tanh(0.5*x) + 0.5
  g_scale = jnp.where(is_g, 1.0, 0.5).astype(f32)
  g_shift = jnp.where(is_g, 0.0, 0.5).astype(f32)

  def run_layer(whh_cat, a_ref, asr_ref):
    # Fused fwd+bwd recurrence.  hcat rows 0:B = h_fwd(t), rows B:2B = h_bwd(T-1-t).
    h = jnp.zeros((P, H), f32)
    c = jnp.zeros((P, H), f32)
    for t in range(T):                        # static unroll, T = 8
      gfull = gx_s[t] + jnp.dot(h, whh_cat, preferred_element_type=f32)   # (P, 8H)
      # fwd rows take lanes 0:4H, bwd rows take lanes 4H:8H (128-aligned selects)
      g = jnp.where(fwd_rows, gfull[:, :G4], gfull[:, G4:])               # (P, 4H)
      tg = jnp.tanh(g * g_scale)
      act = tg * g_scale + g_shift            # i,f,o -> sigmoid ; g -> tanh
      c = act[:, H:2 * H] * c + act[:, :H] * act[:, 2 * H:3 * H]
      h = act[:, 3 * H:] * jnp.tanh(c)
      a_ref[t] = h                            # natural step order
      asr_ref[T - 1 - t] = jnp.concatenate(   # halves swapped, stored time-reversed
          [h[B:2 * B], h[:B], h[2 * B:]], axis=0)

  # ---- layer 0: hoisted input projection (one MXU matmul), then recurrence ----
  gx0 = jnp.dot(xin_ref[...], wih0, preferred_element_type=f32) + b0      # (T*P, 8H)
  gx_s[...] = gx0.reshape(T, P, G8)
  run_layer(whh0, a0_s, asr0_s)

  # ---- layer 1 ----
  # TODO(synk): inter-layer dropout omitted (inference mode == identity).
  a0 = a0_s[...].reshape(T * P, H)            # [hf0_t ; hb0_{T-1-t}] per step tile
  asr0 = asr0_s[...].reshape(T * P, H)        # [hb0_t ; hf0_{T-1-t}] per step tile
  gx1 = (jnp.dot(a0, w1a, preferred_element_type=f32)
         + jnp.dot(asr0, w1b, preferred_element_type=f32) + b1c)          # (T*P, 8H)
  gx_s[...] = gx1.reshape(T, P, G8)
  run_layer(whh1, a1_s, asr1_s)

  # ---- bilstm output + ReLU MLP head, single lane-dense (T, P, 128) store ----
  bl = jnp.concatenate([a1_s[...], asr1_s[...]], axis=2)                  # (T, P, 2H)
  blf = bl.reshape(T * P, 2 * H)
  h1 = jnp.maximum(jnp.dot(blf, wh1, preferred_element_type=f32) + bh1, 0.0)
  x2 = jnp.maximum(jnp.dot(h1, wh2, preferred_element_type=f32) + bh2, 0.0)  # lanes 2: stay 0
  out_ref[...] = jnp.concatenate([blf, x2], axis=1).reshape(T, P, 4 * H)


# ----------------------------------------------------------------------------
# SSENet forward (single pallas_call; wrapper only does boundary layout)
# ----------------------------------------------------------------------------
@jax.jit
def ssenet_forward(wpack, sequence, profile):
  del sequence  # `_sequence` / self.embed are computed but never used downstream
  B, T, D = profile.shape
  H = LSTM_HIDDEN_DIM
  P = max(8, _round8(2 * B))          # fwd rows | bwd rows, padded to full sublane tiles

  # Boundary layout only: time-major rows with the time-reversed copy stacked
  # below, so the kernel's single hoisted projection covers both directions.
  x_tm = jnp.transpose(profile, (1, 0, 2)).astype(jnp.float32)            # (T, B, D)
  xin = jnp.concatenate(
      [x_tm, x_tm[::-1], jnp.zeros((T, P - 2 * B, D), jnp.float32)],
      axis=1).reshape(T * P, D)

  kernel = functools.partial(_ssenet_fused_kernel, T=T, B=B, P=P, H=H, D=D)
  vmem = pl.BlockSpec(memory_space=pltpu.MemorySpace.VMEM)
  out = pl.pallas_call(
      kernel,
      out_shape=jax.ShapeDtypeStruct((T, P, 4 * H), jnp.float32),
      in_specs=[vmem, vmem],
      out_specs=vmem,
      scratch_shapes=[
          pltpu.VMEM((T, P, 8 * H), jnp.float32),  # gate projections (reused by both layers)
          pltpu.VMEM((T, P, H), jnp.float32),      # layer-0 hidden, natural step order
          pltpu.VMEM((T, P, H), jnp.float32),      # layer-0 hidden, swapped + time-reversed
          pltpu.VMEM((T, P, H), jnp.float32),      # layer-1 hidden, natural step order
          pltpu.VMEM((T, P, H), jnp.float32),      # layer-1 hidden, swapped + time-reversed
      ],
  )(xin, wpack)

  # Boundary layout: slice valid rows/lanes, back to batch-major.
  bilstm_out = jnp.transpose(out[:, :B, :2 * H], (1, 0, 2))               # (B, T, 2H)
  x = jnp.transpose(out[:, :B, 2 * H:2 * H + 2], (1, 0, 2))               # (B, T, 2)
  return x, bilstm_out


# ----------------------------------------------------------------------------
# One-time weight packing (outside jit, cached by the caller)
# ----------------------------------------------------------------------------
def prep_params(params):
  """Pack all SSENet weights into a single (rows, 8H) f32 slab (one DMA)."""
  H, D = LSTM_HIDDEN_DIM, INPUT_DIM
  off = _pack_offsets(D, H)
  slab = np.zeros((off["total"], 8 * H), np.float32)

  def tr(a):
    return np.asarray(a, np.float32).T

  l0, l1 = params["lstm_l0"], params["lstm_l1"]
  # layer 0: fwd | bwd concatenated along lanes
  slab[off["wih0"]:off["wih0"] + D, :] = np.concatenate(
      [tr(l0["w_ih"]), tr(l0["w_ih_rev"])], axis=1)
  slab[off["whh0"]:off["whh0"] + H, :] = np.concatenate(
      [tr(l0["w_hh"]), tr(l0["w_hh_rev"])], axis=1)
  # layer 1 input weights, split by which half of y=[hf|hb] they multiply:
  #   gx1 = A @ w1a + Aswaprev @ w1b   (see kernel)
  wf, wb = tr(l1["w_ih"]), tr(l1["w_ih_rev"])            # (2H, 4H) each
  slab[off["w1a"]:off["w1a"] + H, :] = np.concatenate([wf[:H, :], wb[H:, :]], axis=1)
  slab[off["w1b"]:off["w1b"] + H, :] = np.concatenate([wf[H:, :], wb[:H, :]], axis=1)
  slab[off["whh1"]:off["whh1"] + H, :] = np.concatenate(
      [tr(l1["w_hh"]), tr(l1["w_hh_rev"])], axis=1)
  # MLP head (lane-padded with zeros)
  slab[off["wh1"]:off["wh1"] + 2 * H, :H] = tr(params["w1"])   # (2H, H)
  slab[off["wh2"]:off["wh2"] + H, :2] = tr(params["w2"])       # (H, 2)
  # biases, one row each inside a single aligned 8-row block
  b = off["bias"]
  slab[b + 0, :] = np.concatenate([np.asarray(l0["b"]), np.asarray(l0["b_rev"])])
  slab[b + 1, :] = np.concatenate([np.asarray(l1["b"]), np.asarray(l1["b_rev"])])
  slab[b + 2, :H] = np.asarray(params["b1"])
  slab[b + 3, :2] = np.asarray(params["b2"])
  return jnp.asarray(slab)


# ----------------------------------------------------------------------------
# Deterministic synthetic parameters
# ----------------------------------------------------------------------------
def init_params(key):
  H = LSTM_HIDDEN_DIM

  def normal(k, shape, scale=0.1):
    return scale * jax.random.normal(k, shape, dtype=jnp.float32)

  keys = iter(jax.random.split(key, 32))
  params = {}
  for layer in range(2):
    din = INPUT_DIM if layer == 0 else 2 * H
    params["lstm_l%d" % layer] = {
        # `b` stands in for b_ih + b_hh (they only appear summed)
        "w_ih": normal(next(keys), (4 * H, din)),
        "w_hh": normal(next(keys), (4 * H, H)),
        "b": normal(next(keys), (4 * H,)),
        "w_ih_rev": normal(next(keys), (4 * H, din)),
        "w_hh_rev": normal(next(keys), (4 * H, H)),
        "b_rev": normal(next(keys), (4 * H,)),
    }
  params["w1"] = normal(next(keys), (H, 2 * H))      # hidden2label1
  params["b1"] = normal(next(keys), (H,))
  params["w2"] = normal(next(keys), (2, H))          # hidden2label2
  params["b2"] = normal(next(keys), (2,))
  return params


# ----------------------------------------------------------------------------
# Pure-JAX reference for verification
# ----------------------------------------------------------------------------
def _ref_lstm_dir(x, w_ih, w_hh, b, H):
  B = x.shape[1]

  def step(carry, xt):
    h, c = carry
    gates = xt @ w_ih.T + h @ w_hh.T + b
    i = jax.nn.sigmoid(gates[:, :H])
    f = jax.nn.sigmoid(gates[:, H:2 * H])
    g = jnp.tanh(gates[:, 2 * H:3 * H])
    o = jax.nn.sigmoid(gates[:, 3 * H:])
    c = f * c + i * g
    h = o * jnp.tanh(c)
    return (h, c), h

  init = (jnp.zeros((B, H), jnp.float32), jnp.zeros((B, H), jnp.float32))
  _, hs = jax.lax.scan(step, init, x)
  return hs


def ref_forward(params, profile):
  H = LSTM_HIDDEN_DIM
  layer_in = jnp.transpose(profile, (1, 0, 2)).astype(jnp.float32)
  for layer in range(2):
    p = params["lstm_l%d" % layer]
    h_f = _ref_lstm_dir(layer_in, p["w_ih"], p["w_hh"], p["b"], H)
    h_b = _ref_lstm_dir(layer_in[::-1], p["w_ih_rev"], p["w_hh_rev"],
                        p["b_rev"], H)[::-1]
    layer_in = jnp.concatenate([h_f, h_b], axis=-1)
  bilstm_out = jnp.transpose(layer_in, (1, 0, 2))
  x = jnp.maximum(bilstm_out @ params["w1"].T + params["b1"], 0.0)
  x = jnp.maximum(x @ params["w2"].T + params["b2"], 0.0)
  return x, bilstm_out


# ----------------------------------------------------------------------------
if __name__ == "__main__":
  key = jax.random.PRNGKey(0)
  k_param, k_seq, k_prof = jax.random.split(key, 3)

  params = init_params(k_param)
  wpack = prep_params(params)          # one-time packing, cached outside jit
  sequence = jax.random.randint(k_seq, (BATCH, SEQ_LEN), 0, 25, dtype=jnp.int32)
  profile = jax.random.normal(k_prof, (BATCH, SEQ_LEN, INPUT_DIM),
                              dtype=jnp.float32)

  x_out, bilstm_out = ssenet_forward(wpack, sequence, profile)
  jax.block_until_ready((x_out, bilstm_out))

  x_ref, bl_ref = ref_forward(params, profile)
  assert x_out.shape == (BATCH, SEQ_LEN, 2)
  assert bilstm_out.shape == (BATCH, SEQ_LEN, 2 * LSTM_HIDDEN_DIM)
  assert np.allclose(np.asarray(bilstm_out), np.asarray(bl_ref), atol=5e-5)
  assert np.allclose(np.asarray(x_out), np.asarray(x_ref), atol=5e-5)

  print("KERNEL_OK")
</pallas_src>

<mosaic_0001>
module attributes {stable_mosaic.version = 11 : i64} {
  func.func @_ssenet_fused_kernel(%arg0: memref<64x16xf32, #tpu.memory_space<vmem>>, %arg1: memref<248x256xf32, #tpu.memory_space<vmem>>, %arg2: memref<8x8x128xf32, #tpu.memory_space<vmem>>, %arg3: memref<8x8x256xf32, #tpu.memory_space<vmem>>, %arg4: memref<8x8x32xf32, #tpu.memory_space<vmem>>, %arg5: memref<8x8x32xf32, #tpu.memory_space<vmem>>, %arg6: memref<8x8x32xf32, #tpu.memory_space<vmem>>, %arg7: memref<8x8x32xf32, #tpu.memory_space<vmem>>) attributes {dimension_semantics = [], scalar_prefetch = 0 : i64, scratch_operands = 5 : i64, tpu.core_type = #tpu.core_type<tc>} {
    %c0 = arith.constant 0 : index
    %c0_0 = arith.constant 0 : index
    %0 = vector.load %arg1[%c0, %c0_0] : memref<248x256xf32, #tpu.memory_space<vmem>>, vector<16x256xf32>
    %c16 = arith.constant 16 : index
    %c0_1 = arith.constant 0 : index
    %1 = vector.load %arg1[%c16, %c0_1] : memref<248x256xf32, #tpu.memory_space<vmem>>, vector<32x256xf32>
    %c48 = arith.constant 48 : index
    %c0_2 = arith.constant 0 : index
    %2 = vector.load %arg1[%c48, %c0_2] : memref<248x256xf32, #tpu.memory_space<vmem>>, vector<32x256xf32>
    %c80 = arith.constant 80 : index
    %c0_3 = arith.constant 0 : index
    %3 = vector.load %arg1[%c80, %c0_3] : memref<248x256xf32, #tpu.memory_space<vmem>>, vector<32x256xf32>
    %c112 = arith.constant 112 : index
    %c0_4 = arith.constant 0 : index
    %4 = vector.load %arg1[%c112, %c0_4] : memref<248x256xf32, #tpu.memory_space<vmem>>, vector<32x256xf32>
    %c144 = arith.constant 144 : index
    %c0_5 = arith.constant 0 : index
    %5 = vector.load %arg1[%c144, %c0_5] : memref<248x256xf32, #tpu.memory_space<vmem>>, vector<64x256xf32>
    %6 = vector.extract_strided_slice %5 {offsets = [0, 0], sizes = [64, 32], strides = [1, 1]} : vector<64x256xf32> to vector<64x32xf32>
    %c208 = arith.constant 208 : index
    %c0_6 = arith.constant 0 : index
    %7 = vector.load %arg1[%c208, %c0_6] : memref<248x256xf32, #tpu.memory_space<vmem>>, vector<32x256xf32>
    %8 = vector.extract_strided_slice %7 {offsets = [0, 0], sizes = [32, 64], strides = [1, 1]} : vector<32x256xf32> to vector<32x64xf32>
    %c240 = arith.constant 240 : index
    %c0_7 = arith.constant 0 : index
    %9 = vector.load %arg1[%c240, %c0_7] : memref<248x256xf32, #tpu.memory_space<vmem>>, vector<8x256xf32>
    %10 = vector.extract_strided_slice %9 {offsets = [0, 0], sizes = [1, 256], strides = [1, 1]} : vector<8x256xf32> to vector<1x256xf32>
    %11 = vector.extract_strided_slice %9 {offsets = [1, 0], sizes = [1, 256], strides = [1, 1]} : vector<8x256xf32> to vector<1x256xf32>
    %12 = vector.extract_strided_slice %9 {offsets = [2, 0], sizes = [1, 32], strides = [1, 1]} : vector<8x256xf32> to vector<1x32xf32>
    %13 = vector.extract_strided_slice %9 {offsets = [3, 0], sizes = [1, 64], strides = [1, 1]} : vector<8x256xf32> to vector<1x64xf32>
    %14 = tpu.iota {dimensions = array<i32: 0>} : vector<8x128xi32>
    %c2_i32 = arith.constant 2 : i32
    %15 = vector.broadcast %c2_i32 : i32 to vector<8x128xi32>
    %16 = arith.cmpi slt, %14, %15 : vector<8x128xi32>
    %17 = tpu.iota {dimensions = array<i32: 1>} : vector<8x128xi32>
    %c64_i32 = arith.constant 64 : i32
    %18 = vector.broadcast %c64_i32 : i32 to vector<8x128xi32>
    %19 = arith.cmpi sge, %17, %18 : vector<8x128xi32>
    %c96_i32 = arith.constant 96 : i32
    %20 = vector.broadcast %c96_i32 : i32 to vector<8x128xi32>
    %21 = arith.cmpi slt, %17, %20 : vector<8x128xi32>
    %22 = arith.andi %19, %21 : vector<8x128xi1>
    %cst = arith.constant 1.000000e+00 : f32
    %cst_8 = arith.constant 5.000000e-01 : f32
    %23 = vector.broadcast %cst : f32 to vector<8x128xf32>
    %24 = vector.broadcast %cst_8 : f32 to vector<8x128xf32>
    %25 = arith.select %22, %23, %24 : vector<8x128xi1>, vector<8x128xf32>
    %cst_9 = arith.constant 0.000000e+00 : f32
    %cst_10 = arith.constant 5.000000e-01 : f32
    %26 = vector.broadcast %cst_9 : f32 to vector<8x128xf32>
    %27 = vector.broadcast %cst_10 : f32 to vector<8x128xf32>
    %28 = arith.select %22, %26, %27 : vector<8x128xi1>, vector<8x128xf32>
    %c0_11 = arith.constant 0 : index
    %c0_12 = arith.constant 0 : index
    %29 = vector.load %arg0[%c0_11, %c0_12] : memref<64x16xf32, #tpu.memory_space<vmem>>, vector<64x16xf32>
    %cst_13 = arith.constant dense<0.000000e+00> : vector<64x256xf32>
    %30 = tpu.matmul %29, %0, %cst_13 {dimension_numbers = #tpu.dot_dimension_numbers<[1], [0], [0], [1], [0, 0, 1, 1], [], []>} : vector<64x16xf32>, vector<16x256xf32>, vector<64x256xf32> -> vector<64x256xf32>
    %31 = vector.broadcast %10 : vector<1x256xf32> to vector<64x256xf32>
    %32 = arith.addf %30, %31 : vector<64x256xf32>
    %33 = vector.shape_cast %32 : vector<64x256xf32> to vector<8x8x256xf32>
    %c0_14 = arith.constant 0 : index
    %c0_15 = arith.constant 0 : index
    %c0_16 = arith.constant 0 : index
    %34 = vector.load %arg3[%c0_14, %c0_15, %c0_16] : memref<8x8x256xf32, #tpu.memory_space<vmem>>, vector<8x8x256xf32>
    tpu.vector_store %arg3[%c0_14, %c0_15, %c0_16], %33 {strides = array<i32>} : memref<8x8x256xf32, #tpu.memory_space<vmem>>, vector<8x8x256xf32>,
    %cst_17 = arith.constant 0.000000e+00 : f32
    %35 = vector.broadcast %cst_17 : f32 to vector<8x32xf32>
    %cst_18 = arith.constant 0.000000e+00 : f32
    %36 = vector.broadcast %cst_18 : f32 to vector<8x32xf32>
    %c0_19 = arith.constant 0 : index
    %c0_20 = arith.constant 0 : index
    %c0_21 = arith.constant 0 : index
    %37 = vector.load %arg3[%c0_19, %c0_20, %c0_21] : memref<8x8x256xf32, #tpu.memory_space<vmem>>, vector<1x8x256xf32>
    %38 = vector.shape_cast %37 : vector<1x8x256xf32> to vector<8x256xf32>
    %cst_22 = arith.constant dense<0.000000e+00> : vector<8x256xf32>
    %39 = tpu.matmul %35, %1, %cst_22 {dimension_numbers = #tpu.dot_dimension_numbers<[1], [0], [0], [1], [0, 0, 1, 1], [], []>} : vector<8x32xf32>, vector<32x256xf32>, vector<8x256xf32> -> vector<8x256xf32>
    %40 = arith.addf %38, %39 : vector<8x256xf32>
    %41 = vector.extract_strided_slice %40 {offsets = [0, 0], sizes = [8, 128], strides = [1, 1]} : vector<8x256xf32> to vector<8x128xf32>
    %42 = vector.extract_strided_slice %40 {offsets = [0, 128], sizes = [8, 128], strides = [1, 1]} : vector<8x256xf32> to vector<8x128xf32>
    %43 = arith.select %16, %41, %42 : vector<8x128xi1>, vector<8x128xf32>
    %44 = arith.mulf %43, %25 : vector<8x128xf32>
    %45 = math.tanh %44 : vector<8x128xf32>
    %46 = arith.mulf %45, %25 : vector<8x128xf32>
    %47 = arith.addf %46, %28 : vector<8x128xf32>
    %48 = vector.extract_strided_slice %47 {offsets = [0, 32], sizes = [8, 32], strides = [1, 1]} : vector<8x128xf32> to vector<8x32xf32>
    %49 = arith.mulf %48, %36 : vector<8x32xf32>
    %50 = vector.extract_strided_slice %47 {offsets = [0, 0], sizes = [8, 32], strides = [1, 1]} : vector<8x128xf32> to vector<8x32xf32>
    %51 = vector.extract_strided_slice %47 {offsets = [0, 64], sizes = [8, 32], strides = [1, 1]} : vector<8x128xf32> to vector<8x32xf32>
    %52 = arith.mulf %50, %51 : vector<8x32xf32>
    %53 = arith.addf %49, %52 : vector<8x32xf32>
    %54 = vector.extract_strided_slice %47 {offsets = [0, 96], sizes = [8, 32], strides = [1, 1]} : vector<8x128xf32> to vector<8x32xf32>
    %55 = math.tanh %53 : vector<8x32xf32>
    %56 = arith.mulf %54, %55 : vector<8x32xf32>
    %c0_23 = arith.constant 0 : index
    %c0_24 = arith.constant 0 : index
    %c0_25 = arith.constant 0 : index
    %57 = vector.load %arg4[%c0_23, %c0_24, %c0_25] : memref<8x8x32xf32, #tpu.memory_space<vmem>>, vector<1x8x32xf32>
    %58 = vector.shape_cast %57 : vector<1x8x32xf32> to vector<8x32xf32>
    %59 = vector.shape_cast %56 : vector<8x32xf32> to vector<1x8x32xf32>
    tpu.vector_store %arg4[%c0_23, %c0_24, %c0_25], %59 {strides = array<i32>} : memref<8x8x32xf32, #tpu.memory_space<vmem>>, vector<1x8x32xf32>,
    %60 = vector.extract_strided_slice %56 {offsets = [2, 0], sizes = [2, 32], strides = [1, 1]} : vector<8x32xf32> to vector<2x32xf32>
    %61 = vector.extract_strided_slice %56 {offsets = [0, 0], sizes = [2, 32], strides = [1, 1]} : vector<8x32xf32> to vector<2x32xf32>
    %62 = vector.extract_strided_slice %56 {offsets = [4, 0], sizes = [4, 32], strides = [1, 1]} : vector<8x32xf32> to vector<4x32xf32>
    %63 = tpu.concatenate %60, %61, %62 in 0 : vector<2x32xf32>, vector<2x32xf32>, vector<4x32xf32> -> vector<8x32xf32>
    %c7 = arith.constant 7 : index
    %c0_26 = arith.constant 0 : index
    %c0_27 = arith.constant 0 : index
    %64 = vector.load %arg5[%c7, %c0_26, %c0_27] : memref<8x8x32xf32, #tpu.memory_space<vmem>>, vector<1x8x32xf32>
    %65 = vector.shape_cast %64 : vector<1x8x32xf32> to vector<8x32xf32>
    %66 = vector.shape_cast %63 : vector<8x32xf32> to vector<1x8x32xf32>
    tpu.vector_store %arg5[%c7, %c0_26, %c0_27], %66 {strides = array<i32>} : memref<8x8x32xf32, #tpu.memory_space<vmem>>, vector<1x8x32xf32>,
    %c1 = arith.constant 1 : index
    %c0_28 = arith.constant 0 : index
    %c0_29 = arith.constant 0 : index
    %67 = vector.load %arg3[%c1, %c0_28, %c0_29] : memref<8x8x256xf32, #tpu.memory_space<vmem>>, vector<1x8x256xf32>
    %68 = vector.shape_cast %67 : vector<1x8x256xf32> to vector<8x256xf32>
    %cst_30 = arith.constant dense<0.000000e+00> : vector<8x256xf32>
    %69 = tpu.matmul %56, %1, %cst_30 {dimension_numbers = #tpu.dot_dimension_numbers<[1], [0], [0], [1], [0, 0, 1, 1], [], []>} : vector<8x32xf32>, vector<32x256xf32>, vector<8x256xf32> -> vector<8x256xf32>
    %70 = arith.addf %68, %69 : vector<8x256xf32>
    %71 = vector.extract_strided_slice %70 {offsets = [0, 0], sizes = [8, 128], strides = [1, 1]} : vector<8x256xf32> to vector<8x128xf32>
    %72 = vector.extract_strided_slice %70 {offsets = [0, 128], sizes = [8, 128], strides = [1, 1]} : vector<8x256xf32> to vector<8x128xf32>
    %73 = arith.select %16, %71, %72 : vector<8x128xi1>, vector<8x128xf32>
    %74 = arith.mulf %73, %25 : vector<8x128xf32>
    %75 = math.tanh %74 : vector<8x128xf32>
    %76 = arith.mulf %75, %25 : vector<8x128xf32>
    %77 = arith.addf %76, %28 : vector<8x128xf32>
    %78 = vector.extract_strided_slice %77 {offsets = [0, 32], sizes = [8, 32], strides = [1, 1]} : vector<8x128xf32> to vector<8x32xf32>
    %79 = arith.mulf %78, %53 : vector<8x32xf32>
    %80 = vector.extract_strided_slice %77 {offsets = [0, 0], sizes = [8, 32], strides = [1, 1]} : vector<8x128xf32> to vector<8x32xf32>
    %81 = vector.extract_strided_slice %77 {offsets = [0, 64], sizes = [8, 32], strides = [1, 1]} : vector<8x128xf32> to vector<8x32xf32>
    %82 = arith.mulf %80, %81 : vector<8x32xf32>
    %83 = arith.addf %79, %82 : vector<8x32xf32>
    %84 = vector.extract_strided_slice %77 {offsets = [0, 96], sizes = [8, 32], strides = [1, 1]} : vector<8x128xf32> to vector<8x32xf32>
    %85 = math.tanh %83 : vector<8x32xf32>
    %86 = arith.mulf %84, %85 : vector<8x32xf32>
    %c1_31 = arith.constant 1 : index
    %c0_32 = arith.constant 0 : index
    %c0_33 = arith.constant 0 : index
    %87 = vector.load %arg4[%c1_31, %c0_32, %c0_33] : memref<8x8x32xf32, #tpu.memory_space<vmem>>, vector<1x8x32xf32>
    %88 = vector.shape_cast %87 : vector<1x8x32xf32> to vector<8x32xf32>
    %89 = vector.shape_cast %86 : vector<8x32xf32> to vector<1x8x32xf32>
    tpu.vector_store %arg4[%c1_31, %c0_32, %c0_33], %89 {strides = array<i32>} : memref<8x8x32xf32, #tpu.memory_space<vmem>>, vector<1x8x32xf32>,
    %90 = vector.extract_strided_slice %86 {offsets = [2, 0], sizes = [2, 32], strides = [1, 1]} : vector<8x32xf32> to vector<2x32xf32>
    %91 = vector.extract_strided_slice %86 {offsets = [0, 0], sizes = [2, 32], strides = [1, 1]} : vector<8x32xf32> to vector<2x32xf32>
    %92 = vector.extract_strided_slice %86 {offsets = [4, 0], sizes = [4, 32], strides = [1, 1]} : vector<8x32xf32> to vector<4x32xf32>
    %93 = tpu.concatenate %90, %91, %92 in 0 : vector<2x32xf32>, vector<2x32xf32>, vector<4x32xf32> -> vector<8x32xf32>
    %c6 = arith.constant 6 : index
    %c0_34 = arith.constant 0 : index
    %c0_35 = arith.constant 0 : index
    %94 = vector.load %arg5[%c6, %c0_34, %c0_35] : memref<8x8x32xf32, #tpu.memory_space<vmem>>, vector<1x8x32xf32>
    %95 = vector.shape_cast %94 : vector<1x8x32xf32> to vector<8x32xf32>
    %96 = vector.shape_cast %93 : vector<8x32xf32> to vector<1x8x32xf32>
    tpu.vector_store %arg5[%c6, %c0_34, %c0_35], %96 {strides = array<i32>} : memref<8x8x32xf32, #tpu.memory_space<vmem>>, vector<1x8x32xf32>,
    %c2 = arith.constant 2 : index
    %c0_36 = arith.constant 0 : index
    %c0_37 = arith.constant 0 : index
    %97 = vector.load %arg3[%c2, %c0_36, %c0_37] : memref<8x8x256xf32, #tpu.memory_space<vmem>>, vector<1x8x256xf32>
    %98 = vector.shape_cast %97 : vector<1x8x256xf32> to vector<8x256xf32>
    %cst_38 = arith.constant dense<0.000000e+00> : vector<8x256xf32>
    %99 = tpu.matmul %86, %1, %cst_38 {dimension_numbers = #tpu.dot_dimension_numbers<[1], [0], [0], [1], [0, 0, 1, 1], [], []>} : vector<8x32xf32>, vector<32x256xf32>, vector<8x256xf32> -> vector<8x256xf32>
    %100 = arith.addf %98, %99 : vector<8x256xf32>
    %101 = vector.extract_strided_slice %100 {offsets = [0, 0], sizes = [8, 128], strides = [1, 1]} : vector<8x256xf32> to vector<8x128xf32>
    %102 = vector.extract_strided_slice %100 {offsets = [0, 128], sizes = [8, 128], strides = [1, 1]} : vector<8x256xf32> to vector<8x128xf32>
    %103 = arith.select %16, %101, %102 : vector<8x128xi1>, vector<8x128xf32>
    %104 = arith.mulf %103, %25 : vector<8x128xf32>
    %105 = math.tanh %104 : vector<8x128xf32>
    %106 = arith.mulf %105, %25 : vector<8x128xf32>
    %107 = arith.addf %106, %28 : vector<8x128xf32>
    %108 = vector.extract_strided_slice %107 {offsets = [0, 32], sizes = [8, 32], strides = [1, 1]} : vector<8x128xf32> to vector<8x32xf32>
    %109 = arith.mulf %108, %83 : vector<8x32xf32>
    %110 = vector.extract_strided_slice %107 {offsets = [0, 0], sizes = [8, 32], strides = [1, 1]} : vector<8x128xf32> to vector<8x32xf32>
    %111 = vector.extract_strided_slice %107 {offsets = [0, 64], sizes = [8, 32], strides = [1, 1]} : vector<8x128xf32> to vector<8x32xf32>
    %112 = arith.mulf %110, %111 : vector<8x32xf32>
    %113 = arith.addf %109, %112 : vector<8x32xf32>
    %114 = vector.extract_strided_slice %107 {offsets = [0, 96], sizes = [8, 32], strides = [1, 1]} : vector<8x128xf32> to vector<8x32xf32>
    %115 = math.tanh %113 : vector<8x32xf32>
    %116 = arith.mulf %114, %115 : vector<8x32xf32>
    %c2_39 = arith.constant 2 : index
    %c0_40 = arith.constant 0 : index
    %c0_41 = arith.constant 0 : index
    %117 = vector.load %arg4[%c2_39, %c0_40, %c0_41] : memref<8x8x32xf32, #tpu.memory_space<vmem>>, vector<1x8x32xf32>
    %118 = vector.shape_cast %117 : vector<1x8x32xf32> to vector<8x32xf32>
    %119 = vector.shape_cast %116 : vector<8x32xf32> to vector<1x8x32xf32>
    tpu.vector_store %arg4[%c2_39, %c0_40, %c0_41], %119 {strides = array<i32>} : memref<8x8x32xf32, #tpu.memory_space<vmem>>, vector<1x8x32xf32>,
    %120 = vector.extract_strided_slice %116 {offsets = [2, 0], sizes = [2, 32], strides = [1, 1]} : vector<8x32xf32> to vector<2x32xf32>
    %121 = vector.extract_strided_slice %116 {offsets = [0, 0], sizes = [2, 32], strides = [1, 1]} : vector<8x32xf32> to vector<2x32xf32>
    %122 = vector.extract_strided_slice %116 {offsets = [4, 0], sizes = [4, 32], strides = [1, 1]} : vector<8x32xf32> to vector<4x32xf32>
    %123 = tpu.concatenate %120, %121, %122 in 0 : vector<2x32xf32>, vector<2x32xf32>, vector<4x32xf32> -> vector<8x32xf32>
    %c5 = arith.constant 5 : index
    %c0_42 = arith.constant 0 : index
    %c0_43 = arith.constant 0 : index
    %124 = vector.load %arg5[%c5, %c0_42, %c0_43] : memref<8x8x32xf32, #tpu.memory_space<vmem>>, vector<1x8x32xf32>
    %125 = vector.shape_cast %124 : vector<1x8x32xf32> to vector<8x32xf32>
    %126 = vector.shape_cast %123 : vector<8x32xf32> to vector<1x8x32xf32>
    tpu.vector_store %arg5[%c5, %c0_42, %c0_43], %126 {strides = array<i32>} : memref<8x8x32xf32, #tpu.memory_space<vmem>>, vector<1x8x32xf32>,
    %c3 = arith.constant 3 : index
    %c0_44 = arith.constant 0 : index
    %c0_45 = arith.constant 0 : index
    %127 = vector.load %arg3[%c3, %c0_44, %c0_45] : memref<8x8x256xf32, #tpu.memory_space<vmem>>, vector<1x8x256xf32>
    %128 = vector.shape_cast %127 : vector<1x8x256xf32> to vector<8x256xf32>
    %cst_46 = arith.constant dense<0.000000e+00> : vector<8x256xf32>
    %129 = tpu.matmul %116, %1, %cst_46 {dimension_numbers = #tpu.dot_dimension_numbers<[1], [0], [0], [1], [0, 0, 1, 1], [], []>} : vector<8x32xf32>, vector<32x256xf32>, vector<8x256xf32> -> vector<8x256xf32>
    %130 = arith.addf %128, %129 : vector<8x256xf32>
    %131 = vector.extract_strided_slice %130 {offsets = [0, 0], sizes = [8, 128], strides = [1, 1]} : vector<8x256xf32> to vector<8x128xf32>
    %132 = vector.extract_strided_slice %130 {offsets = [0, 128], sizes = [8, 128], strides = [1, 1]} : vector<8x256xf32> to vector<8x128xf32>
    %133 = arith.select %16, %131, %132 : vector<8x128xi1>, vector<8x128xf32>
    %134 = arith.mulf %133, %25 : vector<8x128xf32>
    %135 = math.tanh %134 : vector<8x128xf32>
    %136 = arith.mulf %135, %25 : vector<8x128xf32>
    %137 = arith.addf %136, %28 : vector<8x128xf32>
    %138 = vector.extract_strided_slice %137 {offsets = [0, 32], sizes = [8, 32], strides = [1, 1]} : vector<8x128xf32> to vector<8x32xf32>
    %139 = arith.mulf %138, %113 : vector<8x32xf32>
    %140 = vector.extract_strided_slice %137 {offsets = [0, 0], sizes = [8, 32], strides = [1, 1]} : vector<8x128xf32> to vector<8x32xf32>
    %141 = vector.extract_strided_slice %137 {offsets = [0, 64], sizes = [8, 32], strides = [1, 1]} : vector<8x128xf32> to vector<8x32xf32>
    %142 = arith.mulf %140, %141 : vector<8x32xf32>
    %143 = arith.addf %139, %142 : vector<8x32xf32>
    %144 = vector.extract_strided_slice %137 {offsets = [0, 96], sizes = [8, 32], strides = [1, 1]} : vector<8x128xf32> to vector<8x32xf32>
    %145 = math.tanh %143 : vector<8x32xf32>
    %146 = arith.mulf %144, %145 : vector<8x32xf32>
    %c3_47 = arith.constant 3 : index
    %c0_48 = arith.constant 0 : index
    %c0_49 = arith.constant 0 : index
    %147 = vector.load %arg4[%c3_47, %c0_48, %c0_49] : memref<8x8x32xf32, #tpu.memory_space<vmem>>, vector<1x8x32xf32>
    %148 = vector.shape_cast %147 : vector<1x8x32xf32> to vector<8x32xf32>
    %149 = vector.shape_cast %146 : vector<8x32xf32> to vector<1x8x32xf32>
    tpu.vector_store %arg4[%c3_47, %c0_48, %c0_49], %149 {strides = array<i32>} : memref<8x8x32xf32, #tpu.memory_space<vmem>>, vector<1x8x32xf32>,
    %150 = vector.extract_strided_slice %146 {offsets = [2, 0], sizes = [2, 32], strides = [1, 1]} : vector<8x32xf32> to vector<2x32xf32>
    %151 = vector.extract_strided_slice %146 {offsets = [0, 0], sizes = [2, 32], strides = [1, 1]} : vector<8x32xf32> to vector<2x32xf32>
    %152 = vector.extract_strided_slice %146 {offsets = [4, 0], sizes = [4, 32], strides = [1, 1]} : vector<8x32xf32> to vector<4x32xf32>
    %153 = tpu.concatenate %150, %151, %152 in 0 : vector<2x32xf32>, vector<2x32xf32>, vector<4x32xf32> -> vector<8x32xf32>
    %c4 = arith.constant 4 : index
    %c0_50 = arith.constant 0 : index
    %c0_51 = arith.constant 0 : index
    %154 = vector.load %arg5[%c4, %c0_50, %c0_51] : memref<8x8x32xf32, #tpu.memory_space<vmem>>, vector<1x8x32xf32>
    %155 = vector.shape_cast %154 : vector<1x8x32xf32> to vector<8x32xf32>
    %156 = vector.shape_cast %153 : vector<8x32xf32> to vector<1x8x32xf32>
    tpu.vector_store %arg5[%c4, %c0_50, %c0_51], %156 {strides = array<i32>} : memref<8x8x32xf32, #tpu.memory_space<vmem>>, vector<1x8x32xf32>,
    %c4_52 = arith.constant 4 : index
    %c0_53 = arith.constant 0 : index
    %c0_54 = arith.constant 0 : index
    %157 = vector.load %arg3[%c4_52, %c0_53, %c0_54] : memref<8x8x256xf32, #tpu.memory_space<vmem>>, vector<1x8x256xf32>
    %158 = vector.shape_cast %157 : vector<1x8x256xf32> to vector<8x256xf32>
    %cst_55 = arith.constant dense<0.000000e+00> : vector<8x256xf32>
    %159 = tpu.matmul %146, %1, %cst_55 {dimension_numbers = #tpu.dot_dimension_numbers<[1], [0], [0], [1], [0, 0, 1, 1], [], []>} : vector<8x32xf32>, vector<32x256xf32>, vector<8x256xf32> -> vector<8x256xf32>
    %160 = arith.addf %158, %159 : vector<8x256xf32>
    %161 = vector.extract_strided_slice %160 {offsets = [0, 0], sizes = [8, 128], strides = [1, 1]} : vector<8x256xf32> to vector<8x128xf32>
    %162 = vector.extract_strided_slice %160 {offsets = [0, 128], sizes = [8, 128], strides = [1, 1]} : vector<8x256xf32> to vector<8x128xf32>
    %163 = arith.select %16, %161, %162 : vector<8x128xi1>, vector<8x128xf32>
    %164 = arith.mulf %163, %25 : vector<8x128xf32>
    %165 = math.tanh %164 : vector<8x128xf32>
    %166 = arith.mulf %165, %25 : vector<8x128xf32>
    %167 = arith.addf %166, %28 : vector<8x128xf32>
    %168 = vector.extract_strided_slice %167 {offsets = [0, 32], sizes = [8, 32], strides = [1, 1]} : vector<8x128xf32> to vector<8x32xf32>
    %169 = arith.mulf %168, %143 : vector<8x32xf32>
    %170 = vector.extract_strided_slice %167 {offsets = [0, 0], sizes = [8, 32], strides = [1, 1]} : vector<8x128xf32> to vector<8x32xf32>
    %171 = vector.extract_strided_slice %167 {offsets = [0, 64], sizes = [8, 32], strides = [1, 1]} : vector<8x128xf32> to vector<8x32xf32>
    %172 = arith.mulf %170, %171 : vector<8x32xf32>
    %173 = arith.addf %169, %172 : vector<8x32xf32>
    %174 = vector.extract_strided_slice %167 {offsets = [0, 96], sizes = [8, 32], strides = [1, 1]} : vector<8x128xf32> to vector<8x32xf32>
    %175 = math.tanh %173 : vector<8x32xf32>
    %176 = arith.mulf %174, %175 : vector<8x32xf32>
    %c4_56 = arith.constant 4 : index
    %c0_57 = arith.constant 0 : index
    %c0_58 = arith.constant 0 : index
    %177 = vector.load %arg4[%c4_56, %c0_57, %c0_58] : memref<8x8x32xf32, #tpu.memory_space<vmem>>, vector<1x8x32xf32>
    %178 = vector.shape_cast %177 : vector<1x8x32xf32> to vector<8x32xf32>
    %179 = vector.shape_cast %176 : vector<8x32xf32> to vector<1x8x32xf32>
    tpu.vector_store %arg4[%c4_56, %c0_57, %c0_58], %179 {strides = array<i32>} : memref<8x8x32xf32, #tpu.memory_space<vmem>>, vector<1x8x32xf32>,
    %180 = vector.extract_strided_slice %176 {offsets = [2, 0], sizes = [2, 32], strides = [1, 1]} : vector<8x32xf32> to vector<2x32xf32>
    %181 = vector.extract_strided_slice %176 {offsets = [0, 0], sizes = [2, 32], strides = [1, 1]} : vector<8x32xf32> to vector<2x32xf32>
    %182 = vector.extract_strided_slice %176 {offsets = [4, 0], sizes = [4, 32], strides = [1, 1]} : vector<8x32xf32> to vector<4x32xf32>
    %183 = tpu.concatenate %180, %181, %182 in 0 : vector<2x32xf32>, vector<2x32xf32>, vector<4x32xf32> -> vector<8x32xf32>
    %c3_59 = arith.constant 3 : index
    %c0_60 = arith.constant 0 : index
    %c0_61 = arith.constant 0 : index
    %184 = vector.load %arg5[%c3_59, %c0_60, %c0_61] : memref<8x8x32xf32, #tpu.memory_space<vmem>>, vector<1x8x32xf32>
    %185 = vector.shape_cast %184 : vector<1x8x32xf32> to vector<8x32xf32>
    %186 = vector.shape_cast %183 : vector<8x32xf32> to vector<1x8x32xf32>
    tpu.vector_store %arg5[%c3_59, %c0_60, %c0_61], %186 {strides = array<i32>} : memref<8x8x32xf32, #tpu.memory_space<vmem>>, vector<1x8x32xf32>,
    %c5_62 = arith.constant 5 : index
    %c0_63 = arith.constant 0 : index
    %c0_64 = arith.constant 0 : index
    %187 = vector.load %arg3[%c5_62, %c0_63, %c0_64] : memref<8x8x256xf32, #tpu.memory_space<vmem>>, vector<1x8x256xf32>
    %188 = vector.shape_cast %187 : vector<1x8x256xf32> to vector<8x256xf32>
    %cst_65 = arith.constant dense<0.000000e+00> : vector<8x256xf32>
    %189 = tpu.matmul %176, %1, %cst_65 {dimension_numbers = #tpu.dot_dimension_numbers<[1], [0], [0], [1], [0, 0, 1, 1], [], []>} : vector<8x32xf32>, vector<32x256xf32>, vector<8x256xf32> -> vector<8x256xf32>
    %190 = arith.addf %188, %189 : vector<8x256xf32>
    %191 = vector.extract_strided_slice %190 {offsets = [0, 0], sizes = [8, 128], strides = [1, 1]} : vector<8x256xf32> to vector<8x128xf32>
    %192 = vector.extract_strided_slice %190 {offsets = [0, 128], sizes = [8, 128], strides = [1, 1]} : vector<8x256xf32> to vector<8x128xf32>
    %193 = arith.select %16, %191, %192 : vector<8x128xi1>, vector<8x128xf32>
    %194 = arith.mulf %193, %25 : vector<8x128xf32>
    %195 = math.tanh %194 : vector<8x128xf32>
    %196 = arith.mulf %195, %25 : vector<8x128xf32>
    %197 = arith.addf %196, %28 : vector<8x128xf32>
    %198 = vector.extract_strided_slice %197 {offsets = [0, 32], sizes = [8, 32], strides = [1, 1]} : vector<8x128xf32> to vector<8x32xf32>
    %199 = arith.mulf %198, %173 : vector<8x32xf32>
    %200 = vector.extract_strided_slice %197 {offsets = [0, 0], sizes = [8, 32], strides = [1, 1]} : vector<8x128xf32> to vector<8x32xf32>
    %201 = vector.extract_strided_slice %197 {offsets = [0, 64], sizes = [8, 32], strides = [1, 1]} : vector<8x128xf32> to vector<8x32xf32>
    %202 = arith.mulf %200, %201 : vector<8x32xf32>
    %203 = arith.addf %199, %202 : vector<8x32xf32>
    %204 = vector.extract_strided_slice %197 {offsets = [0, 96], sizes = [8, 32], strides = [1, 1]} : vector<8x128xf32> to vector<8x32xf32>
    %205 = math.tanh %203 : vector<8x32xf32>
    %206 = arith.mulf %204, %205 : vector<8x32xf32>
    %c5_66 = arith.constant 5 : index
    %c0_67 = arith.constant 0 : index
    %c0_68 = arith.constant 0 : index
    %207 = vector.load %arg4[%c5_66, %c0_67, %c0_68] : memref<8x8x32xf32, #tpu.memory_space<vmem>>, vector<1x8x32xf32>
    %208 = vector.shape_cast %207 : vector<1x8x32xf32> to vector<8x32xf32>
    %209 = vector.shape_cast %206 : vector<8x32xf32> to vector<1x8x32xf32>
    tpu.vector_store %arg4[%c5_66, %c0_67, %c0_68], %209 {strides = array<i32>} : memref<8x8x32xf32, #tpu.memory_space<vmem>>, vector<1x8x32xf32>,
    %210 = vector.extract_strided_slice %206 {offsets = [2, 0], sizes = [2, 32], strides = [1, 1]} : vector<8x32xf32> to vector<2x32xf32>
    %211 = vector.extract_strided_slice %206 {offsets = [0, 0], sizes = [2, 32], strides = [1, 1]} : vector<8x32xf32> to vector<2x32xf32>
    %212 = vector.extract_strided_slice %206 {offsets = [4, 0], sizes = [4, 32], strides = [1, 1]} : vector<8x32xf32> to vector<4x32xf32>
    %213 = tpu.concatenate %210, %211, %212 in 0 : vector<2x32xf32>, vector<2x32xf32>, vector<4x32xf32> -> vector<8x32xf32>
    %c2_69 = arith.constant 2 : index
    %c0_70 = arith.constant 0 : index
    %c0_71 = arith.constant 0 : index
    %214 = vector.load %arg5[%c2_69, %c0_70, %c0_71] : memref<8x8x32xf32, #tpu.memory_space<vmem>>, vector<1x8x32xf32>
    %215 = vector.shape_cast %214 : vector<1x8x32xf32> to vector<8x32xf32>
    %216 = vector.shape_cast %213 : vector<8x32xf32> to vector<1x8x32xf32>
    tpu.vector_store %arg5[%c2_69, %c0_70, %c0_71], %216 {strides = array<i32>} : memref<8x8x32xf32, #tpu.memory_space<vmem>>, vector<1x8x32xf32>,
    %c6_72 = arith.constant 6 : index
    %c0_73 = arith.constant 0 : index
    %c0_74 = arith.constant 0 : index
    %217 = vector.load %arg3[%c6_72, %c0_73, %c0_74] : memref<8x8x256xf32, #tpu.memory_space<vmem>>, vector<1x8x256xf32>
    %218 = vector.shape_cast %217 : vector<1x8x256xf32> to vector<8x256xf32>
    %cst_75 = arith.constant dense<0.000000e+00> : vector<8x256xf32>
    %219 = tpu.matmul %206, %1, %cst_75 {dimension_numbers = #tpu.dot_dimension_numbers<[1], [0], [0], [1], [0, 0, 1, 1], [], []>} : vector<8x32xf32>, vector<32x256xf32>, vector<8x256xf32> -> vector<8x256xf32>
    %220 = arith.addf %218, %219 : vector<8x256xf32>
    %221 = vector.extract_strided_slice %220 {offsets = [0, 0], sizes = [8, 128], strides = [1, 1]} : vector<8x256xf32> to vector<8x128xf32>
    %222 = vector.extract_strided_slice %220 {offsets = [0, 128], sizes = [8, 128], strides = [1, 1]} : vector<8x256xf32> to vector<8x128xf32>
    %223 = arith.select %16, %221, %222 : vector<8x128xi1>, vector<8x128xf32>
    %224 = arith.mulf %223, %25 : vector<8x128xf32>
    %225 = math.tanh %224 : vector<8x128xf32>
    %226 = arith.mulf %225, %25 : vector<8x128xf32>
    %227 = arith.addf %226, %28 : vector<8x128xf32>
    %228 = vector.extract_strided_slice %227 {offsets = [0, 32], sizes = [8, 32], strides = [1, 1]} : vector<8x128xf32> to vector<8x32xf32>
    %229 = arith.mulf %228, %203 : vector<8x32xf32>
    %230 = vector.extract_strided_slice %227 {offsets = [0, 0], sizes = [8, 32], strides = [1, 1]} : vector<8x128xf32> to vector<8x32xf32>
    %231 = vector.extract_strided_slice %227 {offsets = [0, 64], sizes = [8, 32], strides = [1, 1]} : vector<8x128xf32> to vector<8x32xf32>
    %232 = arith.mulf %230, %231 : vector<8x32xf32>
    %233 = arith.addf %229, %232 : vector<8x32xf32>
    %234 = vector.extract_strided_slice %227 {offsets = [0, 96], sizes = [8, 32], strides = [1, 1]} : vector<8x128xf32> to vector<8x32xf32>
    %235 = math.tanh %233 : vector<8x32xf32>
    %236 = arith.mulf %234, %235 : vector<8x32xf32>
    %c6_76 = arith.constant 6 : index
    %c0_77 = arith.constant 0 : index
    %c0_78 = arith.constant 0 : index
    %237 = vector.load %arg4[%c6_76, %c0_77, %c0_78] : memref<8x8x32xf32, #tpu.memory_space<vmem>>, vector<1x8x32xf32>
    %238 = vector.shape_cast %237 : vector<1x8x32xf32> to vector<8x32xf32>
    %239 = vector.shape_cast %236 : vector<8x32xf32> to vector<1x8x32xf32>
    tpu.vector_store %arg4[%c6_76, %c0_77, %c0_78], %239 {strides = array<i32>} : memref<8x8x32xf32, #tpu.memory_space<vmem>>, vector<1x8x32xf32>,
    %240 = vector.extract_strided_slice %236 {offsets = [2, 0], sizes = [2, 32], strides = [1, 1]} : vector<8x32xf32> to vector<2x32xf32>
    %241 = vector.extract_strided_slice %236 {offsets = [0, 0], sizes = [2, 32], strides = [1, 1]} : vector<8x32xf32> to vector<2x32xf32>
    %242 = vector.extract_strided_slice %236 {offsets = [4, 0], sizes = [4, 32], strides = [1, 1]} : vector<8x32xf32> to vector<4x32xf32>
    %243 = tpu.concatenate %240, %241, %242 in 0 : vector<2x32xf32>, vector<2x32xf32>, vector<4x32xf32> -> vector<8x32xf32>
    %c1_79 = arith.constant 1 : index
    %c0_80 = arith.constant 0 : index
    %c0_81 = arith.constant 0 : index
    %244 = vector.load %arg5[%c1_79, %c0_80, %c0_81] : memref<8x8x32xf32, #tpu.memory_space<vmem>>, vector<1x8x32xf32>
    %245 = vector.shape_cast %244 : vector<1x8x32xf32> to vector<8x32xf32>
    %246 = vector.shape_cast %243 : vector<8x32xf32> to vector<1x8x32xf32>
    tpu.vector_store %arg5[%c1_79, %c0_80, %c0_81], %246 {strides = array<i32>} : memref<8x8x32xf32, #tpu.memory_space<vmem>>, vector<1x8x32xf32>,
    %c7_82 = arith.constant 7 : index
    %c0_83 = arith.constant 0 : index
    %c0_84 = arith.constant 0 : index
    %247 = vector.load %arg3[%c7_82, %c0_83, %c0_84] : memref<8x8x256xf32, #tpu.memory_space<vmem>>, vector<1x8x256xf32>
    %248 = vector.shape_cast %247 : vector<1x8x256xf32> to vector<8x256xf32>
    %cst_85 = arith.constant dense<0.000000e+00> : vector<8x256xf32>
    %249 = tpu.matmul %236, %1, %cst_85 {dimension_numbers = #tpu.dot_dimension_numbers<[1], [0], [0], [1], [0, 0, 1, 1], [], []>} : vector<8x32xf32>, vector<32x256xf32>, vector<8x256xf32> -> vector<8x256xf32>
    %250 = arith.addf %248, %249 : vector<8x256xf32>
    %251 = vector.extract_strided_slice %250 {offsets = [0, 0], sizes = [8, 128], strides = [1, 1]} : vector<8x256xf32> to vector<8x128xf32>
    %252 = vector.extract_strided_slice %250 {offsets = [0, 128], sizes = [8, 128], strides = [1, 1]} : vector<8x256xf32> to vector<8x128xf32>
    %253 = arith.select %16, %251, %252 : vector<8x128xi1>, vector<8x128xf32>
    %254 = arith.mulf %253, %25 : vector<8x128xf32>
    %255 = math.tanh %254 : vector<8x128xf32>
    %256 = arith.mulf %255, %25 : vector<8x128xf32>
    %257 = arith.addf %256, %28 : vector<8x128xf32>
    %258 = vector.extract_strided_slice %257 {offsets = [0, 32], sizes = [8, 32], strides = [1, 1]} : vector<8x128xf32> to vector<8x32xf32>
    %259 = arith.mulf %258, %233 : vector<8x32xf32>
    %260 = vector.extract_strided_slice %257 {offsets = [0, 0], sizes = [8, 32], strides = [1, 1]} : vector<8x128xf32> to vector<8x32xf32>
    %261 = vector.extract_strided_slice %257 {offsets = [0, 64], sizes = [8, 32], strides = [1, 1]} : vector<8x128xf32> to vector<8x32xf32>
    %262 = arith.mulf %260, %261 : vector<8x32xf32>
    %263 = arith.addf %259, %262 : vector<8x32xf32>
    %264 = vector.extract_strided_slice %257 {offsets = [0, 96], sizes = [8, 32], strides = [1, 1]} : vector<8x128xf32> to vector<8x32xf32>
    %265 = math.tanh %263 : vector<8x32xf32>
    %266 = arith.mulf %264, %265 : vector<8x32xf32>
    %c7_86 = arith.constant 7 : index
    %c0_87 = arith.constant 0 : index
    %c0_88 = arith.constant 0 : index
    %267 = vector.load %arg4[%c7_86, %c0_87, %c0_88] : memref<8x8x32xf32, #tpu.memory_space<vmem>>, vector<1x8x32xf32>
    %268 = vector.shape_cast %267 : vector<1x8x32xf32> to vector<8x32xf32>
    %269 = vector.shape_cast %266 : vector<8x32xf32> to vector<1x8x32xf32>
    tpu.vector_store %arg4[%c7_86, %c0_87, %c0_88], %269 {strides = array<i32>} : memref<8x8x32xf32, #tpu.memory_space<vmem>>, vector<1x8x32xf32>,
    %270 = vector.extract_strided_slice %266 {offsets = [2, 0], sizes = [2, 32], strides = [1, 1]} : vector<8x32xf32> to vector<2x32xf32>
    %271 = vector.extract_strided_slice %266 {offsets = [0, 0], sizes = [2, 32], strides = [1, 1]} : vector<8x32xf32> to vector<2x32xf32>
    %272 = vector.extract_strided_slice %266 {offsets = [4, 0], sizes = [4, 32], strides = [1, 1]} : vector<8x32xf32> to vector<4x32xf32>
    %273 = tpu.concatenate %270, %271, %272 in 0 : vector<2x32xf32>, vector<2x32xf32>, vector<4x32xf32> -> vector<8x32xf32>
    %c0_89 = arith.constant 0 : index
    %c0_90 = arith.constant 0 : index
    %c0_91 = arith.constant 0 : index
    %274 = vector.load %arg5[%c0_89, %c0_90, %c0_91] : memref<8x8x32xf32, #tpu.memory_space<vmem>>, vector<1x8x32xf32>
    %275 = vector.shape_cast %274 : vector<1x8x32xf32> to vector<8x32xf32>
    %276 = vector.shape_cast %273 : vector<8x32xf32> to vector<1x8x32xf32>
    tpu.vector_store %arg5[%c0_89, %c0_90, %c0_91], %276 {strides = array<i32>} : memref<8x8x32xf32, #tpu.memory_space<vmem>>, vector<1x8x32xf32>,
    %c0_92 = arith.constant 0 : index
    %c0_93 = arith.constant 0 : index
    %c0_94 = arith.constant 0 : index
    %277 = vector.load %arg4[%c0_92, %c0_93, %c0_94] : memref<8x8x32xf32, #tpu.memory_space<vmem>>, vector<8x8x32xf32>
    %278 = vector.shape_cast %277 : vector<8x8x32xf32> to vector<64x32xf32>
    %c0_95 = arith.constant 0 : index
    %c0_96 = arith.constant 0 : index
    %c0_97 = arith.constant 0 : index
    %279 = vector.load %arg5[%c0_95, %c0_96, %c0_97] : memref<8x8x32xf32, #tpu.memory_space<vmem>>, vector<8x8x32xf32>
    %280 = vector.shape_cast %279 : vector<8x8x32xf32> to vector<64x32xf32>
    %cst_98 = arith.constant dense<0.000000e+00> : vector<64x256xf32>
    %281 = tpu.matmul %278, %2, %cst_98 {dimension_numbers = #tpu.dot_dimension_numbers<[1], [0], [0], [1], [0, 0, 1, 1], [], []>} : vector<64x32xf32>, vector<32x256xf32>, vector<64x256xf32> -> vector<64x256xf32>
    %cst_99 = arith.constant dense<0.000000e+00> : vector<64x256xf32>
    %282 = tpu.matmul %280, %3, %cst_99 {dimension_numbers = #tpu.dot_dimension_numbers<[1], [0], [0], [1], [0, 0, 1, 1], [], []>} : vector<64x32xf32>, vector<32x256xf32>, vector<64x256xf32> -> vector<64x256xf32>
    %283 = arith.addf %281, %282 : vector<64x256xf32>
    %284 = vector.broadcast %11 : vector<1x256xf32> to vector<64x256xf32>
    %285 = arith.addf %283, %284 : vector<64x256xf32>
    %286 = vector.shape_cast %285 : vector<64x256xf32> to vector<8x8x256xf32>
    %c0_100 = arith.constant 0 : index
    %c0_101 = arith.constant 0 : index
    %c0_102 = arith.constant 0 : index
    %287 = vector.load %arg3[%c0_100, %c0_101, %c0_102] : memref<8x8x256xf32, #tpu.memory_space<vmem>>, vector<8x8x256xf32>
    tpu.vector_store %arg3[%c0_100, %c0_101, %c0_102], %286 {strides = array<i32>} : memref<8x8x256xf32, #tpu.memory_space<vmem>>, vector<8x8x256xf32>,
    %cst_103 = arith.constant 0.000000e+00 : f32
    %288 = vector.broadcast %cst_103 : f32 to vector<8x32xf32>
    %cst_104 = arith.constant 0.000000e+00 : f32
    %289 = vector.broadcast %cst_104 : f32 to vector<8x32xf32>
    %c0_105 = arith.constant 0 : index
    %c0_106 = arith.constant 0 : index
    %c0_107 = arith.constant 0 : index
    %290 = vector.load %arg3[%c0_105, %c0_106, %c0_107] : memref<8x8x256xf32, #tpu.memory_space<vmem>>, vector<1x8x256xf32>
    %291 = vector.shape_cast %290 : vector<1x8x256xf32> to vector<8x256xf32>
    %cst_108 = arith.constant dense<0.000000e+00> : vector<8x256xf32>
    %292 = tpu.matmul %288, %4, %cst_108 {dimension_numbers = #tpu.dot_dimension_numbers<[1], [0], [0], [1], [0, 0, 1, 1], [], []>} : vector<8x32xf32>, vector<32x256xf32>, vector<8x256xf32> -> vector<8x256xf32>
    %293 = arith.addf %291, %292 : vector<8x256xf32>
    %294 = vector.extract_strided_slice %293 {offsets = [0, 0], sizes = [8, 128], strides = [1, 1]} : vector<8x256xf32> to vector<8x128xf32>
    %295 = vector.extract_strided_slice %293 {offsets = [0, 128], sizes = [8, 128], strides = [1, 1]} : vector<8x256xf32> to vector<8x128xf32>
    %296 = arith.select %16, %294, %295 : vector<8x128xi1>, vector<8x128xf32>
    %297 = arith.mulf %296, %25 : vector<8x128xf32>
    %298 = math.tanh %297 : vector<8x128xf32>
    %299 = arith.mulf %298, %25 : vector<8x128xf32>
    %300 = arith.addf %299, %28 : vector<8x128xf32>
    %301 = vector.extract_strided_slice %300 {offsets = [0, 32], sizes = [8, 32], strides = [1, 1]} : vector<8x128xf32> to vector<8x32xf32>
    %302 = arith.mulf %301, %289 : vector<8x32xf32>
    %303 = vector.extract_strided_slice %300 {offsets = [0, 0], sizes = [8, 32], strides = [1, 1]} : vector<8x128xf32> to vector<8x32xf32>
    %304 = vector.extract_strided_slice %300 {offsets = [0, 64], sizes = [8, 32], strides = [1, 1]} : vector<8x128xf32> to vector<8x32xf32>
    %305 = arith.mulf %303, %304 : vector<8x32xf32>
    %306 = arith.addf %302, %305 : vector<8x32xf32>
    %307 = vector.extract_strided_slice %300 {offsets = [0, 96], sizes = [8, 32], strides = [1, 1]} : vector<8x128xf32> to vector<8x32xf32>
    %308 = math.tanh %306 : vector<8x32xf32>
    %309 = arith.mulf %307, %308 : vector<8x32xf32>
    %c0_109 = arith.constant 0 : index
    %c0_110 = arith.constant 0 : index
    %c0_111 = arith.constant 0 : index
    %310 = vector.load %arg6[%c0_109, %c0_110, %c0_111] : memref<8x8x32xf32, #tpu.memory_space<vmem>>, vector<1x8x32xf32>
    %311 = vector.shape_cast %310 : vector<1x8x32xf32> to vector<8x32xf32>
    %312 = vector.shape_cast %309 : vector<8x32xf32> to vector<1x8x32xf32>
    tpu.vector_store %arg6[%c0_109, %c0_110, %c0_111], %312 {strides = array<i32>} : memref<8x8x32xf32, #tpu.memory_space<vmem>>, vector<1x8x32xf32>,
    %313 = vector.extract_strided_slice %309 {offsets = [2, 0], sizes = [2, 32], strides = [1, 1]} : vector<8x32xf32> to vector<2x32xf32>
    %314 = vector.extract_strided_slice %309 {offsets = [0, 0], sizes = [2, 32], strides = [1, 1]} : vector<8x32xf32> to vector<2x32xf32>
    %315 = vector.extract_strided_slice %309 {offsets = [4, 0], sizes = [4, 32], strides = [1, 1]} : vector<8x32xf32> to vector<4x32xf32>
    %316 = tpu.concatenate %313, %314, %315 in 0 : vector<2x32xf32>, vector<2x32xf32>, vector<4x32xf32> -> vector<8x32xf32>
    %c7_112 = arith.constant 7 : index
    %c0_113 = arith.constant 0 : index
    %c0_114 = arith.constant 0 : index
    %317 = vector.load %arg7[%c7_112, %c0_113, %c0_114] : memref<8x8x32xf32, #tpu.memory_space<vmem>>, vector<1x8x32xf32>
    %318 = vector.shape_cast %317 : vector<1x8x32xf32> to vector<8x32xf32>
    %319 = vector.shape_cast %316 : vector<8x32xf32> to vector<1x8x32xf32>
    tpu.vector_store %arg7[%c7_112, %c0_113, %c0_114], %319 {strides = array<i32>} : memref<8x8x32xf32, #tpu.memory_space<vmem>>, vector<1x8x32xf32>,
    %c1_115 = arith.constant 1 : index
    %c0_116 = arith.constant 0 : index
    %c0_117 = arith.constant 0 : index
    %320 = vector.load %arg3[%c1_115, %c0_116, %c0_117] : memref<8x8x256xf32, #tpu.memory_space<vmem>>, vector<1x8x256xf32>
    %321 = vector.shape_cast %320 : vector<1x8x256xf32> to vector<8x256xf32>
    %cst_118 = arith.constant dense<0.000000e+00> : vector<8x256xf32>
    %322 = tpu.matmul %309, %4, %cst_118 {dimension_numbers = #tpu.dot_dimension_numbers<[1], [0], [0], [1], [0, 0, 1, 1], [], []>} : vector<8x32xf32>, vector<32x256xf32>, vector<8x256xf32> -> vector<8x256xf32>
    %323 = arith.addf %321, %322 : vector<8x256xf32>
    %324 = vector.extract_strided_slice %323 {offsets = [0, 0], sizes = [8, 128], strides = [1, 1]} : vector<8x256xf32> to vector<8x128xf32>
    %325 = vector.extract_strided_slice %323 {offsets = [0, 128], sizes = [8, 128], strides = [1, 1]} : vector<8x256xf32> to vector<8x128xf32>
    %326 = arith.select %16, %324, %325 : vector<8x128xi1>, vector<8x128xf32>
    %327 = arith.mulf %326, %25 : vector<8x128xf32>
    %328 = math.tanh %327 : vector<8x128xf32>
    %329 = arith.mulf %328, %25 : vector<8x128xf32>
    %330 = arith.addf %329, %28 : vector<8x128xf32>
    %331 = vector.extract_strided_slice %330 {offsets = [0, 32], sizes = [8, 32], strides = [1, 1]} : vector<8x128xf32> to vector<8x32xf32>
    %332 = arith.mulf %331, %306 : vector<8x32xf32>
    %333 = vector.extract_strided_slice %330 {offsets = [0, 0], sizes = [8, 32], strides = [1, 1]} : vector<8x128xf32> to vector<8x32xf32>
    %334 = vector.extract_strided_slice %330 {offsets = [0, 64], sizes = [8, 32], strides = [1, 1]} : vector<8x128xf32> to vector<8x32xf32>
    %335 = arith.mulf %333, %334 : vector<8x32xf32>
    %336 = arith.addf %332, %335 : vector<8x32xf32>
    %337 = vector.extract_strided_slice %330 {offsets = [0, 96], sizes = [8, 32], strides = [1, 1]} : vector<8x128xf32> to vector<8x32xf32>
    %338 = math.tanh %336 : vector<8x32xf32>
    %339 = arith.mulf %337, %338 : vector<8x32xf32>
    %c1_119 = arith.constant 1 : index
    %c0_120 = arith.constant 0 : index
    %c0_121 = arith.constant 0 : index
    %340 = vector.load %arg6[%c1_119, %c0_120, %c0_121] : memref<8x8x32xf32, #tpu.memory_space<vmem>>, vector<1x8x32xf32>
    %341 = vector.shape_cast %340 : vector<1x8x32xf32> to vector<8x32xf32>
    %342 = vector.shape_cast %339 : vector<8x32xf32> to vector<1x8x32xf32>
    tpu.vector_store %arg6[%c1_119, %c0_120, %c0_121], %342 {strides = array<i32>} : memref<8x8x32xf32, #tpu.memory_space<vmem>>, vector<1x8x32xf32>,
    %343 = vector.extract_strided_slice %339 {offsets = [2, 0], sizes = [2, 32], strides = [1, 1]} : vector<8x32xf32> to vector<2x32xf32>
    %344 = vector.extract_strided_slice %339 {offsets = [0, 0], sizes = [2, 32], strides = [1, 1]} : vector<8x32xf32> to vector<2x32xf32>
    %345 = vector.extract_strided_slice %339 {offsets = [4, 0], sizes = [4, 32], strides = [1, 1]} : vector<8x32xf32> to vector<4x32xf32>
    %346 = tpu.concatenate %343, %344, %345 in 0 : vector<2x32xf32>, vector<2x32xf32>, vector<4x32xf32> -> vector<8x32xf32>
    %c6_122 = arith.constant 6 : index
    %c0_123 = arith.constant 0 : index
    %c0_124 = arith.constant 0 : index
    %347 = vector.load %arg7[%c6_122, %c0_123, %c0_124] : memref<8x8x32xf32, #tpu.memory_space<vmem>>, vector<1x8x32xf32>
    %348 = vector.shape_cast %347 : vector<1x8x32xf32> to vector<8x32xf32>
    %349 = vector.shape_cast %346 : vector<8x32xf32> to vector<1x8x32xf32>
    tpu.vector_store %arg7[%c6_122, %c0_123, %c0_124], %349 {strides = array<i32>} : memref<8x8x32xf32, #tpu.memory_space<vmem>>, vector<1x8x32xf32>,
    %c2_125 = arith.constant 2 : index
    %c0_126 = arith.constant 0 : index
    %c0_127 = arith.constant 0 : index
    %350 = vector.load %arg3[%c2_125, %c0_126, %c0_127] : memref<8x8x256xf32, #tpu.memory_space<vmem>>, vector<1x8x256xf32>
    %351 = vector.shape_cast %350 : vector<1x8x256xf32> to vector<8x256xf32>
    %cst_128 = arith.constant dense<0.000000e+00> : vector<8x256xf32>
    %352 = tpu.matmul %339, %4, %cst_128 {dimension_numbers = #tpu.dot_dimension_numbers<[1], [0], [0], [1], [0, 0, 1, 1], [], []>} : vector<8x32xf32>, vector<32x256xf32>, vector<8x256xf32> -> vector<8x256xf32>
    %353 = arith.addf %351, %352 : vector<8x256xf32>
    %354 = vector.extract_strided_slice %353 {offsets = [0, 0], sizes = [8, 128], strides = [1, 1]} : vector<8x256xf32> to vector<8x128xf32>
    %355 = vector.extract_strided_slice %353 {offsets = [0, 128], sizes = [8, 128], strides = [1, 1]} : vector<8x256xf32> to vector<8x128xf32>
    %356 = arith.select %16, %354, %355 : vector<8x128xi1>, vector<8x128xf32>
    %357 = arith.mulf %356, %25 : vector<8x128xf32>
    %358 = math.tanh %357 : vector<8x128xf32>
    %359 = arith.mulf %358, %25 : vector<8x128xf32>
    %360 = arith.addf %359, %28 : vector<8x128xf32>
    %361 = vector.extract_strided_slice %360 {offsets = [0, 32], sizes = [8, 32], strides = [1, 1]} : vector<8x128xf32> to vector<8x32xf32>
    %362 = arith.mulf %361, %336 : vector<8x32xf32>
    %363 = vector.extract_strided_slice %360 {offsets = [0, 0], sizes = [8, 32], strides = [1, 1]} : vector<8x128xf32> to vector<8x32xf32>
    %364 = vector.extract_strided_slice %360 {offsets = [0, 64], sizes = [8, 32], strides = [1, 1]} : vector<8x128xf32> to vector<8x32xf32>
    %365 = arith.mulf %363, %364 : vector<8x32xf32>
    %366 = arith.addf %362, %365 : vector<8x32xf32>
    %367 = vector.extract_strided_slice %360 {offsets = [0, 96], sizes = [8, 32], strides = [1, 1]} : vector<8x128xf32> to vector<8x32xf32>
    %368 = math.tanh %366 : vector<8x32xf32>
    %369 = arith.mulf %367, %368 : vector<8x32xf32>
    %c2_129 = arith.constant 2 : index
    %c0_130 = arith.constant 0 : index
    %c0_131 = arith.constant 0 : index
    %370 = vector.load %arg6[%c2_129, %c0_130, %c0_131] : memref<8x8x32xf32, #tpu.memory_space<vmem>>, vector<1x8x32xf32>
    %371 = vector.shape_cast %370 : vector<1x8x32xf32> to vector<8x32xf32>
    %372 = vector.shape_cast %369 : vector<8x32xf32> to vector<1x8x32xf32>
    tpu.vector_store %arg6[%c2_129, %c0_130, %c0_131], %372 {strides = array<i32>} : memref<8x8x32xf32, #tpu.memory_space<vmem>>, vector<1x8x32xf32>,
    %373 = vector.extract_strided_slice %369 {offsets = [2, 0], sizes = [2, 32], strides = [1, 1]} : vector<8x32xf32> to vector<2x32xf32>
    %374 = vector.extract_strided_slice %369 {offsets = [0, 0], sizes = [2, 32], strides = [1, 1]} : vector<8x32xf32> to vector<2x32xf32>
    %375 = vector.extract_strided_slice %369 {offsets = [4, 0], sizes = [4, 32], strides = [1, 1]} : vector<8x32xf32> to vector<4x32xf32>
    %376 = tpu.concatenate %373, %374, %375 in 0 : vector<2x32xf32>, vector<2x32xf32>, vector<4x32xf32> -> vector<8x32xf32>
    %c5_132 = arith.constant 5 : index
    %c0_133 = arith.constant 0 : index
    %c0_134 = arith.constant 0 : index
    %377 = vector.load %arg7[%c5_132, %c0_133, %c0_134] : memref<8x8x32xf32, #tpu.memory_space<vmem>>, vector<1x8x32xf32>
    %378 = vector.shape_cast %377 : vector<1x8x32xf32> to vector<8x32xf32>
    %379 = vector.shape_cast %376 : vector<8x32xf32> to vector<1x8x32xf32>
    tpu.vector_store %arg7[%c5_132, %c0_133, %c0_134], %379 {strides = array<i32>} : memref<8x8x32xf32, #tpu.memory_space<vmem>>, vector<1x8x32xf32>,
    %c3_135 = arith.constant 3 : index
    %c0_136 = arith.constant 0 : index
    %c0_137 = arith.constant 0 : index
    %380 = vector.load %arg3[%c3_135, %c0_136, %c0_137] : memref<8x8x256xf32, #tpu.memory_space<vmem>>, vector<1x8x256xf32>
    %381 = vector.shape_cast %380 : vector<1x8x256xf32> to vector<8x256xf32>
    %cst_138 = arith.constant dense<0.000000e+00> : vector<8x256xf32>
    %382 = tpu.matmul %369, %4, %cst_138 {dimension_numbers = #tpu.dot_dimension_numbers<[1], [0], [0], [1], [0, 0, 1, 1], [], []>} : vector<8x32xf32>, vector<32x256xf32>, vector<8x256xf32> -> vector<8x256xf32>
    %383 = arith.addf %381, %382 : vector<8x256xf32>
    %384 = vector.extract_strided_slice %383 {offsets = [0, 0], sizes = [8, 128], strides = [1, 1]} : vector<8x256xf32> to vector<8x128xf32>
    %385 = vector.extract_strided_slice %383 {offsets = [0, 128], sizes = [8, 128], strides = [1, 1]} : vector<8x256xf32> to vector<8x128xf32>
    %386 = arith.select %16, %384, %385 : vector<8x128xi1>, vector<8x128xf32>
    %387 = arith.mulf %386, %25 : vector<8x128xf32>
    %388 = math.tanh %387 : vector<8x128xf32>
    %389 = arith.mulf %388, %25 : vector<8x128xf32>
    %390 = arith.addf %389, %28 : vector<8x128xf32>
    %391 = vector.extract_strided_slice %390 {offsets = [0, 32], sizes = [8, 32], strides = [1, 1]} : vector<8x128xf32> to vector<8x32xf32>
    %392 = arith.mulf %391, %366 : vector<8x32xf32>
    %393 = vector.extract_strided_slice %390 {offsets = [0, 0], sizes = [8, 32], strides = [1, 1]} : vector<8x128xf32> to vector<8x32xf32>
    %394 = vector.extract_strided_slice %390 {offsets = [0, 64], sizes = [8, 32], strides = [1, 1]} : vector<8x128xf32> to vector<8x32xf32>
    %395 = arith.mulf %393, %394 : vector<8x32xf32>
    %396 = arith.addf %392, %395 : vector<8x32xf32>
    %397 = vector.extract_strided_slice %390 {offsets = [0, 96], sizes = [8, 32], strides = [1, 1]} : vector<8x128xf32> to vector<8x32xf32>
    %398 = math.tanh %396 : vector<8x32xf32>
    %399 = arith.mulf %397, %398 : vector<8x32xf32>
    %c3_139 = arith.constant 3 : index
    %c0_140 = arith.constant 0 : index
    %c0_141 = arith.constant 0 : index
    %400 = vector.load %arg6[%c3_139, %c0_140, %c0_141] : memref<8x8x32xf32, #tpu.memory_space<vmem>>, vector<1x8x32xf32>
    %401 = vector.shape_cast %400 : vector<1x8x32xf32> to vector<8x32xf32>
    %402 = vector.shape_cast %399 : vector<8x32xf32> to vector<1x8x32xf32>
    tpu.vector_store %arg6[%c3_139, %c0_140, %c0_141], %402 {strides = array<i32>} : memref<8x8x32xf32, #tpu.memory_space<vmem>>, vector<1x8x32xf32>,
    %403 = vector.extract_strided_slice %399 {offsets = [2, 0], sizes = [2, 32], strides = [1, 1]} : vector<8x32xf32> to vector<2x32xf32>
    %404 = vector.extract_strided_slice %399 {offsets = [0, 0], sizes = [2, 32], strides = [1, 1]} : vector<8x32xf32> to vector<2x32xf32>
    %405 = vector.extract_strided_slice %399 {offsets = [4, 0], sizes = [4, 32], strides = [1, 1]} : vector<8x32xf32> to vector<4x32xf32>
    %406 = tpu.concatenate %403, %404, %405 in 0 : vector<2x32xf32>, vector<2x32xf32>, vector<4x32xf32> -> vector<8x32xf32>
    %c4_142 = arith.constant 4 : index
    %c0_143 = arith.constant 0 : index
    %c0_144 = arith.constant 0 : index
    %407 = vector.load %arg7[%c4_142, %c0_143, %c0_144] : memref<8x8x32xf32, #tpu.memory_space<vmem>>, vector<1x8x32xf32>
    %408 = vector.shape_cast %407 : vector<1x8x32xf32> to vector<8x32xf32>
    %409 = vector.shape_cast %406 : vector<8x32xf32> to vector<1x8x32xf32>
    tpu.vector_store %arg7[%c4_142, %c0_143, %c0_144], %409 {strides = array<i32>} : memref<8x8x32xf32, #tpu.memory_space<vmem>>, vector<1x8x32xf32>,
    %c4_145 = arith.constant 4 : index
    %c0_146 = arith.constant 0 : index
    %c0_147 = arith.constant 0 : index
    %410 = vector.load %arg3[%c4_145, %c0_146, %c0_147] : memref<8x8x256xf32, #tpu.memory_space<vmem>>, vector<1x8x256xf32>
    %411 = vector.shape_cast %410 : vector<1x8x256xf32> to vector<8x256xf32>
    %cst_148 = arith.constant dense<0.000000e+00> : vector<8x256xf32>
    %412 = tpu.matmul %399, %4, %cst_148 {dimension_numbers = #tpu.dot_dimension_numbers<[1], [0], [0], [1], [0, 0, 1, 1], [], []>} : vector<8x32xf32>, vector<32x256xf32>, vector<8x256xf32> -> vector<8x256xf32>
    %413 = arith.addf %411, %412 : vector<8x256xf32>
    %414 = vector.extract_strided_slice %413 {offsets = [0, 0], sizes = [8, 128], strides = [1, 1]} : vector<8x256xf32> to vector<8x128xf32>
    %415 = vector.extract_strided_slice %413 {offsets = [0, 128], sizes = [8, 128], strides = [1, 1]} : vector<8x256xf32> to vector<8x128xf32>
    %416 = arith.select %16, %414, %415 : vector<8x128xi1>, vector<8x128xf32>
    %417 = arith.mulf %416, %25 : vector<8x128xf32>
    %418 = math.tanh %417 : vector<8x128xf32>
    %419 = arith.mulf %418, %25 : vector<8x128xf32>
    %420 = arith.addf %419, %28 : vector<8x128xf32>
    %421 = vector.extract_strided_slice %420 {offsets = [0, 32], sizes = [8, 32], strides = [1, 1]} : vector<8x128xf32> to vector<8x32xf32>
    %422 = arith.mulf %421, %396 : vector<8x32xf32>
    %423 = vector.extract_strided_slice %420 {offsets = [0, 0], sizes = [8, 32], strides = [1, 1]} : vector<8x128xf32> to vector<8x32xf32>
    %424 = vector.extract_strided_slice %420 {offsets = [0, 64], sizes = [8, 32], strides = [1, 1]} : vector<8x128xf32> to vector<8x32xf32>
    %425 = arith.mulf %423, %424 : vector<8x32xf32>
    %426 = arith.addf %422, %425 : vector<8x32xf32>
    %427 = vector.extract_strided_slice %420 {offsets = [0, 96], sizes = [8, 32], strides = [1, 1]} : vector<8x128xf32> to vector<8x32xf32>
    %428 = math.tanh %426 : vector<8x32xf32>
    %429 = arith.mulf %427, %428 : vector<8x32xf32>
    %c4_149 = arith.constant 4 : index
    %c0_150 = arith.constant 0 : index
    %c0_151 = arith.constant 0 : index
    %430 = vector.load %arg6[%c4_149, %c0_150, %c0_151] : memref<8x8x32xf32, #tpu.memory_space<vmem>>, vector<1x8x32xf32>
    %431 = vector.shape_cast %430 : vector<1x8x32xf32> to vector<8x32xf32>
    %432 = vector.shape_cast %429 : vector<8x32xf32> to vector<1x8x32xf32>
    tpu.vector_store %arg6[%c4_149, %c0_150, %c0_151], %432 {strides = array<i32>} : memref<8x8x32xf32, #tpu.memory_space<vmem>>, vector<1x8x32xf32>,
    %433 = vector.extract_strided_slice %429 {offsets = [2, 0], sizes = [2, 32], strides = [1, 1]} : vector<8x32xf32> to vector<2x32xf32>
    %434 = vector.extract_strided_slice %429 {offsets = [0, 0], sizes = [2, 32], strides = [1, 1]} : vector<8x32xf32> to vector<2x32xf32>
    %435 = vector.extract_strided_slice %429 {offsets = [4, 0], sizes = [4, 32], strides = [1, 1]} : vector<8x32xf32> to vector<4x32xf32>
    %436 = tpu.concatenate %433, %434, %435 in 0 : vector<2x32xf32>, vector<2x32xf32>, vector<4x32xf32> -> vector<8x32xf32>
    %c3_152 = arith.constant 3 : index
    %c0_153 = arith.constant 0 : index
    %c0_154 = arith.constant 0 : index
    %437 = vector.load %arg7[%c3_152, %c0_153, %c0_154] : memref<8x8x32xf32, #tpu.memory_space<vmem>>, vector<1x8x32xf32>
    %438 = vector.shape_cast %437 : vector<1x8x32xf32> to vector<8x32xf32>
    %439 = vector.shape_cast %436 : vector<8x32xf32> to vector<1x8x32xf32>
    tpu.vector_store %arg7[%c3_152, %c0_153, %c0_154], %439 {strides = array<i32>} : memref<8x8x32xf32, #tpu.memory_space<vmem>>, vector<1x8x32xf32>,
    %c5_155 = arith.constant 5 : index
    %c0_156 = arith.constant 0 : index
    %c0_157 = arith.constant 0 : index
    %440 = vector.load %arg3[%c5_155, %c0_156, %c0_157] : memref<8x8x256xf32, #tpu.memory_space<vmem>>, vector<1x8x256xf32>
    %441 = vector.shape_cast %440 : vector<1x8x256xf32> to vector<8x256xf32>
    %cst_158 = arith.constant dense<0.000000e+00> : vector<8x256xf32>
    %442 = tpu.matmul %429, %4, %cst_158 {dimension_numbers = #tpu.dot_dimension_numbers<[1], [0], [0], [1], [0, 0, 1, 1], [], []>} : vector<8x32xf32>, vector<32x256xf32>, vector<8x256xf32> -> vector<8x256xf32>
    %443 = arith.addf %441, %442 : vector<8x256xf32>
    %444 = vector.extract_strided_slice %443 {offsets = [0, 0], sizes = [8, 128], strides = [1, 1]} : vector<8x256xf32> to vector<8x128xf32>
    %445 = vector.extract_strided_slice %443 {offsets = [0, 128], sizes = [8, 128], strides = [1, 1]} : vector<8x256xf32> to vector<8x128xf32>
    %446 = arith.select %16, %444, %445 : vector<8x128xi1>, vector<8x128xf32>
    %447 = arith.mulf %446, %25 : vector<8x128xf32>
    %448 = math.tanh %447 : vector<8x128xf32>
    %449 = arith.mulf %448, %25 : vector<8x128xf32>
    %450 = arith.addf %449, %28 : vector<8x128xf32>
    %451 = vector.extract_strided_slice %450 {offsets = [0, 32], sizes = [8, 32], strides = [1, 1]} : vector<8x128xf32> to vector<8x32xf32>
    %452 = arith.mulf %451, %426 : vector<8x32xf32>
    %453 = vector.extract_strided_slice %450 {offsets = [0, 0], sizes = [8, 32], strides = [1, 1]} : vector<8x128xf32> to vector<8x32xf32>
    %454 = vector.extract_strided_slice %450 {offsets = [0, 64], sizes = [8, 32], strides = [1, 1]} : vector<8x128xf32> to vector<8x32xf32>
    %455 = arith.mulf %453, %454 : vector<8x32xf32>
    %456 = arith.addf %452, %455 : vector<8x32xf32>
    %457 = vector.extract_strided_slice %450 {offsets = [0, 96], sizes = [8, 32], strides = [1, 1]} : vector<8x128xf32> to vector<8x32xf32>
    %458 = math.tanh %456 : vector<8x32xf32>
    %459 = arith.mulf %457, %458 : vector<8x32xf32>
    %c5_159 = arith.constant 5 : index
    %c0_160 = arith.constant 0 : index
    %c0_161 = arith.constant 0 : index
    %460 = vector.load %arg6[%c5_159, %c0_160, %c0_161] : memref<8x8x32xf32, #tpu.memory_space<vmem>>, vector<1x8x32xf32>
    %461 = vector.shape_cast %460 : vector<1x8x32xf32> to vector<8x32xf32>
    %462 = vector.shape_cast %459 : vector<8x32xf32> to vector<1x8x32xf32>
    tpu.vector_store %arg6[%c5_159, %c0_160, %c0_161], %462 {strides = array<i32>} : memref<8x8x32xf32, #tpu.memory_space<vmem>>, vector<1x8x32xf32>,
    %463 = vector.extract_strided_slice %459 {offsets = [2, 0], sizes = [2, 32], strides = [1, 1]} : vector<8x32xf32> to vector<2x32xf32>
    %464 = vector.extract_strided_slice %459 {offsets = [0, 0], sizes = [2, 32], strides = [1, 1]} : vector<8x32xf32> to vector<2x32xf32>
    %465 = vector.extract_strided_slice %459 {offsets = [4, 0], sizes = [4, 32], strides = [1, 1]} : vector<8x32xf32> to vector<4x32xf32>
    %466 = tpu.concatenate %463, %464, %465 in 0 : vector<2x32xf32>, vector<2x32xf32>, vector<4x32xf32> -> vector<8x32xf32>
    %c2_162 = arith.constant 2 : index
    %c0_163 = arith.constant 0 : index
    %c0_164 = arith.constant 0 : index
    %467 = vector.load %arg7[%c2_162, %c0_163, %c0_164] : memref<8x8x32xf32, #tpu.memory_space<vmem>>, vector<1x8x32xf32>
    %468 = vector.shape_cast %467 : vector<1x8x32xf32> to vector<8x32xf32>
    %469 = vector.shape_cast %466 : vector<8x32xf32> to vector<1x8x32xf32>
    tpu.vector_store %arg7[%c2_162, %c0_163, %c0_164], %469 {strides = array<i32>} : memref<8x8x32xf32, #tpu.memory_space<vmem>>, vector<1x8x32xf32>,
    %c6_165 = arith.constant 6 : index
    %c0_166 = arith.constant 0 : index
    %c0_167 = arith.constant 0 : index
    %470 = vector.load %arg3[%c6_165, %c0_166, %c0_167] : memref<8x8x256xf32, #tpu.memory_space<vmem>>, vector<1x8x256xf32>
    %471 = vector.shape_cast %470 : vector<1x8x256xf32> to vector<8x256xf32>
    %cst_168 = arith.constant dense<0.000000e+00> : vector<8x256xf32>
    %472 = tpu.matmul %459, %4, %cst_168 {dimension_numbers = #tpu.dot_dimension_numbers<[1], [0], [0], [1], [0, 0, 1, 1], [], []>} : vector<8x32xf32>, vector<32x256xf32>, vector<8x256xf32> -> vector<8x256xf32>
    %473 = arith.addf %471, %472 : vector<8x256xf32>
    %474 = vector.extract_strided_slice %473 {offsets = [0, 0], sizes = [8, 128], strides = [1, 1]} : vector<8x256xf32> to vector<8x128xf32>
    %475 = vector.extract_strided_slice %473 {offsets = [0, 128], sizes = [8, 128], strides = [1, 1]} : vector<8x256xf32> to vector<8x128xf32>
    %476 = arith.select %16, %474, %475 : vector<8x128xi1>, vector<8x128xf32>
    %477 = arith.mulf %476, %25 : vector<8x128xf32>
    %478 = math.tanh %477 : vector<8x128xf32>
    %479 = arith.mulf %478, %25 : vector<8x128xf32>
    %480 = arith.addf %479, %28 : vector<8x128xf32>
    %481 = vector.extract_strided_slice %480 {offsets = [0, 32], sizes = [8, 32], strides = [1, 1]} : vector<8x128xf32> to vector<8x32xf32>
    %482 = arith.mulf %481, %456 : vector<8x32xf32>
    %483 = vector.extract_strided_slice %480 {offsets = [0, 0], sizes = [8, 32], strides = [1, 1]} : vector<8x128xf32> to vector<8x32xf32>
    %484 = vector.extract_strided_slice %480 {offsets = [0, 64], sizes = [8, 32], strides = [1, 1]} : vector<8x128xf32> to vector<8x32xf32>
    %485 = arith.mulf %483, %484 : vector<8x32xf32>
    %486 = arith.addf %482, %485 : vector<8x32xf32>
    %487 = vector.extract_strided_slice %480 {offsets = [0, 96], sizes = [8, 32], strides = [1, 1]} : vector<8x128xf32> to vector<8x32xf32>
    %488 = math.tanh %486 : vector<8x32xf32>
    %489 = arith.mulf %487, %488 : vector<8x32xf32>
    %c6_169 = arith.constant 6 : index
    %c0_170 = arith.constant 0 : index
    %c0_171 = arith.constant 0 : index
    %490 = vector.load %arg6[%c6_169, %c0_170, %c0_171] : memref<8x8x32xf32, #tpu.memory_space<vmem>>, vector<1x8x32xf32>
    %491 = vector.shape_cast %490 : vector<1x8x32xf32> to vector<8x32xf32>
    %492 = vector.shape_cast %489 : vector<8x32xf32> to vector<1x8x32xf32>
    tpu.vector_store %arg6[%c6_169, %c0_170, %c0_171], %492 {strides = array<i32>} : memref<8x8x32xf32, #tpu.memory_space<vmem>>, vector<1x8x32xf32>,
    %493 = vector.extract_strided_slice %489 {offsets = [2, 0], sizes = [2, 32], strides = [1, 1]} : vector<8x32xf32> to vector<2x32xf32>
    %494 = vector.extract_strided_slice %489 {offsets = [0, 0], sizes = [2, 32], strides = [1, 1]} : vector<8x32xf32> to vector<2x32xf32>
    %495 = vector.extract_strided_slice %489 {offsets = [4, 0], sizes = [4, 32], strides = [1, 1]} : vector<8x32xf32> to vector<4x32xf32>
    %496 = tpu.concatenate %493, %494, %495 in 0 : vector<2x32xf32>, vector<2x32xf32>, vector<4x32xf32> -> vector<8x32xf32>
    %c1_172 = arith.constant 1 : index
    %c0_173 = arith.constant 0 : index
    %c0_174 = arith.constant 0 : index
    %497 = vector.load %arg7[%c1_172, %c0_173, %c0_174] : memref<8x8x32xf32, #tpu.memory_space<vmem>>, vector<1x8x32xf32>
    %498 = vector.shape_cast %497 : vector<1x8x32xf32> to vector<8x32xf32>
    %499 = vector.shape_cast %496 : vector<8x32xf32> to vector<1x8x32xf32>
    tpu.vector_store %arg7[%c1_172, %c0_173, %c0_174], %499 {strides = array<i32>} : memref<8x8x32xf32, #tpu.memory_space<vmem>>, vector<1x8x32xf32>,
    %c7_175 = arith.constant 7 : index
    %c0_176 = arith.constant 0 : index
    %c0_177 = arith.constant 0 : index
    %500 = vector.load %arg3[%c7_175, %c0_176, %c0_177] : memref<8x8x256xf32, #tpu.memory_space<vmem>>, vector<1x8x256xf32>
    %501 = vector.shape_cast %500 : vector<1x8x256xf32> to vector<8x256xf32>
    %cst_178 = arith.constant dense<0.000000e+00> : vector<8x256xf32>
    %502 = tpu.matmul %489, %4, %cst_178 {dimension_numbers = #tpu.dot_dimension_numbers<[1], [0], [0], [1], [0, 0, 1, 1], [], []>} : vector<8x32xf32>, vector<32x256xf32>, vector<8x256xf32> -> vector<8x256xf32>
    %503 = arith.addf %501, %502 : vector<8x256xf32>
    %504 = vector.extract_strided_slice %503 {offsets = [0, 0], sizes = [8, 128], strides = [1, 1]} : vector<8x256xf32> to vector<8x128xf32>
    %505 = vector.extract_strided_slice %503 {offsets = [0, 128], sizes = [8, 128], strides = [1, 1]} : vector<8x256xf32> to vector<8x128xf32>
    %506 = arith.select %16, %504, %505 : vector<8x128xi1>, vector<8x128xf32>
    %507 = arith.mulf %506, %25 : vector<8x128xf32>
    %508 = math.tanh %507 : vector<8x128xf32>
    %509 = arith.mulf %508, %25 : vector<8x128xf32>
    %510 = arith.addf %509, %28 : vector<8x128xf32>
    %511 = vector.extract_strided_slice %510 {offsets = [0, 32], sizes = [8, 32], strides = [1, 1]} : vector<8x128xf32> to vector<8x32xf32>
    %512 = arith.mulf %511, %486 : vector<8x32xf32>
    %513 = vector.extract_strided_slice %510 {offsets = [0, 0], sizes = [8, 32], strides = [1, 1]} : vector<8x128xf32> to vector<8x32xf32>
    %514 = vector.extract_strided_slice %510 {offsets = [0, 64], sizes = [8, 32], strides = [1, 1]} : vector<8x128xf32> to vector<8x32xf32>
    %515 = arith.mulf %513, %514 : vector<8x32xf32>
    %516 = arith.addf %512, %515 : vector<8x32xf32>
    %517 = vector.extract_strided_slice %510 {offsets = [0, 96], sizes = [8, 32], strides = [1, 1]} : vector<8x128xf32> to vector<8x32xf32>
    %518 = math.tanh %516 : vector<8x32xf32>
    %519 = arith.mulf %517, %518 : vector<8x32xf32>
    %c7_179 = arith.constant 7 : index
    %c0_180 = arith.constant 0 : index
    %c0_181 = arith.constant 0 : index
    %520 = vector.load %arg6[%c7_179, %c0_180, %c0_181] : memref<8x8x32xf32, #tpu.memory_space<vmem>>, vector<1x8x32xf32>
    %521 = vector.shape_cast %520 : vector<1x8x32xf32> to vector<8x32xf32>
    %522 = vector.shape_cast %519 : vector<8x32xf32> to vector<1x8x32xf32>
    tpu.vector_store %arg6[%c7_179, %c0_180, %c0_181], %522 {strides = array<i32>} : memref<8x8x32xf32, #tpu.memory_space<vmem>>, vector<1x8x32xf32>,
    %523 = vector.extract_strided_slice %519 {offsets = [2, 0], sizes = [2, 32], strides = [1, 1]} : vector<8x32xf32> to vector<2x32xf32>
    %524 = vector.extract_strided_slice %519 {offsets = [0, 0], sizes = [2, 32], strides = [1, 1]} : vector<8x32xf32> to vector<2x32xf32>
    %525 = vector.extract_strided_slice %519 {offsets = [4, 0], sizes = [4, 32], strides = [1, 1]} : vector<8x32xf32> to vector<4x32xf32>
    %526 = tpu.concatenate %523, %524, %525 in 0 : vector<2x32xf32>, vector<2x32xf32>, vector<4x32xf32> -> vector<8x32xf32>
    %c0_182 = arith.constant 0 : index
    %c0_183 = arith.constant 0 : index
    %c0_184 = arith.constant 0 : index
    %527 = vector.load %arg7[%c0_182, %c0_183, %c0_184] : memref<8x8x32xf32, #tpu.memory_space<vmem>>, vector<1x8x32xf32>
    %528 = vector.shape_cast %527 : vector<1x8x32xf32> to vector<8x32xf32>
    %529 = vector.shape_cast %526 : vector<8x32xf32> to vector<1x8x32xf32>
    tpu.vector_store %arg7[%c0_182, %c0_183, %c0_184], %529 {strides = array<i32>} : memref<8x8x32xf32, #tpu.memory_space<vmem>>, vector<1x8x32xf32>,
    %c0_185 = arith.constant 0 : index
    %c0_186 = arith.constant 0 : index
    %c0_187 = arith.constant 0 : index
    %530 = vector.load %arg6[%c0_185, %c0_186, %c0_187] : memref<8x8x32xf32, #tpu.memory_space<vmem>>, vector<8x8x32xf32>
    %c0_188 = arith.constant 0 : index
    %c0_189 = arith.constant 0 : index
    %c0_190 = arith.constant 0 : index
    %531 = vector.load %arg7[%c0_188, %c0_189, %c0_190] : memref<8x8x32xf32, #tpu.memory_space<vmem>>, vector<8x8x32xf32>
    %532 = tpu.concatenate %530, %531 in 2 : vector<8x8x32xf32>, vector<8x8x32xf32> -> vector<8x8x64xf32>
    %533 = vector.shape_cast %532 : vector<8x8x64xf32> to vector<64x64xf32>
    %cst_191 = arith.constant dense<0.000000e+00> : vector<64x32xf32>
    %534 = tpu.matmul %533, %6, %cst_191 {dimension_numbers = #tpu.dot_dimension_numbers<[1], [0], [0], [1], [0, 0, 1, 1], [], []>} : vector<64x64xf32>, vector<64x32xf32>, vector<64x32xf32> -> vector<64x32xf32>
    %535 = vector.broadcast %12 : vector<1x32xf32> to vector<64x32xf32>
    %536 = arith.addf %534, %535 : vector<64x32xf32>
    %cst_192 = arith.constant 0.000000e+00 : f32
    %537 = vector.broadcast %cst_192 : f32 to vector<64x32xf32>
    %538 = arith.maximumf %536, %537 : vector<64x32xf32>
    %cst_193 = arith.constant dense<0.000000e+00> : vector<64x64xf32>
    %539 = tpu.matmul %538, %8, %cst_193 {dimension_numbers = #tpu.dot_dimension_numbers<[1], [0], [0], [1], [0, 0, 1, 1], [], []>} : vector<64x32xf32>, vector<32x64xf32>, vector<64x64xf32> -> vector<64x64xf32>
    %540 = vector.broadcast %13 : vector<1x64xf32> to vector<64x64xf32>
    %541 = arith.addf %539, %540 : vector<64x64xf32>
    %cst_194 = arith.constant 0.000000e+00 : f32
    %542 = vector.broadcast %cst_194 : f32 to vector<64x64xf32>
    %543 = arith.maximumf %541, %542 : vector<64x64xf32>
    %544 = tpu.concatenate %533, %543 in 1 : vector<64x64xf32>, vector<64x64xf32> -> vector<64x128xf32>
    %545 = vector.shape_cast %544 : vector<64x128xf32> to vector<8x8x128xf32>
    %c0_195 = arith.constant 0 : index
    %c0_196 = arith.constant 0 : index
    %c0_197 = arith.constant 0 : index
    %546 = vector.load %arg2[%c0_195, %c0_196, %c0_197] : memref<8x8x128xf32, #tpu.memory_space<vmem>>, vector<8x8x128xf32>
    tpu.vector_store %arg2[%c0_195, %c0_196, %c0_197], %545 {strides = array<i32>} : memref<8x8x128xf32, #tpu.memory_space<vmem>>, vector<8x8x128xf32>,
    return
  }
}

</mosaic_0001>

<llo_original>
// kernel: ssenet_forward.1
$region0: #{ssenet_forward.1}
  #allocation0 [shape = 'u32[]', space=smem, size = 0x4, offset = 0x4, fixed_abs, tag = 'smem constant byte address 0x4 - core index']
  #allocation1 [shape = 'u32[144,128]{1,0:T(1,128)}', space=vmem, size = 0x12000, scoped, tag = 'internal scratch']
  #allocation2 [shape = 'f32[8,8,256]{2,1,0:T(8,128)}', space=vmem, size = 0x10000, scoped, tag = 'scratch operand']
  #allocation3 [shape = 'f32[8,8,32]{2,1,0:T(8,128)}', space=vmem, size = 0x8000, scoped, tag = 'scratch operand']
  #allocation4 [shape = 'f32[8,8,32]{2,1,0:T(8,128)}', space=vmem, size = 0x8000, scoped, tag = 'scratch operand']
  #allocation5 [shape = 'f32[8,8,32]{2,1,0:T(8,128)}', space=vmem, size = 0x8000, scoped, tag = 'scratch operand']
  #allocation6 [shape = 'f32[8,8,32]{2,1,0:T(8,128)}', space=vmem, size = 0x8000, scoped, tag = 'scratch operand']
  %s0 = inlined_call_operand.vmem [shape: f32[64,16], index: 0, kind: input, shape index: {}]
  %s1 = inlined_call_operand.hbm [shape: f32[248,256], index: 1, kind: input, shape index: {}]
  %s2 = inlined_call_operand.vmem [shape: f32[8,8,128], index: 2, kind: output, shape index: {}]
  %s3 = sld [smem:[#allocation0]]
  $region22: #{ssenet_forward.1} parent=0
    _
  %s5 = ssub.s32 1, %s3
  %s6 = scalar_select 0, %s5, %s3
  $region1: #{ssenet_forward.1} parent=0
    #allocation7 [shape = 'u8[253952]{0}', space=vmem, size = 0x3e000, scoped, tag = 'input window, operand 1, single buffered']
    #allocation8 [shape = 's32[1]{0}', space=sflag, size = 0x4, scoped, tag = 'scoped memory for ssenet_forward.1']
    %7 = vsyncpa [#allocation8], 0
    // Predicated region
    $region2: #{ssenet_forward.1} parent=1 // pred_check
      _
    $region3: #{ssenet_forward.1} parent=1 // pred_check_branch
      %9 = sbr.rel (0) target = $region5
    $region4: #{ssenet_forward.1} parent=1 // pred_region
      _
    $region5: #{ssenet_forward.1} parent=1 // pred_fallthru
      _
    // Predicated region
    $region6: #{ssenet_forward.1} parent=1 // pred_check
      _
    $region7: #{ssenet_forward.1} parent=1 // pred_check_branch
      %11 = sbr.rel (0) target = $region9
    $region8: #{ssenet_forward.1} parent=1 // pred_region
      %s13 = ssub.s32 7936, 7936
      %14 = vsyncadd [#allocation8], %s13
      %s15 = sshll.u32 [#allocation7], 4
      %s16 = int_to_ptr.vmem [resolvable:$true] %s15
      %21 = dma.hbm_to_vmem [thread:$0]  %s1, 7936, %s16, [#allocation8], 256, 256, 16
    $region9: #{ssenet_forward.1} parent=1 // pred_fallthru
      _
    // Predicated region
    $region10: #{ssenet_forward.1} parent=1 // pred_check
      _
    $region11: #{ssenet_forward.1} parent=1 // pred_check_branch
      %23 = sbr.rel (0) target = $region13
    $region12: #{ssenet_forward.1} parent=1 // pred_region
      %24 = dma.done [#allocation8], 7936
    $region13: #{ssenet_forward.1} parent=1 // pred_fallthru
      _
    %v25 = vld [vmem:[#allocation7] sm:$0xff]
    %v26 = vld [vmem:[#allocation7 + $0x8] sm:$0xff]
    %v27 = vld [vmem:[#allocation7 + $0x10] sm:$0xff]
    %v28 = vld [vmem:[#allocation7 + $0x18] sm:$0xff]
    %v29 = vld [vmem:[#allocation7 + $0x20] sm:$0xff]
    %v30 = vld [vmem:[#allocation7 + $0x28] sm:$0xff]
    %v31 = vld [vmem:[#allocation7 + $0x30] sm:$0xff]
    %v32 = vld [vmem:[#allocation7 + $0x38] sm:$0xff]
    %v33 = vld [vmem:[#allocation7 + $0x40] sm:$0xff]
    %v34 = vld [vmem:[#allocation7 + $0x48] sm:$0xff]
    %v35 = vld [vmem:[#allocation7 + $0x50] sm:$0xff]
    %v36 = vld [vmem:[#allocation7 + $0x58] sm:$0xff]
    %v37 = vld [vmem:[#allocation7 + $0x60] sm:$0xff]
    %v38 = vld [vmem:[#allocation7 + $0x68] sm:$0xff]
    %v39 = vld [vmem:[#allocation7 + $0x70] sm:$0xff]
    %v40 = vld [vmem:[#allocation7 + $0x78] sm:$0xff]
    %v41 = vld [vmem:[#allocation7 + $0x80] sm:$0xff]
    %v42 = vld [vmem:[#allocation7 + $0x88] sm:$0xff]
    %v43 = vld [vmem:[#allocation7 + $0x90] sm:$0xff]
    %v44 = vld [vmem:[#allocation7 + $0x98] sm:$0xff]
    %v45 = vld [vmem:[#allocation7 + $0xa0] sm:$0xff]
    %v46 = vld [vmem:[#allocation7 + $0xa8] sm:$0xff]
    %v47 = vld [vmem:[#allocation7 + $0xb0] sm:$0xff]
    %v48 = vld [vmem:[#allocation7 + $0xb8] sm:$0xff]
    %v49 = vld [vmem:[#allocation7 + $0xc0] sm:$0xff]
    %v50 = vld [vmem:[#allocation7 + $0xc8] sm:$0xff]
    %v51 = vld [vmem:[#allocation7 + $0xd0] sm:$0xff]
    %v52 = vld [vmem:[#allocation7 + $0xd8] sm:$0xff]
    %v53 = vld [vmem:[#allocation7 + $0xe0] sm:$0xff]
    %v54 = vld [vmem:[#allocation7 + $0xe8] sm:$0xff]
    %v55 = vld [vmem:[#allocation7 + $0xf0] sm:$0xff]
    %v56 = vld [vmem:[#allocation7 + $0xf8] sm:$0xff]
    %v57 = vld [vmem:[#allocation7 + $0x100] sm:$0xff]
    %v58 = vld [vmem:[#allocation7 + $0x108] sm:$0xff]
    %v59 = vld [vmem:[#allocation7 + $0x110] sm:$0xff]
    %v60 = vld [vmem:[#allocation7 + $0x118] sm:$0xff]
    %v61 = vld [vmem:[#allocation7 + $0x120] sm:$0xff]
    %v62 = vld [vmem:[#allocation7 + $0x130] sm:$0xff]
    %v63 = vld [vmem:[#allocation7 + $0x140] sm:$0xff]
    %v64 = vld [vmem:[#allocation7 + $0x150] sm:$0xff]
    %v65 = vld [vmem:[#allocation7 + $0x160] sm:$0xff]
    %v66 = vld [vmem:[#allocation7 + $0x170] sm:$0xff]
    %v67 = vld [vmem:[#allocation7 + $0x180] sm:$0xff]
    %v68 = vld [vmem:[#allocation7 + $0x190] sm:$0xff]
    %v69 = vld [vmem:[#allocation7 + $0x1a0] sm:$0xff]
    %v70 = vld [vmem:[#allocation7 + $0x1b0] sm:$0xff]
    %v71 = vld [vmem:[#allocation7 + $0x1c0] sm:$0xff]
    %v72 = vld [vmem:[#allocation7 + $0x1d0] sm:$0xff]
    %v73 = vld [vmem:[#allocation7 + $0x1e0] sm:$0xff]
    %v74 = vld [vmem:[#allocation7 + $0x1e8] sm:$0xff]
    %v75 = vlaneseq
    %v76 = vshrl.u32 %v75, 7
    %vm77 = vcmp.lt.s32.totalorder %v76, 2
    %v78 = vlaneseq
    %v79 = vand.u32 %v78, 127
    %vm80 = vcmp.ge.s32.totalorder %v79, 64
    %vm81 = vcmp.lt.s32.totalorder %v79, 96
    %vm82 = vmand %vm80, %vm81
    %v83 = vsel %vm82, 1.0, 0.5
    %v84 = vsel %vm82, 0.0, 0.5
    %v85 = vld [vmem:[%s0] sm:$0xff]
    %v86 = vld [vmem:[%s0 + $0x8] sm:$0xff]
    %v87 = vld [vmem:[%s0 + $0x10] sm:$0xff]
    %v88 = vld [vmem:[%s0 + $0x18] sm:$0xff]
    %v89 = vld [vmem:[%s0 + $0x20] sm:$0xff]
    %v90 = vld [vmem:[%s0 + $0x28] sm:$0xff]
    %v91 = vld [vmem:[%s0 + $0x30] sm:$0xff]
    %v92 = vld [vmem:[%s0 + $0x38] sm:$0xff]
    %v93 = vlaneseq
    %v94 = vshrl.u32 %v93, 7
    %v95 = vsub.s32 0, %v94
    %v96 = vrot.slane %v73, %v95
    %v97 = vlaneseq
    %v98 = vshrl.u32 %v97, 7
    %v99 = vsub.s32 0, %v98
    %v100 = vrot.slane %v74, %v99
    %vm101 = vcmask 130048
    %v103 = vsel %vm101, %v85, 0
    %v106 = vsel %vm101, %v86, 0
    %v109 = vsel %vm101, %v87, 0
    %v112 = vsel %vm101, %v88, 0
    %v115 = vsel %vm101, %v89, 0
    %v118 = vsel %vm101, %v90, 0
    %v121 = vsel %vm101, %v91, 0
    %v124 = vsel %vm101, %v92, 0
    %126 = vmatprep.subr.mxu0 %v26
    %127 = vmatpush1.msra.mxu0 %v25
    %128 = vmatprep.subr.mxu0 %v28
    %129 = vmatpush1.msra.mxu0 %v27
    %130 = vmatprep.subr.mxu0 0.0
    %131 = vmatpush1.msra.mxu0 0.0
    %132 = vmatprep.subr.mxu0 0.0
    %133 = vmatpush1.msra.mxu0 0.0
    %134 = vmatprep.subr.mxu0 0.0
    %135 = vmatpush1.msra.mxu0 0.0
    %136 = vmatprep.subr.mxu0 0.0
    %137 = vmatpush1.msra.mxu0 0.0
    %138 = vmatprep.subr.mxu0 0.0
    %139 = vmatpush1.msra.mxu0 0.0
    %140 = vmatprep.subr.mxu0 0.0
    %141 = vmatpush1.msra.mxu0 0.0
    %142 = vmatprep.subr.mxu0 0.0
    %143 = vmatpush1.msra.mxu0 0.0
    %144 = vmatprep.subr.mxu0 0.0
    %145 = vmatpush1.msra.mxu0 0.0
    %146 = vmatprep.subr.mxu0 0.0
    %147 = vmatpush1.msra.mxu0 0.0
    %148 = vmatprep.subr.mxu0 0.0
    %149 = vmatpush1.msra.mxu0 0.0
    %150 = vmatprep.subr.mxu0 0.0
    %151 = vmatpush1.msra.mxu0 0.0
    %152 = vmatprep.subr.mxu0 0.0
    %153 = vmatpush1.msra.mxu0 0.0
    %154 = vmatprep.subr.mxu0 0.0
    %155 = vmatpush1.msra.mxu0 0.0
    %156 = vmatprep.subr.mxu0 0.0
    %157 = vmatpush1.msra.mxu0 0.0
    %158 = vmatprep.subr.mxu0 0.0
    %159 = vmatpush1.msra.mxu0 0.0
    %160 = vmatprep.subr.mxu0 0.0
    %161 = vmatpush1.msra.mxu0 0.0
    %162 = vmatprep.subr.mxu0 0.0
    %163 = vmatpush1.msra.mxu0 0.0
    %164 = vmatprep.subr.mxu0 0.0
    %165 = vmatpush1.msra.mxu0 0.0
    %166 = vmatprep.subr.mxu0 0.0
    %167 = vmatpush1.msra.mxu0 0.0
    %168 = vmatprep.subr.mxu0 0.0
    %169 = vmatpush1.msra.mxu0 0.0
    %170 = vmatprep.subr.mxu0 0.0
    %171 = vmatpush1.msra.mxu0 0.0
    %172 = vmatprep.subr.mxu0 0.0
    %173 = vmatpush1.msra.mxu0 0.0
    %174 = vmatprep.subr.mxu0 0.0
    %175 = vmatpush1.msra.mxu0 0.0
    %176 = vmatprep.subr.mxu0 0.0
    %177 = vmatpush1.msra.mxu0 0.0
    %178 = vmatprep.subr.mxu0 0.0
    %179 = vmatpush1.msra.mxu0 0.0
    %180 = vmatprep.subr.mxu0 0.0
    %181 = vmatpush1.msra.mxu0 0.0
    %182 = vmatprep.subr.mxu0 0.0
    %183 = vmatpush1.msra.mxu0 0.0
    %184 = vmatprep.subr.mxu0 0.0
    %185 = vmatpush1.msra.mxu0 0.0
    %186 = vmatprep.subr.mxu0 0.0
    %187 = vmatpush1.msra.mxu0 0.0
    %188 = vmatprep.subr.mxu0 0.0
    %189 = vmatpush1.msra.mxu0 0.0
    %190 = vmatprep.mubr.f32.mxu0 0.0
    %191 = vmatmul.mubr.f32.gmra.mrb[0].mxu0 %v103
    %v192 = vpop.f32.mrb[0].mxu0
    %v193 = vadd.f32 %v96, %v192
    %v194 = vpop.f32.mrb[0].mxu0
    %v195 = vadd.f32 %v100, %v194
    %196 = vmatprep.mubr.f32.mxu0 0.0
    %197 = vmatmul.mubr.f32.gmra.mrb[0].mxu0 %v106
    %v198 = vpop.f32.mrb[0].mxu0
    %v199 = vadd.f32 %v96, %v198
    %v200 = vpop.f32.mrb[0].mxu0
    %v201 = vadd.f32 %v100, %v200
    %202 = vmatprep.mubr.f32.mxu0 0.0
    %203 = vmatmul.mubr.f32.gmra.mrb[0].mxu0 %v109
    %v204 = vpop.f32.mrb[0].mxu0
    %v205 = vadd.f32 %v96, %v204
    %v206 = vpop.f32.mrb[0].mxu0
    %v207 = vadd.f32 %v100, %v206
    %208 = vmatprep.mubr.f32.mxu0 0.0
    %209 = vmatmul.mubr.f32.gmra.mrb[0].mxu0 %v112
    %v210 = vpop.f32.mrb[0].mxu0
    %v211 = vadd.f32 %v96, %v210
    %v212 = vpop.f32.mrb[0].mxu0
    %v213 = vadd.f32 %v100, %v212
    %214 = vmatprep.mubr.f32.mxu0 0.0
    %215 = vmatmul.mubr.f32.gmra.mrb[0].mxu0 %v115
    %v216 = vpop.f32.mrb[0].mxu0
    %v217 = vadd.f32 %v96, %v216
    %v218 = vpop.f32.mrb[0].mxu0
    %v219 = vadd.f32 %v100, %v218
    %220 = vmatprep.mubr.f32.mxu0 0.0
    %221 = vmatmul.mubr.f32.gmra.mrb[0].mxu0 %v118
    %v222 = vpop.f32.mrb[0].mxu0
    %v223 = vadd.f32 %v96, %v222
    %v224 = vpop.f32.mrb[0].mxu0
    %v225 = vadd.f32 %v100, %v224
    %226 = vmatprep.mubr.f32.mxu0 0.0
    %227 = vmatmul.mubr.f32.gmra.mrb[0].mxu0 %v121
    %v228 = vpop.f32.mrb[0].mxu0
    %v229 = vadd.f32 %v96, %v228
    %v230 = vpop.f32.mrb[0].mxu0
    %v231 = vadd.f32 %v100, %v230
    %232 = vmatprep.mubr.f32.mxu0 0.0
    %233 = vmatmul.mubr.f32.gmra.mrb[0].mxu0 %v124
    %v234 = vpop.f32.mrb[0].mxu0
    %v235 = vadd.f32 %v96, %v234
    %v236 = vpop.f32.mrb[0].mxu0
    %v237 = vadd.f32 %v100, %v236
    %238 = vdwg.mxu0
    %239 = vst [vmem:[#allocation2] sm:$0xff] %v193
    %240 = vst [vmem:[#allocation2 + $0x8] sm:$0xff] %v195
    %241 = vst [vmem:[#allocation2 + $0x10] sm:$0xff] %v199
    %242 = vst [vmem:[#allocation2 + $0x18] sm:$0xff] %v201
    %243 = vst [vmem:[#allocation2 + $0x20] sm:$0xff] %v205
    %244 = vst [vmem:[#allocation2 + $0x28] sm:$0xff] %v207
    %245 = vst [vmem:[#allocation2 + $0x30] sm:$0xff] %v211
    %246 = vst [vmem:[#allocation2 + $0x38] sm:$0xff] %v213
    %247 = vst [vmem:[#allocation2 + $0x40] sm:$0xff] %v217
    %248 = vst [vmem:[#allocation2 + $0x48] sm:$0xff] %v219
    %249 = vst [vmem:[#allocation2 + $0x50] sm:$0xff] %v223
    %250 = vst [vmem:[#allocation2 + $0x58] sm:$0xff] %v225
    %251 = vst [vmem:[#allocation2 + $0x60] sm:$0xff] %v229
    %252 = vst [vmem:[#allocation2 + $0x68] sm:$0xff] %v231
    %253 = vst [vmem:[#allocation2 + $0x70] sm:$0xff] %v235
    %254 = vst [vmem:[#allocation2 + $0x78] sm:$0xff] %v237
    %v255 = vld [vmem:[#allocation2] sm:$0xff]
    %v256 = vld [vmem:[#allocation2 + $0x8] sm:$0xff]
    %vm257 = vcmask 261120
    %v259 = vsel %vm257, 0.0, 0
    %261 = vmatprep.subr.mxu0 %v30
    %262 = vmatpush1.msra.mxu0 %v29
    %263 = vmatprep.subr.mxu0 %v32
    %264 = vmatpush1.msra.mxu0 %v31
    %265 = vmatprep.subr.mxu0 %v34
    %266 = vmatpush1.msra.mxu0 %v33
    %267 = vmatprep.subr.mxu0 %v36
    %268 = vmatpush1.msra.mxu0 %v35
    %269 = vmatprep.subr.mxu0 0.0
    %270 = vmatpush1.msra.mxu0 0.0
    %271 = vmatprep.subr.mxu0 0.0
    %272 = vmatpush1.msra.mxu0 0.0
    %273 = vmatprep.subr.mxu0 0.0
    %274 = vmatpush1.msra.mxu0 0.0
    %275 = vmatprep.subr.mxu0 0.0
    %276 = vmatpush1.msra.mxu0 0.0
    %277 = vmatprep.subr.mxu0 0.0
    %278 = vmatpush1.msra.mxu0 0.0
    %279 = vmatprep.subr.mxu0 0.0
    %280 = vmatpush1.msra.mxu0 0.0
    %281 = vmatprep.subr.mxu0 0.0
    %282 = vmatpush1.msra.mxu0 0.0
    %283 = vmatprep.subr.mxu0 0.0
    %284 = vmatpush1.msra.mxu0 0.0
    %285 = vmatprep.subr.mxu0 0.0
    %286 = vmatpush1.msra.mxu0 0.0
    %287 = vmatprep.subr.mxu0 0.0
    %288 = vmatpush1.msra.mxu0 0.0
    %289 = vmatprep.subr.mxu0 0.0
    %290 = vmatpush1.msra.mxu0 0.0
    %291 = vmatprep.subr.mxu0 0.0
    %292 = vmatpush1.msra.mxu0 0.0
    %293 = vmatprep.subr.mxu0 0.0
    %294 = vmatpush1.msra.mxu0 0.0
    %295 = vmatprep.subr.mxu0 0.0
    %296 = vmatpush1.msra.mxu0 0.0
    %297 = vmatprep.subr.mxu0 0.0
    %298 = vmatpush1.msra.mxu0 0.0
    %299 = vmatprep.subr.mxu0 0.0
    %300 = vmatpush1.msra.mxu0 0.0
    %301 = vmatprep.subr.mxu0 0.0
    %302 = vmatpush1.msra.mxu0 0.0
    %303 = vmatprep.subr.mxu0 0.0
    %304 = vmatpush1.msra.mxu0 0.0
    %305 = vmatprep.subr.mxu0 0.0
    %306 = vmatpush1.msra.mxu0 0.0
    %307 = vmatprep.subr.mxu0 0.0
    %308 = vmatpush1.msra.mxu0 0.0
    %309 = vmatprep.subr.mxu0 0.0
    %310 = vmatpush1.msra.mxu0 0.0
    %311 = vmatprep.subr.mxu0 0.0
    %312 = vmatpush1.msra.mxu0 0.0
    %313 = vmatprep.subr.mxu0 0.0
    %314 = vmatpush1.msra.mxu0 0.0
    %315 = vmatprep.subr.mxu0 0.0
    %316 = vmatpush1.msra.mxu0 0.0
    %317 = vmatprep.subr.mxu0 0.0
    %318 = vmatpush1.msra.mxu0 0.0
    %319 = vmatprep.subr.mxu0 0.0
    %320 = vmatpush1.msra.mxu0 0.0
    %321 = vmatprep.subr.mxu0 0.0
    %322 = vmatpush1.msra.mxu0 0.0
    %323 = vmatprep.subr.mxu0 0.0
    %324 = vmatpush1.msra.mxu0 0.0
    %325 = vmatprep.mubr.f32.mxu0 0.0
    %326 = vmatmul.mubr.f32.gmra.mrb[0].mxu0 %v259
    %v327 = vpop.f32.mrb[0].mxu0
    %v328 = vadd.f32 0.0, %v327
    %v329 = vpop.f32.mrb[0].mxu0
    %v330 = vadd.f32 0.0, %v329
    %331 = vdwg.mxu0
    %v332 = vadd.f32 %v255, %v328
    %v333 = vadd.f32 %v256, %v330
    %v334 = vsel %vm77, %v332, %v333
    %v335 = vmul.f32 %v334, %v83
    %v336 = vtanh.pop %v335
    %v337 = vmul.f32 %v336, %v83
    %v338 = vadd.f32 %v337, %v84
    %v339 = vmul.f32 %v338, 0.0
    %341 = vrot.lane.b32.xlu0 %v338, 64
    %v342 = vpop.permute.xlu0 %341
    %v344 = vmul.f32 %v338, %v342
    %346 = vrot.lane.b32.xlu0 %v344, 32
    %v347 = vpop.permute.xlu0 %346
    %v349 = vadd.f32 %v339, %v347
    %v350 = vtanh.pop %v349
    %352 = vrot.lane.b32.xlu0 %v350, 64
    %v353 = vpop.permute.xlu0 %352
    %v355 = vmul.f32 %v338, %v353
    %357 = vrot.lane.b32.xlu0 %v355, 32
    %v358 = vpop.permute.xlu0 %357
    %360 = vst.msk [vmem:[#allocation3] sm:$0xff] %vm257, %v358
    %v361 = vrot.slane %v355, 2
    %v363 = vrot.slane %v355, 6
    %vm365 = vcmask 1041408
    %v366 = vsel %vm365, %v361, %v363
    %vm367 = vcmask 1043456
    %v368 = vsel %vm367, %v366, %v355
    %370 = vrot.lane.b32.xlu0 %v368, 32
    %v371 = vpop.permute.xlu0 %370
    %s373 = scalar_lea.vmem [#allocation4], 56
    %374 = vst.msk [vmem:[%s373] sm:$0xff] %vm257, %v371
    %s375 = scalar_lea.vmem [#allocation2], 16
    %v376 = vld [vmem:[%s375] sm:$0xff]
    %v377 = vld [vmem:[%s375 + $0x8] sm:$0xff]
    %v378 = vsel %vm257, %v358, 0
    %380 = vmatprep.subr.mxu0 %v30
    %381 = vmatpush1.msra.mxu0 %v29
    %382 = vmatprep.subr.mxu0 %v32
    %383 = vmatpush1.msra.mxu0 %v31
    %384 = vmatprep.subr.mxu0 %v34
    %385 = vmatpush1.msra.mxu0 %v33
    %386 = vmatprep.subr.mxu0 %v36
    %387 = vmatpush1.msra.mxu0 %v35
    %388 = vmatprep.subr.mxu0 0.0
    %389 = vmatpush1.msra.mxu0 0.0
    %390 = vmatprep.subr.mxu0 0.0
    %391 = vmatpush1.msra.mxu0 0.0
    %392 = vmatprep.subr.mxu0 0.0
    %393 = vmatpush1.msra.mxu0 0.0
    %394 = vmatprep.subr.mxu0 0.0
    %395 = vmatpush1.msra.mxu0 0.0
    %396 = vmatprep.subr.mxu0 0.0
    %397 = vmatpush1.msra.mxu0 0.0
    %398 = vmatprep.subr.mxu0 0.0
    %399 = vmatpush1.msra.mxu0 0.0
    %400 = vmatprep.subr.mxu0 0.0
    %401 = vmatpush1.msra.mxu0 0.0
    %402 = vmatprep.subr.mxu0 0.0
    %403 = vmatpush1.msra.mxu0 0.0
    %404 = vmatprep.subr.mxu0 0.0
    %405 = vmatpush1.msra.mxu0 0.0
    %406 = vmatprep.subr.mxu0 0.0
    %407 = vmatpush1.msra.mxu0 0.0
    %408 = vmatprep.subr.mxu0 0.0
    %409 = vmatpush1.msra.mxu0 0.0
    %410 = vmatprep.subr.mxu0 0.0
    %411 = vmatpush1.msra.mxu0 0.0
    %412 = vmatprep.subr.mxu0 0.0
    %413 = vmatpush1.msra.mxu0 0.0
    %414 = vmatprep.subr.mxu0 0.0
    %415 = vmatpush1.msra.mxu0 0.0
    %416 = vmatprep.subr.mxu0 0.0
    %417 = vmatpush1.msra.mxu0 0.0
    %418 = vmatprep.subr.mxu0 0.0
    %419 = vmatpush1.msra.mxu0 0.0
    %420 = vmatprep.subr.mxu0 0.0
    %421 = vmatpush1.msra.mxu0 0.0
    %422 = vmatprep.subr.mxu0 0.0
    %423 = vmatpush1.msra.mxu0 0.0
    %424 = vmatprep.subr.mxu0 0.0
    %425 = vmatpush1.msra.mxu0 0.0
    %426 = vmatprep.subr.mxu0 0.0
    %427 = vmatpush1.msra.mxu0 0.0
    %428 = vmatprep.subr.mxu0 0.0
    %429 = vmatpush1.msra.mxu0 0.0
    %430 = vmatprep.subr.mxu0 0.0
    %431 = vmatpush1.msra.mxu0 0.0
    %432 = vmatprep.subr.mxu0 0.0
    %433 = vmatpush1.msra.mxu0 0.0
    %434 = vmatprep.subr.mxu0 0.0
    %435 = vmatpush1.msra.mxu0 0.0
    %436 = vmatprep.subr.mxu0 0.0
    %437 = vmatpush1.msra.mxu0 0.0
    %438 = vmatprep.subr.mxu0 0.0
    %439 = vmatpush1.msra.mxu0 0.0
    %440 = vmatprep.subr.mxu0 0.0
    %441 = vmatpush1.msra.mxu0 0.0
    %442 = vmatprep.subr.mxu0 0.0
    %443 = vmatpush1.msra.mxu0 0.0
    %444 = vmatprep.mubr.f32.mxu0 0.0
    %445 = vmatmul.mubr.f32.gmra.mrb[0].mxu0 %v378
    %v446 = vpop.f32.mrb[0].mxu0
    %v447 = vadd.f32 0.0, %v446
    %v448 = vpop.f32.mrb[0].mxu0
    %v449 = vadd.f32 0.0, %v448
    %450 = vdwg.mxu0
    %v451 = vadd.f32 %v376, %v447
    %v452 = vadd.f32 %v377, %v449
    %v453 = vsel %vm77, %v451, %v452
    %v454 = vmul.f32 %v453, %v83
    %v455 = vtanh.pop %v454
    %v456 = vmul.f32 %v455, %v83
    %v457 = vadd.f32 %v456, %v84
    %v458 = vmul.f32 %v457, %v349
    %460 = vrot.lane.b32.xlu0 %v457, 64
    %v461 = vpop.permute.xlu0 %460
    %v463 = vmul.f32 %v457, %v461
    %465 = vrot.lane.b32.xlu0 %v463, 32
    %v466 = vpop.permute.xlu0 %465
    %v468 = vadd.f32 %v458, %v466
    %v469 = vtanh.pop %v468
    %471 = vrot.lane.b32.xlu0 %v469, 64
    %v472 = vpop.permute.xlu0 %471
    %v474 = vmul.f32 %v457, %v472
    %476 = vrot.lane.b32.xlu0 %v474, 32
    %v477 = vpop.permute.xlu0 %476
    %s479 = scalar_lea.vmem [#allocation3], 8
    %480 = vst.msk [vmem:[%s479] sm:$0xff] %vm257, %v477
    %v481 = vrot.slane %v474, 2
    %v483 = vrot.slane %v474, 6
    %v485 = vsel %vm365, %v481, %v483
    %v486 = vsel %vm367, %v485, %v474
    %488 = vrot.lane.b32.xlu0 %v486, 32
    %v489 = vpop.permute.xlu0 %488
    %s491 = scalar_lea.vmem [#allocation4], 48
    %492 = vst.msk [vmem:[%s491] sm:$0xff] %vm257, %v489
    %s493 = scalar_lea.vmem [#allocation2], 32
    %v494 = vld [vmem:[%s493] sm:$0xff]
    %v495 = vld [vmem:[%s493 + $0x8] sm:$0xff]
    %v496 = vsel %vm257, %v477, 0
    %498 = vmatprep.subr.mxu0 %v30
    %499 = vmatpush1.msra.mxu0 %v29
    %500 = vmatprep.subr.mxu0 %v32
    %501 = vmatpush1.msra.mxu0 %v31
    %502 = vmatprep.subr.mxu0 %v34
    %503 = vmatpush1.msra.mxu0 %v33
    %504 = vmatprep.subr.mxu0 %v36
    %505 = vmatpush1.msra.mxu0 %v35
    %506 = vmatprep.subr.mxu0 0.0
    %507 = vmatpush1.msra.mxu0 0.0
    %508 = vmatprep.subr.mxu0 0.0
    %509 = vmatpush1.msra.mxu0 0.0
    %510 = vmatprep.subr.mxu0 0.0
    %511 = vmatpush1.msra.mxu0 0.0
    %512 = vmatprep.subr.mxu0 0.0
    %513 = vmatpush1.msra.mxu0 0.0
    %514 = vmatprep.subr.mxu0 0.0
    %515 = vmatpush1.msra.mxu0 0.0
    %516 = vmatprep.subr.mxu0 0.0
    %517 = vmatpush1.msra.mxu0 0.0
    %518 = vmatprep.subr.mxu0 0.0
    %519 = vmatpush1.msra.mxu0 0.0
    %520 = vmatprep.subr.mxu0 0.0
    %521 = vmatpush1.msra.mxu0 0.0
    %522 = vmatprep.subr.mxu0 0.0
    %523 = vmatpush1.msra.mxu0 0.0
    %524 = vmatprep.subr.mxu0 0.0
    %525 = vmatpush1.msra.mxu0 0.0
    %526 = vmatprep.subr.mxu0 0.0
    %527 = vmatpush1.msra.mxu0 0.0
    %528 = vmatprep.subr.mxu0 0.0
    %529 = vmatpush1.msra.mxu0 0.0
    %530 = vmatprep.subr.mxu0 0.0
    %531 = vmatpush1.msra.mxu0 0.0
    %532 = vmatprep.subr.mxu0 0.0
    %533 = vmatpush1.msra.mxu0 0.0
    %534 = vmatprep.subr.mxu0 0.0
    %535 = vmatpush1.msra.mxu0 0.0
    %536 = vmatprep.subr.mxu0 0.0
    %537 = vmatpush1.msra.mxu0 0.0
    %538 = vmatprep.subr.mxu0 0.0
    %539 = vmatpush1.msra.mxu0 0.0
    %540 = vmatprep.subr.mxu0 0.0
    %541 = vmatpush1.msra.mxu0 0.0
    %542 = vmatprep.subr.mxu0 0.0
    %543 = vmatpush1.msra.mxu0 0.0
    %544 = vmatprep.subr.mxu0 0.0
    %545 = vmatpush1.msra.mxu0 0.0
    %546 = vmatprep.subr.mxu0 0.0
    %547 = vmatpush1.msra.mxu0 0.0
    %548 = vmatprep.subr.mxu0 0.0
    %549 = vmatpush1.msra.mxu0 0.0
    %550 = vmatprep.subr.mxu0 0.0
    %551 = vmatpush1.msra.mxu0 0.0
    %552 = vmatprep.subr.mxu0 0.0
    %553 = vmatpush1.msra.mxu0 0.0
    %554 = vmatprep.subr.mxu0 0.0
    %555 = vmatpush1.msra.mxu0 0.0
    %556 = vmatprep.subr.mxu0 0.0
    %557 = vmatpush1.msra.mxu0 0.0
    %558 = vmatprep.subr.mxu0 0.0
    %559 = vmatpush1.msra.mxu0 0.0
    %560 = vmatprep.subr.mxu0 0.0
    %561 = vmatpush1.msra.mxu0 0.0
    %562 = vmatprep.mubr.f32.mxu0 0.0
    %563 = vmatmul.mubr.f32.gmra.mrb[0].mxu0 %v496
    %v564 = vpop.f32.mrb[0].mxu0
    %v565 = vadd.f32 0.0, %v564
    %v566 = vpop.f32.mrb[0].mxu0
    %v567 = vadd.f32 0.0, %v566
    %568 = vdwg.mxu0
    %v569 = vadd.f32 %v494, %v565
    %v570 = vadd.f32 %v495, %v567
    %v571 = vsel %vm77, %v569, %v570
    %v572 = vmul.f32 %v571, %v83
    %v573 = vtanh.pop %v572
    %v574 = vmul.f32 %v573, %v83
    %v575 = vadd.f32 %v574, %v84
    %v576 = vmul.f32 %v575, %v468
    %578 = vrot.lane.b32.xlu0 %v575, 64
    %v579 = vpop.permute.xlu0 %578
    %v581 = vmul.f32 %v575, %v579
    %583 = vrot.lane.b32.xlu0 %v581, 32
    %v584 = vpop.permute.xlu0 %583
    %v586 = vadd.f32 %v576, %v584
    %v587 = vtanh.pop %v586
    %589 = vrot.lane.b32.xlu0 %v587, 64
    %v590 = vpop.permute.xlu0 %589
    %v592 = vmul.f32 %v575, %v590
    %594 = vrot.lane.b32.xlu0 %v592, 32
    %v595 = vpop.permute.xlu0 %594
    %s597 = scalar_lea.vmem [#allocation3], 16
    %598 = vst.msk [vmem:[%s597] sm:$0xff] %vm257, %v595
    %v599 = vrot.slane %v592, 2
    %v601 = vrot.slane %v592, 6
    %v603 = vsel %vm365, %v599, %v601
    %v604 = vsel %vm367, %v603, %v592
    %606 = vrot.lane.b32.xlu0 %v604, 32
    %v607 = vpop.permute.xlu0 %606
    %s609 = scalar_lea.vmem [#allocation4], 40
    %610 = vst.msk [vmem:[%s609] sm:$0xff] %vm257, %v607
    %s611 = scalar_lea.vmem [#allocation2], 48
    %v612 = vld [vmem:[%s611] sm:$0xff]
    %v613 = vld [vmem:[%s611 + $0x8] sm:$0xff]
    %v614 = vsel %vm257, %v595, 0
    %616 = vmatprep.subr.mxu0 %v30
    %617 = vmatpush1.msra.mxu0 %v29
    %618 = vmatprep.subr.mxu0 %v32
    %619 = vmatpush1.msra.mxu0 %v31
    %620 = vmatprep.subr.mxu0 %v34
    %621 = vmatpush1.msra.mxu0 %v33
    %622 = vmatprep.subr.mxu0 %v36
    %623 = vmatpush1.msra.mxu0 %v35
    %624 = vmatprep.subr.mxu0 0.0
    %625 = vmatpush1.msra.mxu0 0.0
    %626 = vmatprep.subr.mxu0 0.0
    %627 = vmatpush1.msra.mxu0 0.0
    %628 = vmatprep.subr.mxu0 0.0
    %629 = vmatpush1.msra.mxu0 0.0
    %630 = vmatprep.subr.mxu0 0.0
    %631 = vmatpush1.msra.mxu0 0.0
    %632 = vmatprep.subr.mxu0 0.0
    %633 = vmatpush1.msra.mxu0 0.0
    %634 = vmatprep.subr.mxu0 0.0
    %635 = vmatpush1.msra.mxu0 0.0
    %636 = vmatprep.subr.mxu0 0.0
    %637 = vmatpush1.msra.mxu0 0.0
    %638 = vmatprep.subr.mxu0 0.0
    %639 = vmatpush1.msra.mxu0 0.0
    %640 = vmatprep.subr.mxu0 0.0
    %641 = vmatpush1.msra.mxu0 0.0
    %642 = vmatprep.subr.mxu0 0.0
    %643 = vmatpush1.msra.mxu0 0.0
    %644 = vmatprep.subr.mxu0 0.0
    %645 = vmatpush1.msra.mxu0 0.0
    %646 = vmatprep.subr.mxu0 0.0
    %647 = vmatpush1.msra.mxu0 0.0
    %648 = vmatprep.subr.mxu0 0.0
    %649 = vmatpush1.msra.mxu0 0.0
    %650 = vmatprep.subr.mxu0 0.0
    %651 = vmatpush1.msra.mxu0 0.0
    %652 = vmatprep.subr.mxu0 0.0
    %653 = vmatpush1.msra.mxu0 0.0
    %654 = vmatprep.subr.mxu0 0.0
    %655 = vmatpush1.msra.mxu0 0.0
    %656 = vmatprep.subr.mxu0 0.0
    %657 = vmatpush1.msra.mxu0 0.0
    %658 = vmatprep.subr.mxu0 0.0
    %659 = vmatpush1.msra.mxu0 0.0
    %660 = vmatprep.subr.mxu0 0.0
    %661 = vmatpush1.msra.mxu0 0.0
    %662 = vmatprep.subr.mxu0 0.0
    %663 = vmatpush1.msra.mxu0 0.0
    %664 = vmatprep.subr.mxu0 0.0
    %665 = vmatpush1.msra.mxu0 0.0
    %666 = vmatprep.subr.mxu0 0.0
    %667 = vmatpush1.msra.mxu0 0.0
    %668 = vmatprep.subr.mxu0 0.0
    %669 = vmatpush1.msra.mxu0 0.0
    %670 = vmatprep.subr.mxu0 0.0
    %671 = vmatpush1.msra.mxu0 0.0
    %672 = vmatprep.subr.mxu0 0.0
    %673 = vmatpush1.msra.mxu0 0.0
    %674 = vmatprep.subr.mxu0 0.0
    %675 = vmatpush1.msra.mxu0 0.0
    %676 = vmatprep.subr.mxu0 0.0
    %677 = vmatpush1.msra.mxu0 0.0
    %678 = vmatprep.subr.mxu0 0.0
    %679 = vmatpush1.msra.mxu0 0.0
    %680 = vmatprep.mubr.f32.mxu0 0.0
    %681 = vmatmul.mubr.f32.gmra.mrb[0].mxu0 %v614
    %v682 = vpop.f32.mrb[0].mxu0
    %v683 = vadd.f32 0.0, %v682
    %v684 = vpop.f32.mrb[0].mxu0
    %v685 = vadd.f32 0.0, %v684
    %686 = vdwg.mxu0
    %v687 = vadd.f32 %v612, %v683
    %v688 = vadd.f32 %v613, %v685
    %v689 = vsel %vm77, %v687, %v688
    %v690 = vmul.f32 %v689, %v83
    %v691 = vtanh.pop %v690
    %v692 = vmul.f32 %v691, %v83
    %v693 = vadd.f32 %v692, %v84
    %v694 = vmul.f32 %v693, %v586
    %696 = vrot.lane.b32.xlu0 %v693, 64
    %v697 = vpop.permute.xlu0 %696
    %v699 = vmul.f32 %v693, %v697
    %701 = vrot.lane.b32.xlu0 %v699, 32
    %v702 = vpop.permute.xlu0 %701
    %v704 = vadd.f32 %v694, %v702
    %v705 = vtanh.pop %v704
    %707 = vrot.lane.b32.xlu0 %v705, 64
    %v708 = vpop.permute.xlu0 %707
    %v710 = vmul.f32 %v693, %v708
    %712 = vrot.lane.b32.xlu0 %v710, 32
    %v713 = vpop.permute.xlu0 %712
    %s715 = scalar_lea.vmem [#allocation3], 24
    %716 = vst.msk [vmem:[%s715] sm:$0xff] %vm257, %v713
    %v717 = vrot.slane %v710, 2
    %v719 = vrot.slane %v710, 6
    %v721 = vsel %vm365, %v717, %v719
    %v722 = vsel %vm367, %v721, %v710
    %724 = vrot.lane.b32.xlu0 %v722, 32
    %v725 = vpop.permute.xlu0 %724
    %s727 = scalar_lea.vmem [#allocation4], 32
    %728 = vst.msk [vmem:[%s727] sm:$0xff] %vm257, %v725
    %s729 = scalar_lea.vmem [#allocation2], 64
    %v730 = vld [vmem:[%s729] sm:$0xff]
    %v731 = vld [vmem:[%s729 + $0x8] sm:$0xff]
    %v732 = vsel %vm257, %v713, 0
    %734 = vmatprep.subr.mxu0 %v30
    %735 = vmatpush1.msra.mxu0 %v29
    %736 = vmatprep.subr.mxu0 %v32
    %737 = vmatpush1.msra.mxu0 %v31
    %738 = vmatprep.subr.mxu0 %v34
    %739 = vmatpush1.msra.mxu0 %v33
    %740 = vmatprep.subr.mxu0 %v36
    %741 = vmatpush1.msra.mxu0 %v35
    %742 = vmatprep.subr.mxu0 0.0
    %743 = vmatpush1.msra.mxu0 0.0
    %744 = vmatprep.subr.mxu0 0.0
    %745 = vmatpush1.msra.mxu0 0.0
    %746 = vmatprep.subr.mxu0 0.0
    %747 = vmatpush1.msra.mxu0 0.0
    %748 = vmatprep.subr.mxu0 0.0
    %749 = vmatpush1.msra.mxu0 0.0
    %750 = vmatprep.subr.mxu0 0.0
    %751 = vmatpush1.msra.mxu0 0.0
    %752 = vmatprep.subr.mxu0 0.0
    %753 = vmatpush1.msra.mxu0 0.0
    %754 = vmatprep.subr.mxu0 0.0
    %755 = vmatpush1.msra.mxu0 0.0
    %756 = vmatprep.subr.mxu0 0.0
    %757 = vmatpush1.msra.mxu0 0.0
    %758 = vmatprep.subr.mxu0 0.0
    %759 = vmatpush1.msra.mxu0 0.0
    %760 = vmatprep.subr.mxu0 0.0
    %761 = vmatpush1.msra.mxu0 0.0
    %762 = vmatprep.subr.mxu0 0.0
    %763 = vmatpush1.msra.mxu0 0.0
    %764 = vmatprep.subr.mxu0 0.0
    %765 = vmatpush1.msra.mxu0 0.0
    %766 = vmatprep.subr.mxu0 0.0
    %767 = vmatpush1.msra.mxu0 0.0
    %768 = vmatprep.subr.mxu0 0.0
    %769 = vmatpush1.msra.mxu0 0.0
    %770 = vmatprep.subr.mxu0 0.0
    %771 = vmatpush1.msra.mxu0 0.0
    %772 = vmatprep.subr.mxu0 0.0
    %773 = vmatpush1.msra.mxu0 0.0
    %774 = vmatprep.subr.mxu0 0.0
    %775 = vmatpush1.msra.mxu0 0.0
    %776 = vmatprep.subr.mxu0 0.0
    %777 = vmatpush1.msra.mxu0 0.0
    %778 = vmatprep.subr.mxu0 0.0
    %779 = vmatpush1.msra.mxu0 0.0
    %780 = vmatprep.subr.mxu0 0.0
    %781 = vmatpush1.msra.mxu0 0.0
    %782 = vmatprep.subr.mxu0 0.0
    %783 = vmatpush1.msra.mxu0 0.0
    %784 = vmatprep.subr.mxu0 0.0
    %785 = vmatpush1.msra.mxu0 0.0
    %786 = vmatprep.subr.mxu0 0.0
    %787 = vmatpush1.msra.mxu0 0.0
    %788 = vmatprep.subr.mxu0 0.0
    %789 = vmatpush1.msra.mxu0 0.0
    %790 = vmatprep.subr.mxu0 0.0
    %791 = vmatpush1.msra.mxu0 0.0
    %792 = vmatprep.subr.mxu0 0.0
    %793 = vmatpush1.msra.mxu0 0.0
    %794 = vmatprep.subr.mxu0 0.0
    %795 = vmatpush1.msra.mxu0 0.0
    %796 = vmatprep.subr.mxu0 0.0
    %797 = vmatpush1.msra.mxu0 0.0
    %798 = vmatprep.mubr.f32.mxu0 0.0
    %799 = vmatmul.mubr.f32.gmra.mrb[0].mxu0 %v732
    %v800 = vpop.f32.mrb[0].mxu0
    %v801 = vadd.f32 0.0, %v800
    %v802 = vpop.f32.mrb[0].mxu0
    %v803 = vadd.f32 0.0, %v802
    %804 = vdwg.mxu0
    %v805 = vadd.f32 %v730, %v801
    %v806 = vadd.f32 %v731, %v803
    %v807 = vsel %vm77, %v805, %v806
    %v808 = vmul.f32 %v807, %v83
    %v809 = vtanh.pop %v808
    %v810 = vmul.f32 %v809, %v83
    %v811 = vadd.f32 %v810, %v84
    %v812 = vmul.f32 %v811, %v704
    %814 = vrot.lane.b32.xlu0 %v811, 64
    %v815 = vpop.permute.xlu0 %814
    %v817 = vmul.f32 %v811, %v815
    %819 = vrot.lane.b32.xlu0 %v817, 32
    %v820 = vpop.permute.xlu0 %819
    %v822 = vadd.f32 %v812, %v820
    %v823 = vtanh.pop %v822
    %825 = vrot.lane.b32.xlu0 %v823, 64
    %v826 = vpop.permute.xlu0 %825
    %v828 = vmul.f32 %v811, %v826
    %830 = vrot.lane.b32.xlu0 %v828, 32
    %v831 = vpop.permute.xlu0 %830
    %s833 = scalar_lea.vmem [#allocation3], 32
    %834 = vst.msk [vmem:[%s833] sm:$0xff] %vm257, %v831
    %v835 = vrot.slane %v828, 2
    %v837 = vrot.slane %v828, 6
    %v839 = vsel %vm365, %v835, %v837
    %v840 = vsel %vm367, %v839, %v828
    %842 = vrot.lane.b32.xlu0 %v840, 32
    %v843 = vpop.permute.xlu0 %842
    %s845 = scalar_lea.vmem [#allocation4], 24
    %846 = vst.msk [vmem:[%s845] sm:$0xff] %vm257, %v843
    %s847 = scalar_lea.vmem [#allocation2], 80
    %v848 = vld [vmem:[%s847] sm:$0xff]
    %v849 = vld [vmem:[%s847 + $0x8] sm:$0xff]
    %v850 = vsel %vm257, %v831, 0
    %852 = vmatprep.subr.mxu0 %v30
    %853 = vmatpush1.msra.mxu0 %v29
    %854 = vmatprep.subr.mxu0 %v32
    %855 = vmatpush1.msra.mxu0 %v31
    %856 = vmatprep.subr.mxu0 %v34
    %857 = vmatpush1.msra.mxu0 %v33
    %858 = vmatprep.subr.mxu0 %v36
    %859 = vmatpush1.msra.mxu0 %v35
    %860 = vmatprep.subr.mxu0 0.0
    %861 = vmatpush1.msra.mxu0 0.0
    %862 = vmatprep.subr.mxu0 0.0
    %863 = vmatpush1.msra.mxu0 0.0
    %864 = vmatprep.subr.mxu0 0.0
    %865 = vmatpush1.msra.mxu0 0.0
    %866 = vmatprep.subr.mxu0 0.0
    %867 = vmatpush1.msra.mxu0 0.0
    %868 = vmatprep.subr.mxu0 0.0
    %869 = vmatpush1.msra.mxu0 0.0
    %870 = vmatprep.subr.mxu0 0.0
    %871 = vmatpush1.msra.mxu0 0.0
    %872 = vmatprep.subr.mxu0 0.0
    %873 = vmatpush1.msra.mxu0 0.0
    %874 = vmatprep.subr.mxu0 0.0
    %875 = vmatpush1.msra.mxu0 0.0
    %876 = vmatprep.subr.mxu0 0.0
    %877 = vmatpush1.msra.mxu0 0.0
    %878 = vmatprep.subr.mxu0 0.0
    %879 = vmatpush1.msra.mxu0 0.0
    %880 = vmatprep.subr.mxu0 0.0
    %881 = vmatpush1.msra.mxu0 0.0
    %882 = vmatprep.subr.mxu0 0.0
    %883 = vmatpush1.msra.mxu0 0.0
    %884 = vmatprep.subr.mxu0 0.0
    %885 = vmatpush1.msra.mxu0 0.0
    %886 = vmatprep.subr.mxu0 0.0
    %887 = vmatpush1.msra.mxu0 0.0
    %888 = vmatprep.subr.mxu0 0.0
    %889 = vmatpush1.msra.mxu0 0.0
    %890 = vmatprep.subr.mxu0 0.0
    %891 = vmatpush1.msra.mxu0 0.0
    %892 = vmatprep.subr.mxu0 0.0
    %893 = vmatpush1.msra.mxu0 0.0
    %894 = vmatprep.subr.mxu0 0.0
    %895 = vmatpush1.msra.mxu0 0.0
    %896 = vmatprep.subr.mxu0 0.0
    %897 = vmatpush1.msra.mxu0 0.0
    %898 = vmatprep.subr.mxu0 0.0
    %899 = vmatpush1.msra.mxu0 0.0
    %900 = vmatprep.subr.mxu0 0.0
    %901 = vmatpush1.msra.mxu0 0.0
    %902 = vmatprep.subr.mxu0 0.0
    %903 = vmatpush1.msra.mxu0 0.0
    %904 = vmatprep.subr.mxu0 0.0
    %905 = vmatpush1.msra.mxu0 0.0
    %906 = vmatprep.subr.mxu0 0.0
    %907 = vmatpush1.msra.mxu0 0.0
    %908 = vmatprep.subr.mxu0 0.0
    %909 = vmatpush1.msra.mxu0 0.0
    %910 = vmatprep.subr.mxu0 0.0
    %911 = vmatpush1.msra.mxu0 0.0
    %912 = vmatprep.subr.mxu0 0.0
    %913 = vmatpush1.msra.mxu0 0.0
    %914 = vmatprep.subr.mxu0 0.0
    %915 = vmatpush1.msra.mxu0 0.0
    %916 = vmatprep.mubr.f32.mxu0 0.0
    %917 = vmatmul.mubr.f32.gmra.mrb[0].mxu0 %v850
    %v918 = vpop.f32.mrb[0].mxu0
    %v919 = vadd.f32 0.0, %v918
    %v920 = vpop.f32.mrb[0].mxu0
    %v921 = vadd.f32 0.0, %v920
    %922 = vdwg.mxu0
    %v923 = vadd.f32 %v848, %v919
    %v924 = vadd.f32 %v849, %v921
    %v925 = vsel %vm77, %v923, %v924
    %v926 = vmul.f32 %v925, %v83
    %v927 = vtanh.pop %v926
    %v928 = vmul.f32 %v927, %v83
    %v929 = vadd.f32 %v928, %v84
    %v930 = vmul.f32 %v929, %v822
    %932 = vrot.lane.b32.xlu0 %v929, 64
    %v933 = vpop.permute.xlu0 %932
    %v935 = vmul.f32 %v929, %v933
    %937 = vrot.lane.b32.xlu0 %v935, 32
    %v938 = vpop.permute.xlu0 %937
    %v940 = vadd.f32 %v930, %v938
    %v941 = vtanh.pop %v940
    %943 = vrot.lane.b32.xlu0 %v941, 64
    %v944 = vpop.permute.xlu0 %943
    %v946 = vmul.f32 %v929, %v944
    %948 = vrot.lane.b32.xlu0 %v946, 32
    %v949 = vpop.permute.xlu0 %948
    %s951 = scalar_lea.vmem [#allocation3], 40
    %952 = vst.msk [vmem:[%s951] sm:$0xff] %vm257, %v949
    %v953 = vrot.slane %v946, 2
    %v955 = vrot.slane %v946, 6
    %v957 = vsel %vm365, %v953, %v955
    %v958 = vsel %vm367, %v957, %v946
    %960 = vrot.lane.b32.xlu0 %v958, 32
    %v961 = vpop.permute.xlu0 %960
    %s963 = scalar_lea.vmem [#allocation4], 16
    %964 = vst.msk [vmem:[%s963] sm:$0xff] %vm257, %v961
    %s965 = scalar_lea.vmem [#allocation2], 96
    %v966 = vld [vmem:[%s965] sm:$0xff]
    %v967 = vld [vmem:[%s965 + $0x8] sm:$0xff]
    %v968 = vsel %vm257, %v949, 0
    %970 = vmatprep.subr.mxu0 %v30
    %971 = vmatpush1.msra.mxu0 %v29
    %972 = vmatprep.subr.mxu0 %v32
    %973 = vmatpush1.msra.mxu0 %v31
    %974 = vmatprep.subr.mxu0 %v34
    %975 = vmatpush1.msra.mxu0 %v33
    %976 = vmatprep.subr.mxu0 %v36
    %977 = vmatpush1.msra.mxu0 %v35
    %978 = vmatprep.subr.mxu0 0.0
    %979 = vmatpush1.msra.mxu0 0.0
    %980 = vmatprep.subr.mxu0 0.0
    %981 = vmatpush1.msra.mxu0 0.0
    %982 = vmatprep.subr.mxu0 0.0
    %983 = vmatpush1.msra.mxu0 0.0
    %984 = vmatprep.subr.mxu0 0.0
    %985 = vmatpush1.msra.mxu0 0.0
    %986 = vmatprep.subr.mxu0 0.0
    %987 = vmatpush1.msra.mxu0 0.0
    %988 = vmatprep.subr.mxu0 0.0
    %989 = vmatpush1.msra.mxu0 0.0
    %990 = vmatprep.subr.mxu0 0.0
    %991 = vmatpush1.msra.mxu0 0.0
    %992 = vmatprep.subr.mxu0 0.0
    %993 = vmatpush1.msra.mxu0 0.0
    %994 = vmatprep.subr.mxu0 0.0
    %995 = vmatpush1.msra.mxu0 0.0
    %996 = vmatprep.subr.mxu0 0.0
    %997 = vmatpush1.msra.mxu0 0.0
    %998 = vmatprep.subr.mxu0 0.0
    %999 = vmatpush1.msra.mxu0 0.0
    %1000 = vmatprep.subr.mxu0 0.0
    %1001 = vmatpush1.msra.mxu0 0.0
    %1002 = vmatprep.subr.mxu0 0.0
    %1003 = vmatpush1.msra.mxu0 0.0
    %1004 = vmatprep.subr.mxu0 0.0
    %1005 = vmatpush1.msra.mxu0 0.0
    %1006 = vmatprep.subr.mxu0 0.0
    %1007 = vmatpush1.msra.mxu0 0.0
    %1008 = vmatprep.subr.mxu0 0.0
    %1009 = vmatpush1.msra.mxu0 0.0
    %1010 = vmatprep.subr.mxu0 0.0
    %1011 = vmatpush1.msra.mxu0 0.0
    %1012 = vmatprep.subr.mxu0 0.0
    %1013 = vmatpush1.msra.mxu0 0.0
    %1014 = vmatprep.subr.mxu0 0.0
    %1015 = vmatpush1.msra.mxu0 0.0
    %1016 = vmatprep.subr.mxu0 0.0
    %1017 = vmatpush1.msra.mxu0 0.0
    %1018 = vmatprep.subr.mxu0 0.0
    %1019 = vmatpush1.msra.mxu0 0.0
    %1020 = vmatprep.subr.mxu0 0.0
    %1021 = vmatpush1.msra.mxu0 0.0
    %1022 = vmatprep.subr.mxu0 0.0
    %1023 = vmatpush1.msra.mxu0 0.0
    %1024 = vmatprep.subr.mxu0 0.0
    %1025 = vmatpush1.msra.mxu0 0.0
    %1026 = vmatprep.subr.mxu0 0.0
    %1027 = vmatpush1.msra.mxu0 0.0
    %1028 = vmatprep.subr.mxu0 0.0
    %1029 = vmatpush1.msra.mxu0 0.0
    %1030 = vmatprep.subr.mxu0 0.0
    %1031 = vmatpush1.msra.mxu0 0.0
    %1032 = vmatprep.subr.mxu0 0.0
    %1033 = vmatpush1.msra.mxu0 0.0
    %1034 = vmatprep.mubr.f32.mxu0 0.0
    %1035 = vmatmul.mubr.f32.gmra.mrb[0].mxu0 %v968
    %v1036 = vpop.f32.mrb[0].mxu0
    %v1037 = vadd.f32 0.0, %v1036
    %v1038 = vpop.f32.mrb[0].mxu0
    %v1039 = vadd.f32 0.0, %v1038
    %1040 = vdwg.mxu0
    %v1041 = vadd.f32 %v966, %v1037
    %v1042 = vadd.f32 %v967, %v1039
    %v1043 = vsel %vm77, %v1041, %v1042
    %v1044 = vmul.f32 %v1043, %v83
    %v1045 = vtanh.pop %v1044
    %v1046 = vmul.f32 %v1045, %v83
    %v1047 = vadd.f32 %v1046, %v84
    %v1048 = vmul.f32 %v1047, %v940
    %1050 = vrot.lane.b32.xlu0 %v1047, 64
    %v1051 = vpop.permute.xlu0 %1050
    %v1053 = vmul.f32 %v1047, %v1051
    %1055 = vrot.lane.b32.xlu0 %v1053, 32
    %v1056 = vpop.permute.xlu0 %1055
    %v1058 = vadd.f32 %v1048, %v1056
    %v1059 = vtanh.pop %v1058
    %1061 = vrot.lane.b32.xlu0 %v1059, 64
    %v1062 = vpop.permute.xlu0 %1061
    %v1064 = vmul.f32 %v1047, %v1062
    %1066 = vrot.lane.b32.xlu0 %v1064, 32
    %v1067 = vpop.permute.xlu0 %1066
    %s1069 = scalar_lea.vmem [#allocation3], 48
    %1070 = vst.msk [vmem:[%s1069] sm:$0xff] %vm257, %v1067
    %v1071 = vrot.slane %v1064, 2
    %v1073 = vrot.slane %v1064, 6
    %v1075 = vsel %vm365, %v1071, %v1073
    %v1076 = vsel %vm367, %v1075, %v1064
    %1078 = vrot.lane.b32.xlu0 %v1076, 32
    %v1079 = vpop.permute.xlu0 %1078
    %s1081 = scalar_lea.vmem [#allocation4], 8
    %1082 = vst.msk [vmem:[%s1081] sm:$0xff] %vm257, %v1079
    %s1083 = scalar_lea.vmem [#allocation2], 112
    %v1084 = vld [vmem:[%s1083] sm:$0xff]
    %v1085 = vld [vmem:[%s1083 + $0x8] sm:$0xff]
    %v1086 = vsel %vm257, %v1067, 0
    %1088 = vmatprep.subr.mxu0 %v30
    %1089 = vmatpush1.msra.mxu0 %v29
    %1090 = vmatprep.subr.mxu0 %v32
    %1091 = vmatpush1.msra.mxu0 %v31
    %1092 = vmatprep.subr.mxu0 %v34
    %1093 = vmatpush1.msra.mxu0 %v33
    %1094 = vmatprep.subr.mxu0 %v36
    %1095 = vmatpush1.msra.mxu0 %v35
    %1096 = vmatprep.subr.mxu0 0.0
    %1097 = vmatpush1.msra.mxu0 0.0
    %1098 = vmatprep.subr.mxu0 0.0
    %1099 = vmatpush1.msra.mxu0 0.0
    %1100 = vmatprep.subr.mxu0 0.0
    %1101 = vmatpush1.msra.mxu0 0.0
    %1102 = vmatprep.subr.mxu0 0.0
    %1103 = vmatpush1.msra.mxu0 0.0
    %1104 = vmatprep.subr.mxu0 0.0
    %1105 = vmatpush1.msra.mxu0 0.0
    %1106 = vmatprep.subr.mxu0 0.0
    %1107 = vmatpush1.msra.mxu0 0.0
    %1108 = vmatprep.subr.mxu0 0.0
    %1109 = vmatpush1.msra.mxu0 0.0
    %1110 = vmatprep.subr.mxu0 0.0
    %1111 = vmatpush1.msra.mxu0 0.0
    %1112 = vmatprep.subr.mxu0 0.0
    %1113 = vmatpush1.msra.mxu0 0.0
    %1114 = vmatprep.subr.mxu0 0.0
    %1115 = vmatpush1.msra.mxu0 0.0
    %1116 = vmatprep.subr.mxu0 0.0
    %1117 = vmatpush1.msra.mxu0 0.0
    %1118 = vmatprep.subr.mxu0 0.0
    %1119 = vmatpush1.msra.mxu0 0.0
    %1120 = vmatprep.subr.mxu0 0.0
    %1121 = vmatpush1.msra.mxu0 0.0
    %1122 = vmatprep.subr.mxu0 0.0
    %1123 = vmatpush1.msra.mxu0 0.0
    %1124 = vmatprep.subr.mxu0 0.0
    %1125 = vmatpush1.msra.mxu0 0.0
    %1126 = vmatprep.subr.mxu0 0.0
    %1127 = vmatpush1.msra.mxu0 0.0
    %1128 = vmatprep.subr.mxu0 0.0
    %1129 = vmatpush1.msra.mxu0 0.0
    %1130 = vmatprep.subr.mxu0 0.0
    %1131 = vmatpush1.msra.mxu0 0.0
    %1132 = vmatprep.subr.mxu0 0.0
    %1133 = vmatpush1.msra.mxu0 0.0
    %1134 = vmatprep.subr.mxu0 0.0
    %1135 = vmatpush1.msra.mxu0 0.0
    %1136 = vmatprep.subr.mxu0 0.0
    %1137 = vmatpush1.msra.mxu0 0.0
    %1138 = vmatprep.subr.mxu0 0.0
    %1139 = vmatpush1.msra.mxu0 0.0
    %1140 = vmatprep.subr.mxu0 0.0
    %1141 = vmatpush1.msra.mxu0 0.0
    %1142 = vmatprep.subr.mxu0 0.0
    %1143 = vmatpush1.msra.mxu0 0.0
    %1144 = vmatprep.subr.mxu0 0.0
    %1145 = vmatpush1.msra.mxu0 0.0
    %1146 = vmatprep.subr.mxu0 0.0
    %1147 = vmatpush1.msra.mxu0 0.0
    %1148 = vmatprep.subr.mxu0 0.0
    %1149 = vmatpush1.msra.mxu0 0.0
    %1150 = vmatprep.subr.mxu0 0.0
    %1151 = vmatpush1.msra.mxu0 0.0
    %1152 = vmatprep.mubr.f32.mxu0 0.0
    %1153 = vmatmul.mubr.f32.gmra.mrb[0].mxu0 %v1086
    %v1154 = vpop.f32.mrb[0].mxu0
    %v1155 = vadd.f32 0.0, %v1154
    %v1156 = vpop.f32.mrb[0].mxu0
    %v1157 = vadd.f32 0.0, %v1156
    %1158 = vdwg.mxu0
    %v1159 = vadd.f32 %v1084, %v1155
    %v1160 = vadd.f32 %v1085, %v1157
    %v1161 = vsel %vm77, %v1159, %v1160
    %v1162 = vmul.f32 %v1161, %v83
    %v1163 = vtanh.pop %v1162
    %v1164 = vmul.f32 %v1163, %v83
    %v1165 = vadd.f32 %v1164, %v84
    %v1166 = vmul.f32 %v1165, %v1058
    %1168 = vrot.lane.b32.xlu0 %v1165, 64
    %v1169 = vpop.permute.xlu0 %1168
    %v1171 = vmul.f32 %v1165, %v1169
    %1173 = vrot.lane.b32.xlu0 %v1171, 32
    %v1174 = vpop.permute.xlu0 %1173
    %v1176 = vadd.f32 %v1166, %v1174
    %v1177 = vtanh.pop %v1176
    %1179 = vrot.lane.b32.xlu0 %v1177, 64
    %v1180 = vpop.permute.xlu0 %1179
    %v1182 = vmul.f32 %v1165, %v1180
    %1184 = vrot.lane.b32.xlu0 %v1182, 32
    %v1185 = vpop.permute.xlu0 %1184
    %s1187 = scalar_lea.vmem [#allocation3], 56
    %1188 = vst.msk [vmem:[%s1187] sm:$0xff] %vm257, %v1185
    %v1189 = vrot.slane %v1182, 2
    %v1191 = vrot.slane %v1182, 6
    %v1193 = vsel %vm365, %v1189, %v1191
    %v1194 = vsel %vm367, %v1193, %v1182
    %1196 = vrot.lane.b32.xlu0 %v1194, 32
    %v1197 = vpop.permute.xlu0 %1196
    %1199 = vst.msk [vmem:[#allocation4] sm:$0xff] %vm257, %v1197
    %v1200 = vld [vmem:[#allocation3] sm:$0xff]
    %v1201 = vld [vmem:[#allocation3 + $0x8] sm:$0xff]
    %v1202 = vld [vmem:[#allocation3 + $0x10] sm:$0xff]
    %v1203 = vld [vmem:[#allocation3 + $0x18] sm:$0xff]
    %v1204 = vld [vmem:[#allocation3 + $0x20] sm:$0xff]
    %v1205 = vld [vmem:[#allocation3 + $0x28] sm:$0xff]
    %v1206 = vld [vmem:[#allocation3 + $0x30] sm:$0xff]
    %v1207 = vld [vmem:[#allocation3 + $0x38] sm:$0xff]
    %v1208 = vld [vmem:[#allocation4] sm:$0xff]
    %v1209 = vld [vmem:[#allocation4 + $0x8] sm:$0xff]
    %v1210 = vld [vmem:[#allocation4 + $0x10] sm:$0xff]
    %v1211 = vld [vmem:[#allocation4 + $0x18] sm:$0xff]
    %v1212 = vld [vmem:[#allocation4 + $0x20] sm:$0xff]
    %v1213 = vld [vmem:[#allocation4 + $0x28] sm:$0xff]
    %v1214 = vld [vmem:[#allocation4 + $0x30] sm:$0xff]
    %v1215 = vld [vmem:[#allocation4 + $0x38] sm:$0xff]
    %v1217 = vsel %vm257, %v1208, 0
    %v1220 = vsel %vm257, %v1209, 0
    %v1223 = vsel %vm257, %v1210, 0
    %v1226 = vsel %vm257, %v1211, 0
    %v1229 = vsel %vm257, %v1212, 0
    %v1232 = vsel %vm257, %v1213, 0
    %v1235 = vsel %vm257, %v1214, 0
    %v1238 = vsel %vm257, %v1215, 0
    %1240 = vmatprep.subr.mxu0 %v46
    %1241 = vmatpush1.msra.mxu0 %v45
    %1242 = vmatprep.subr.mxu0 %v48
    %1243 = vmatpush1.msra.mxu0 %v47
    %1244 = vmatprep.subr.mxu0 %v50
    %1245 = vmatpush1.msra.mxu0 %v49
    %1246 = vmatprep.subr.mxu0 %v52
    %1247 = vmatpush1.msra.mxu0 %v51
    %1248 = vmatprep.subr.mxu0 0.0
    %1249 = vmatpush1.msra.mxu0 0.0
    %1250 = vmatprep.subr.mxu0 0.0
    %1251 = vmatpush1.msra.mxu0 0.0
    %1252 = vmatprep.subr.mxu0 0.0
    %1253 = vmatpush1.msra.mxu0 0.0
    %1254 = vmatprep.subr.mxu0 0.0
    %1255 = vmatpush1.msra.mxu0 0.0
    %1256 = vmatprep.subr.mxu0 0.0
    %1257 = vmatpush1.msra.mxu0 0.0
    %1258 = vmatprep.subr.mxu0 0.0
    %1259 = vmatpush1.msra.mxu0 0.0
    %1260 = vmatprep.subr.mxu0 0.0
    %1261 = vmatpush1.msra.mxu0 0.0
    %1262 = vmatprep.subr.mxu0 0.0
    %1263 = vmatpush1.msra.mxu0 0.0
    %1264 = vmatprep.subr.mxu0 0.0
    %1265 = vmatpush1.msra.mxu0 0.0
    %1266 = vmatprep.subr.mxu0 0.0
    %1267 = vmatpush1.msra.mxu0 0.0
    %1268 = vmatprep.subr.mxu0 0.0
    %1269 = vmatpush1.msra.mxu0 0.0
    %1270 = vmatprep.subr.mxu0 0.0
    %1271 = vmatpush1.msra.mxu0 0.0
    %1272 = vmatprep.subr.mxu0 0.0
    %1273 = vmatpush1.msra.mxu0 0.0
    %1274 = vmatprep.subr.mxu0 0.0
    %1275 = vmatpush1.msra.mxu0 0.0
    %1276 = vmatprep.subr.mxu0 0.0
    %1277 = vmatpush1.msra.mxu0 0.0
    %1278 = vmatprep.subr.mxu0 0.0
    %1279 = vmatpush1.msra.mxu0 0.0
    %1280 = vmatprep.subr.mxu0 0.0
    %1281 = vmatpush1.msra.mxu0 0.0
    %1282 = vmatprep.subr.mxu0 0.0
    %1283 = vmatpush1.msra.mxu0 0.0
    %1284 = vmatprep.subr.mxu0 0.0
    %1285 = vmatpush1.msra.mxu0 0.0
    %1286 = vmatprep.subr.mxu0 0.0
    %1287 = vmatpush1.msra.mxu0 0.0
    %1288 = vmatprep.subr.mxu0 0.0
    %1289 = vmatpush1.msra.mxu0 0.0
    %1290 = vmatprep.subr.mxu0 0.0
    %1291 = vmatpush1.msra.mxu0 0.0
    %1292 = vmatprep.subr.mxu0 0.0
    %1293 = vmatpush1.msra.mxu0 0.0
    %1294 = vmatprep.subr.mxu0 0.0
    %1295 = vmatpush1.msra.mxu0 0.0
    %1296 = vmatprep.subr.mxu0 0.0
    %1297 = vmatpush1.msra.mxu0 0.0
    %1298 = vmatprep.subr.mxu0 0.0
    %1299 = vmatpush1.msra.mxu0 0.0
    %1300 = vmatprep.subr.mxu0 0.0
    %1301 = vmatpush1.msra.mxu0 0.0
    %1302 = vmatprep.subr.mxu0 0.0
    %1303 = vmatpush1.msra.mxu0 0.0
    %1304 = vmatprep.mubr.f32.mxu0 0.0
    %1305 = vmatmul.mubr.f32.gmra.mrb[0].mxu0 %v1217
    %v1306 = vpop.f32.mrb[0].mxu0
    %v1307 = vadd.f32 0.0, %v1306
    %v1308 = vpop.f32.mrb[0].mxu0
    %v1309 = vadd.f32 0.0, %v1308
    %1310 = vmatprep.mubr.f32.mxu0 0.0
    %1311 = vmatmul.mubr.f32.gmra.mrb[0].mxu0 %v1220
    %v1312 = vpop.f32.mrb[0].mxu0
    %v1313 = vadd.f32 0.0, %v1312
    %v1314 = vpop.f32.mrb[0].mxu0
    %v1315 = vadd.f32 0.0, %v1314
    %1316 = vmatprep.mubr.f32.mxu0 0.0
    %1317 = vmatmul.mubr.f32.gmra.mrb[0].mxu0 %v1223
    %v1318 = vpop.f32.mrb[0].mxu0
    %v1319 = vadd.f32 0.0, %v1318
    %v1320 = vpop.f32.mrb[0].mxu0
    %v1321 = vadd.f32 0.0, %v1320
    %1322 = vmatprep.mubr.f32.mxu0 0.0
    %1323 = vmatmul.mubr.f32.gmra.mrb[0].mxu0 %v1226
    %v1324 = vpop.f32.mrb[0].mxu0
    %v1325 = vadd.f32 0.0, %v1324
    %v1326 = vpop.f32.mrb[0].mxu0
    %v1327 = vadd.f32 0.0, %v1326
    %1328 = vmatprep.mubr.f32.mxu0 0.0
    %1329 = vmatmul.mubr.f32.gmra.mrb[0].mxu0 %v1229
    %v1330 = vpop.f32.mrb[0].mxu0
    %v1331 = vadd.f32 0.0, %v1330
    %v1332 = vpop.f32.mrb[0].mxu0
    %v1333 = vadd.f32 0.0, %v1332
    %1334 = vmatprep.mubr.f32.mxu0 0.0
    %1335 = vmatmul.mubr.f32.gmra.mrb[0].mxu0 %v1232
    %v1336 = vpop.f32.mrb[0].mxu0
    %v1337 = vadd.f32 0.0, %v1336
    %v1338 = vpop.f32.mrb[0].mxu0
    %v1339 = vadd.f32 0.0, %v1338
    %1340 = vmatprep.mubr.f32.mxu0 0.0
    %1341 = vmatmul.mubr.f32.gmra.mrb[0].mxu0 %v1235
    %v1342 = vpop.f32.mrb[0].mxu0
    %v1343 = vadd.f32 0.0, %v1342
    %v1344 = vpop.f32.mrb[0].mxu0
    %v1345 = vadd.f32 0.0, %v1344
    %1346 = vmatprep.mubr.f32.mxu0 0.0
    %1347 = vmatmul.mubr.f32.gmra.mrb[0].mxu0 %v1238
    %v1348 = vpop.f32.mrb[0].mxu0
    %v1349 = vadd.f32 0.0, %v1348
    %v1350 = vpop.f32.mrb[0].mxu0
    %v1351 = vadd.f32 0.0, %v1350
    %1352 = vdwg.mxu0
    %v1354 = vsel %vm257, %v1200, 0
    %v1357 = vsel %vm257, %v1201, 0
    %v1360 = vsel %vm257, %v1202, 0
    %v1363 = vsel %vm257, %v1203, 0
    %v1366 = vsel %vm257, %v1204, 0
    %v1369 = vsel %vm257, %v1205, 0
    %v1372 = vsel %vm257, %v1206, 0
    %v1375 = vsel %vm257, %v1207, 0
    %1377 = vmatprep.subr.mxu0 %v38
    %1378 = vmatpush1.msra.mxu0 %v37
    %1379 = vmatprep.subr.mxu0 %v40
    %1380 = vmatpush1.msra.mxu0 %v39
    %1381 = vmatprep.subr.mxu0 %v42
    %1382 = vmatpush1.msra.mxu0 %v41
    %1383 = vmatprep.subr.mxu0 %v44
    %1384 = vmatpush1.msra.mxu0 %v43
    %1385 = vmatprep.subr.mxu0 0.0
    %1386 = vmatpush1.msra.mxu0 0.0
    %1387 = vmatprep.subr.mxu0 0.0
    %1388 = vmatpush1.msra.mxu0 0.0
    %1389 = vmatprep.subr.mxu0 0.0
    %1390 = vmatpush1.msra.mxu0 0.0
    %1391 = vmatprep.subr.mxu0 0.0
    %1392 = vmatpush1.msra.mxu0 0.0
    %1393 = vmatprep.subr.mxu0 0.0
    %1394 = vmatpush1.msra.mxu0 0.0
    %1395 = vmatprep.subr.mxu0 0.0
    %1396 = vmatpush1.msra.mxu0 0.0
    %1397 = vmatprep.subr.mxu0 0.0
    %1398 = vmatpush1.msra.mxu0 0.0
    %1399 = vmatprep.subr.mxu0 0.0
    %1400 = vmatpush1.msra.mxu0 0.0
    %1401 = vmatprep.subr.mxu0 0.0
    %1402 = vmatpush1.msra.mxu0 0.0
    %1403 = vmatprep.subr.mxu0 0.0
    %1404 = vmatpush1.msra.mxu0 0.0
    %1405 = vmatprep.subr.mxu0 0.0
    %1406 = vmatpush1.msra.mxu0 0.0
    %1407 = vmatprep.subr.mxu0 0.0
    %1408 = vmatpush1.msra.mxu0 0.0
    %1409 = vmatprep.subr.mxu0 0.0
    %1410 = vmatpush1.msra.mxu0 0.0
    %1411 = vmatprep.subr.mxu0 0.0
    %1412 = vmatpush1.msra.mxu0 0.0
    %1413 = vmatprep.subr.mxu0 0.0
    %1414 = vmatpush1.msra.mxu0 0.0
    %1415 = vmatprep.subr.mxu0 0.0
    %1416 = vmatpush1.msra.mxu0 0.0
    %1417 = vmatprep.subr.mxu0 0.0
    %1418 = vmatpush1.msra.mxu0 0.0
    %1419 = vmatprep.subr.mxu0 0.0
    %1420 = vmatpush1.msra.mxu0 0.0
    %1421 = vmatprep.subr.mxu0 0.0
    %1422 = vmatpush1.msra.mxu0 0.0
    %1423 = vmatprep.subr.mxu0 0.0
    %1424 = vmatpush1.msra.mxu0 0.0
    %1425 = vmatprep.subr.mxu0 0.0
    %1426 = vmatpush1.msra.mxu0 0.0
    %1427 = vmatprep.subr.mxu0 0.0
    %1428 = vmatpush1.msra.mxu0 0.0
    %1429 = vmatprep.subr.mxu0 0.0
    %1430 = vmatpush1.msra.mxu0 0.0
    %1431 = vmatprep.subr.mxu0 0.0
    %1432 = vmatpush1.msra.mxu0 0.0
    %1433 = vmatprep.subr.mxu0 0.0
    %1434 = vmatpush1.msra.mxu0 0.0
    %1435 = vmatprep.subr.mxu0 0.0
    %1436 = vmatpush1.msra.mxu0 0.0
    %1437 = vmatprep.subr.mxu0 0.0
    %1438 = vmatpush1.msra.mxu0 0.0
    %1439 = vmatprep.subr.mxu0 0.0
    %1440 = vmatpush1.msra.mxu0 0.0
    %1441 = vmatprep.mubr.f32.mxu0 0.0
    %1442 = vmatmul.mubr.f32.gmra.mrb[0].mxu0 %v1354
    %v1443 = vpop.f32.mrb[0].mxu0
    %v1444 = vadd.f32 %v1307, %v1443
    %v1445 = vpop.f32.mrb[0].mxu0
    %v1446 = vadd.f32 %v1309, %v1445
    %1447 = vmatprep.mubr.f32.mxu0 0.0
    %1448 = vmatmul.mubr.f32.gmra.mrb[0].mxu0 %v1357
    %v1449 = vpop.f32.mrb[0].mxu0
    %v1450 = vadd.f32 %v1313, %v1449
    %v1451 = vpop.f32.mrb[0].mxu0
    %v1452 = vadd.f32 %v1315, %v1451
    %1453 = vmatprep.mubr.f32.mxu0 0.0
    %1454 = vmatmul.mubr.f32.gmra.mrb[0].mxu0 %v1360
    %v1455 = vpop.f32.mrb[0].mxu0
    %v1456 = vadd.f32 %v1319, %v1455
    %v1457 = vpop.f32.mrb[0].mxu0
    %v1458 = vadd.f32 %v1321, %v1457
    %1459 = vmatprep.mubr.f32.mxu0 0.0
    %1460 = vmatmul.mubr.f32.gmra.mrb[0].mxu0 %v1363
    %v1461 = vpop.f32.mrb[0].mxu0
    %v1462 = vadd.f32 %v1325, %v1461
    %v1463 = vpop.f32.mrb[0].mxu0
    %v1464 = vadd.f32 %v1327, %v1463
    %1465 = vmatprep.mubr.f32.mxu0 0.0
    %1466 = vmatmul.mubr.f32.gmra.mrb[0].mxu0 %v1366
    %v1467 = vpop.f32.mrb[0].mxu0
    %v1468 = vadd.f32 %v1331, %v1467
    %v1469 = vpop.f32.mrb[0].mxu0
    %v1470 = vadd.f32 %v1333, %v1469
    %1471 = vmatprep.mubr.f32.mxu0 0.0
    %1472 = vmatmul.mubr.f32.gmra.mrb[0].mxu0 %v1369
    %v1473 = vpop.f32.mrb[0].mxu0
    %v1474 = vadd.f32 %v1337, %v1473
    %v1475 = vpop.f32.mrb[0].mxu0
    %v1476 = vadd.f32 %v1339, %v1475
    %1477 = vmatprep.mubr.f32.mxu0 0.0
    %1478 = vmatmul.mubr.f32.gmra.mrb[0].mxu0 %v1372
    %v1479 = vpop.f32.mrb[0].mxu0
    %v1480 = vadd.f32 %v1343, %v1479
    %v1481 = vpop.f32.mrb[0].mxu0
    %v1482 = vadd.f32 %v1345, %v1481
    %1483 = vmatprep.mubr.f32.mxu0 0.0
    %1484 = vmatmul.mubr.f32.gmra.mrb[0].mxu0 %v1375
    %v1485 = vpop.f32.mrb[0].mxu0
    %v1486 = vadd.f32 %v1349, %v1485
    %v1487 = vpop.f32.mrb[0].mxu0
    %v1488 = vadd.f32 %v1351, %v1487
    %1489 = vdwg.mxu0
    %v1490 = vlaneseq
    %v1491 = vshrl.u32 %v1490, 7
    %v1492 = vsub.s32 1, %v1491
    %v1493 = vrot.slane %v73, %v1492
    %v1494 = vlaneseq
    %v1495 = vshrl.u32 %v1494, 7
    %v1496 = vsub.s32 1, %v1495
    %v1497 = vrot.slane %v74, %v1496
    %v1498 = vadd.f32 %v1444, %v1493
    %v1499 = vadd.f32 %v1446, %v1497
    %v1500 = vadd.f32 %v1450, %v1493
    %v1501 = vadd.f32 %v1452, %v1497
    %v1502 = vadd.f32 %v1456, %v1493
    %v1503 = vadd.f32 %v1458, %v1497
    %v1504 = vadd.f32 %v1462, %v1493
    %v1505 = vadd.f32 %v1464, %v1497
    %v1506 = vadd.f32 %v1468, %v1493
    %v1507 = vadd.f32 %v1470, %v1497
    %v1508 = vadd.f32 %v1474, %v1493
    %v1509 = vadd.f32 %v1476, %v1497
    %v1510 = vadd.f32 %v1480, %v1493
    %v1511 = vadd.f32 %v1482, %v1497
    %v1512 = vadd.f32 %v1486, %v1493
    %v1513 = vadd.f32 %v1488, %v1497
    %1514 = vst [vmem:[#allocation2] sm:$0xff] %v1498
    %1515 = vst [vmem:[#allocation2 + $0x8] sm:$0xff] %v1499
    %1516 = vst [vmem:[#allocation2 + $0x10] sm:$0xff] %v1500
    %1517 = vst [vmem:[#allocation2 + $0x18] sm:$0xff] %v1501
    %1518 = vst [vmem:[#allocation2 + $0x20] sm:$0xff] %v1502
    %1519 = vst [vmem:[#allocation2 + $0x28] sm:$0xff] %v1503
    %1520 = vst [vmem:[#allocation2 + $0x30] sm:$0xff] %v1504
    %1521 = vst [vmem:[#allocation2 + $0x38] sm:$0xff] %v1505
    %1522 = vst [vmem:[#allocation2 + $0x40] sm:$0xff] %v1506
    %1523 = vst [vmem:[#allocation2 + $0x48] sm:$0xff] %v1507
    %1524 = vst [vmem:[#allocation2 + $0x50] sm:$0xff] %v1508
    %1525 = vst [vmem:[#allocation2 + $0x58] sm:$0xff] %v1509
    %1526 = vst [vmem:[#allocation2 + $0x60] sm:$0xff] %v1510
    %1527 = vst [vmem:[#allocation2 + $0x68] sm:$0xff] %v1511
    %1528 = vst [vmem:[#allocation2 + $0x70] sm:$0xff] %v1512
    %1529 = vst [vmem:[#allocation2 + $0x78] sm:$0xff] %v1513
    %v1530 = vld [vmem:[#allocation2] sm:$0xff]
    %v1531 = vld [vmem:[#allocation2 + $0x8] sm:$0xff]
    %1532 = vmatprep.subr.mxu0 %v54
    %1533 = vmatpush1.msra.mxu0 %v53
    %1534 = vmatprep.subr.mxu0 %v56
    %1535 = vmatpush1.msra.mxu0 %v55
    %1536 = vmatprep.subr.mxu0 %v58
    %1537 = vmatpush1.msra.mxu0 %v57
    %1538 = vmatprep.subr.mxu0 %v60
    %1539 = vmatpush1.msra.mxu0 %v59
    %1540 = vmatprep.subr.mxu0 0.0
    %1541 = vmatpush1.msra.mxu0 0.0
    %1542 = vmatprep.subr.mxu0 0.0
    %1543 = vmatpush1.msra.mxu0 0.0
    %1544 = vmatprep.subr.mxu0 0.0
    %1545 = vmatpush1.msra.mxu0 0.0
    %1546 = vmatprep.subr.mxu0 0.0
    %1547 = vmatpush1.msra.mxu0 0.0
    %1548 = vmatprep.subr.mxu0 0.0
    %1549 = vmatpush1.msra.mxu0 0.0
    %1550 = vmatprep.subr.mxu0 0.0
    %1551 = vmatpush1.msra.mxu0 0.0
    %1552 = vmatprep.subr.mxu0 0.0
    %1553 = vmatpush1.msra.mxu0 0.0
    %1554 = vmatprep.subr.mxu0 0.0
    %1555 = vmatpush1.msra.mxu0 0.0
    %1556 = vmatprep.subr.mxu0 0.0
    %1557 = vmatpush1.msra.mxu0 0.0
    %1558 = vmatprep.subr.mxu0 0.0
    %1559 = vmatpush1.msra.mxu0 0.0
    %1560 = vmatprep.subr.mxu0 0.0
    %1561 = vmatpush1.msra.mxu0 0.0
    %1562 = vmatprep.subr.mxu0 0.0
    %1563 = vmatpush1.msra.mxu0 0.0
    %1564 = vmatprep.subr.mxu0 0.0
    %1565 = vmatpush1.msra.mxu0 0.0
    %1566 = vmatprep.subr.mxu0 0.0
    %1567 = vmatpush1.msra.mxu0 0.0
    %1568 = vmatprep.subr.mxu0 0.0
    %1569 = vmatpush1.msra.mxu0 0.0
    %1570 = vmatprep.subr.mxu0 0.0
    %1571 = vmatpush1.msra.mxu0 0.0
    %1572 = vmatprep.subr.mxu0 0.0
    %1573 = vmatpush1.msra.mxu0 0.0
    %1574 = vmatprep.subr.mxu0 0.0
    %1575 = vmatpush1.msra.mxu0 0.0
    %1576 = vmatprep.subr.mxu0 0.0
    %1577 = vmatpush1.msra.mxu0 0.0
    %1578 = vmatprep.subr.mxu0 0.0
    %1579 = vmatpush1.msra.mxu0 0.0
    %1580 = vmatprep.subr.mxu0 0.0
    %1581 = vmatpush1.msra.mxu0 0.0
    %1582 = vmatprep.subr.mxu0 0.0
    %1583 = vmatpush1.msra.mxu0 0.0
    %1584 = vmatprep.subr.mxu0 0.0
    %1585 = vmatpush1.msra.mxu0 0.0
    %1586 = vmatprep.subr.mxu0 0.0
    %1587 = vmatpush1.msra.mxu0 0.0
    %1588 = vmatprep.subr.mxu0 0.0
    %1589 = vmatpush1.msra.mxu0 0.0
    %1590 = vmatprep.subr.mxu0 0.0
    %1591 = vmatpush1.msra.mxu0 0.0
    %1592 = vmatprep.subr.mxu0 0.0
    %1593 = vmatpush1.msra.mxu0 0.0
    %1594 = vmatprep.subr.mxu0 0.0
    %1595 = vmatpush1.msra.mxu0 0.0
    %1596 = vmatprep.mubr.f32.mxu0 0.0
    %1597 = vmatmul.mubr.f32.gmra.mrb[0].mxu0 %v259
    %v1598 = vpop.f32.mrb[0].mxu0
    %v1599 = vadd.f32 0.0, %v1598
    %v1600 = vpop.f32.mrb[0].mxu0
    %v1601 = vadd.f32 0.0, %v1600
    %1602 = vdwg.mxu0
    %v1603 = vadd.f32 %v1530, %v1599
    %v1604 = vadd.f32 %v1531, %v1601
    %v1605 = vsel %vm77, %v1603, %v1604
    %v1606 = vmul.f32 %v1605, %v83
    %v1607 = vtanh.pop %v1606
    %v1608 = vmul.f32 %v1607, %v83
    %v1609 = vadd.f32 %v1608, %v84
    %v1610 = vmul.f32 %v1609, 0.0
    %1612 = vrot.lane.b32.xlu0 %v1609, 64
    %v1613 = vpop.permute.xlu0 %1612
    %v1615 = vmul.f32 %v1609, %v1613
    %1617 = vrot.lane.b32.xlu0 %v1615, 32
    %v1618 = vpop.permute.xlu0 %1617
    %v1620 = vadd.f32 %v1610, %v1618
    %v1621 = vtanh.pop %v1620
    %1623 = vrot.lane.b32.xlu0 %v1621, 64
    %v1624 = vpop.permute.xlu0 %1623
    %v1626 = vmul.f32 %v1609, %v1624
    %1628 = vrot.lane.b32.xlu0 %v1626, 32
    %v1629 = vpop.permute.xlu0 %1628
    %1631 = vst.msk [vmem:[#allocation5] sm:$0xff] %vm257, %v1629
    %v1632 = vrot.slane %v1626, 2
    %v1634 = vrot.slane %v1626, 6
    %v1636 = vsel %vm365, %v1632, %v1634
    %v1637 = vsel %vm367, %v1636, %v1626
    %1639 = vrot.lane.b32.xlu0 %v1637, 32
    %v1640 = vpop.permute.xlu0 %1639
    %s1642 = scalar_lea.vmem [#allocation6], 56
    %1643 = vst.msk [vmem:[%s1642] sm:$0xff] %vm257, %v1640
    %v1644 = vld [vmem:[%s375] sm:$0xff]
    %v1645 = vld [vmem:[%s375 + $0x8] sm:$0xff]
    %v1646 = vsel %vm257, %v1629, 0
    %1648 = vmatprep.subr.mxu0 %v54
    %1649 = vmatpush1.msra.mxu0 %v53
    %1650 = vmatprep.subr.mxu0 %v56
    %1651 = vmatpush1.msra.mxu0 %v55
    %1652 = vmatprep.subr.mxu0 %v58
    %1653 = vmatpush1.msra.mxu0 %v57
    %1654 = vmatprep.subr.mxu0 %v60
    %1655 = vmatpush1.msra.mxu0 %v59
    %1656 = vmatprep.subr.mxu0 0.0
    %1657 = vmatpush1.msra.mxu0 0.0
    %1658 = vmatprep.subr.mxu0 0.0
    %1659 = vmatpush1.msra.mxu0 0.0
    %1660 = vmatprep.subr.mxu0 0.0
    %1661 = vmatpush1.msra.mxu0 0.0
    %1662 = vmatprep.subr.mxu0 0.0
    %1663 = vmatpush1.msra.mxu0 0.0
    %1664 = vmatprep.subr.mxu0 0.0
    %1665 = vmatpush1.msra.mxu0 0.0
    %1666 = vmatprep.subr.mxu0 0.0
    %1667 = vmatpush1.msra.mxu0 0.0
    %1668 = vmatprep.subr.mxu0 0.0
    %1669 = vmatpush1.msra.mxu0 0.0
    %1670 = vmatprep.subr.mxu0 0.0
    %1671 = vmatpush1.msra.mxu0 0.0
    %1672 = vmatprep.subr.mxu0 0.0
    %1673 = vmatpush1.msra.mxu0 0.0
    %1674 = vmatprep.subr.mxu0 0.0
    %1675 = vmatpush1.msra.mxu0 0.0
    %1676 = vmatprep.subr.mxu0 0.0
    %1677 = vmatpush1.msra.mxu0 0.0
    %1678 = vmatprep.subr.mxu0 0.0
    %1679 = vmatpush1.msra.mxu0 0.0
    %1680 = vmatprep.subr.mxu0 0.0
    %1681 = vmatpush1.msra.mxu0 0.0
    %1682 = vmatprep.subr.mxu0 0.0
    %1683 = vmatpush1.msra.mxu0 0.0
    %1684 = vmatprep.subr.mxu0 0.0
    %1685 = vmatpush1.msra.mxu0 0.0
    %1686 = vmatprep.subr.mxu0 0.0
    %1687 = vmatpush1.msra.mxu0 0.0
    %1688 = vmatprep.subr.mxu0 0.0
    %1689 = vmatpush1.msra.mxu0 0.0
    %1690 = vmatprep.subr.mxu0 0.0
    %1691 = vmatpush1.msra.mxu0 0.0
    %1692 = vmatprep.subr.mxu0 0.0
    %1693 = vmatpush1.msra.mxu0 0.0
    %1694 = vmatprep.subr.mxu0 0.0
    %1695 = vmatpush1.msra.mxu0 0.0
    %1696 = vmatprep.subr.mxu0 0.0
    %1697 = vmatpush1.msra.mxu0 0.0
    %1698 = vmatprep.subr.mxu0 0.0
    %1699 = vmatpush1.msra.mxu0 0.0
    %1700 = vmatprep.subr.mxu0 0.0
    %1701 = vmatpush1.msra.mxu0 0.0
    %1702 = vmatprep.subr.mxu0 0.0
    %1703 = vmatpush1.msra.mxu0 0.0
    %1704 = vmatprep.subr.mxu0 0.0
    %1705 = vmatpush1.msra.mxu0 0.0
    %1706 = vmatprep.subr.mxu0 0.0
    %1707 = vmatpush1.msra.mxu0 0.0
    %1708 = vmatprep.subr.mxu0 0.0
    %1709 = vmatpush1.msra.mxu0 0.0
    %1710 = vmatprep.subr.mxu0 0.0
    %1711 = vmatpush1.msra.mxu0 0.0
    %1712 = vmatprep.mubr.f32.mxu0 0.0
    %1713 = vmatmul.mubr.f32.gmra.mrb[0].mxu0 %v1646
    %v1714 = vpop.f32.mrb[0].mxu0
    %v1715 = vadd.f32 0.0, %v1714
    %v1716 = vpop.f32.mrb[0].mxu0
    %v1717 = vadd.f32 0.0, %v1716
    %1718 = vdwg.mxu0
    %v1719 = vadd.f32 %v1644, %v1715
    %v1720 = vadd.f32 %v1645, %v1717
    %v1721 = vsel %vm77, %v1719, %v1720
    %v1722 = vmul.f32 %v1721, %v83
    %v1723 = vtanh.pop %v1722
    %v1724 = vmul.f32 %v1723, %v83
    %v1725 = vadd.f32 %v1724, %v84
    %v1726 = vmul.f32 %v1725, %v1620
    %1728 = vrot.lane.b32.xlu0 %v1725, 64
    %v1729 = vpop.permute.xlu0 %1728
    %v1731 = vmul.f32 %v1725, %v1729
    %1733 = vrot.lane.b32.xlu0 %v1731, 32
    %v1734 = vpop.permute.xlu0 %1733
    %v1736 = vadd.f32 %v1726, %v1734
    %v1737 = vtanh.pop %v1736
    %1739 = vrot.lane.b32.xlu0 %v1737, 64
    %v1740 = vpop.permute.xlu0 %1739
    %v1742 = vmul.f32 %v1725, %v1740
    %1744 = vrot.lane.b32.xlu0 %v1742, 32
    %v1745 = vpop.permute.xlu0 %1744
    %s1747 = scalar_lea.vmem [#allocation5], 8
    %1748 = vst.msk [vmem:[%s1747] sm:$0xff] %vm257, %v1745
    %v1749 = vrot.slane %v1742, 2
    %v1751 = vrot.slane %v1742, 6
    %v1753 = vsel %vm365, %v1749, %v1751
    %v1754 = vsel %vm367, %v1753, %v1742
    %1756 = vrot.lane.b32.xlu0 %v1754, 32
    %v1757 = vpop.permute.xlu0 %1756
    %s1759 = scalar_lea.vmem [#allocation6], 48
    %1760 = vst.msk [vmem:[%s1759] sm:$0xff] %vm257, %v1757
    %v1761 = vld [vmem:[%s493] sm:$0xff]
    %v1762 = vld [vmem:[%s493 + $0x8] sm:$0xff]
    %v1763 = vsel %vm257, %v1745, 0
    %1765 = vmatprep.subr.mxu0 %v54
    %1766 = vmatpush1.msra.mxu0 %v53
    %1767 = vmatprep.subr.mxu0 %v56
    %1768 = vmatpush1.msra.mxu0 %v55
    %1769 = vmatprep.subr.mxu0 %v58
    %1770 = vmatpush1.msra.mxu0 %v57
    %1771 = vmatprep.subr.mxu0 %v60
    %1772 = vmatpush1.msra.mxu0 %v59
    %1773 = vmatprep.subr.mxu0 0.0
    %1774 = vmatpush1.msra.mxu0 0.0
    %1775 = vmatprep.subr.mxu0 0.0
    %1776 = vmatpush1.msra.mxu0 0.0
    %1777 = vmatprep.subr.mxu0 0.0
    %1778 = vmatpush1.msra.mxu0 0.0
    %1779 = vmatprep.subr.mxu0 0.0
    %1780 = vmatpush1.msra.mxu0 0.0
    %1781 = vmatprep.subr.mxu0 0.0
    %1782 = vmatpush1.msra.mxu0 0.0
    %1783 = vmatprep.subr.mxu0 0.0
    %1784 = vmatpush1.msra.mxu0 0.0
    %1785 = vmatprep.subr.mxu0 0.0
    %1786 = vmatpush1.msra.mxu0 0.0
    %1787 = vmatprep.subr.mxu0 0.0
    %1788 = vmatpush1.msra.mxu0 0.0
    %1789 = vmatprep.subr.mxu0 0.0
    %1790 = vmatpush1.msra.mxu0 0.0
    %1791 = vmatprep.subr.mxu0 0.0
    %1792 = vmatpush1.msra.mxu0 0.0
    %1793 = vmatprep.subr.mxu0 0.0
    %1794 = vmatpush1.msra.mxu0 0.0
    %1795 = vmatprep.subr.mxu0 0.0
    %1796 = vmatpush1.msra.mxu0 0.0
    %1797 = vmatprep.subr.mxu0 0.0
    %1798 = vmatpush1.msra.mxu0 0.0
    %1799 = vmatprep.subr.mxu0 0.0
    %1800 = vmatpush1.msra.mxu0 0.0
    %1801 = vmatprep.subr.mxu0 0.0
    %1802 = vmatpush1.msra.mxu0 0.0
    %1803 = vmatprep.subr.mxu0 0.0
    %1804 = vmatpush1.msra.mxu0 0.0
    %1805 = vmatprep.subr.mxu0 0.0
    %1806 = vmatpush1.msra.mxu0 0.0
    %1807 = vmatprep.subr.mxu0 0.0
    %1808 = vmatpush1.msra.mxu0 0.0
    %1809 = vmatprep.subr.mxu0 0.0
    %1810 = vmatpush1.msra.mxu0 0.0
    %1811 = vmatprep.subr.mxu0 0.0
    %1812 = vmatpush1.msra.mxu0 0.0
    %1813 = vmatprep.subr.mxu0 0.0
    %1814 = vmatpush1.msra.mxu0 0.0
    %1815 = vmatprep.subr.mxu0 0.0
    %1816 = vmatpush1.msra.mxu0 0.0
    %1817 = vmatprep.subr.mxu0 0.0
    %1818 = vmatpush1.msra.mxu0 0.0
    %1819 = vmatprep.subr.mxu0 0.0
    %1820 = vmatpush1.msra.mxu0 0.0
    %1821 = vmatprep.subr.mxu0 0.0
    %1822 = vmatpush1.msra.mxu0 0.0
    %1823 = vmatprep.subr.mxu0 0.0
    %1824 = vmatpush1.msra.mxu0 0.0
    %1825 = vmatprep.subr.mxu0 0.0
    %1826 = vmatpush1.msra.mxu0 0.0
    %1827 = vmatprep.subr.mxu0 0.0
    %1828 = vmatpush1.msra.mxu0 0.0
    %1829 = vmatprep.mubr.f32.mxu0 0.0
    %1830 = vmatmul.mubr.f32.gmra.mrb[0].mxu0 %v1763
    %v1831 = vpop.f32.mrb[0].mxu0
    %v1832 = vadd.f32 0.0, %v1831
    %v1833 = vpop.f32.mrb[0].mxu0
    %v1834 = vadd.f32 0.0, %v1833
    %1835 = vdwg.mxu0
    %v1836 = vadd.f32 %v1761, %v1832
    %v1837 = vadd.f32 %v1762, %v1834
    %v1838 = vsel %vm77, %v1836, %v1837
    %v1839 = vmul.f32 %v1838, %v83
    %v1840 = vtanh.pop %v1839
    %v1841 = vmul.f32 %v1840, %v83
    %v1842 = vadd.f32 %v1841, %v84
    %v1843 = vmul.f32 %v1842, %v1736
    %1845 = vrot.lane.b32.xlu0 %v1842, 64
    %v1846 = vpop.permute.xlu0 %1845
    %v1848 = vmul.f32 %v1842, %v1846
    %1850 = vrot.lane.b32.xlu0 %v1848, 32
    %v1851 = vpop.permute.xlu0 %1850
    %v1853 = vadd.f32 %v1843, %v1851
    %v1854 = vtanh.pop %v1853
    %1856 = vrot.lane.b32.xlu0 %v1854, 64
    %v1857 = vpop.permute.xlu0 %1856
    %v1859 = vmul.f32 %v1842, %v1857
    %1861 = vrot.lane.b32.xlu0 %v1859, 32
    %v1862 = vpop.permute.xlu0 %1861
    %s1864 = scalar_lea.vmem [#allocation5], 16
    %1865 = vst.msk [vmem:[%s1864] sm:$0xff] %vm257, %v1862
    %v1866 = vrot.slane %v1859, 2
    %v1868 = vrot.slane %v1859, 6
    %v1870 = vsel %vm365, %v1866, %v1868
    %v1871 = vsel %vm367, %v1870, %v1859
    %1873 = vrot.lane.b32.xlu0 %v1871, 32
    %v1874 = vpop.permute.xlu0 %1873
    %s1876 = scalar_lea.vmem [#allocation6], 40
    %1877 = vst.msk [vmem:[%s1876] sm:$0xff] %vm257, %v1874
    %v1878 = vld [vmem:[%s611] sm:$0xff]
    %v1879 = vld [vmem:[%s611 + $0x8] sm:$0xff]
    %v1880 = vsel %vm257, %v1862, 0
    %1882 = vmatprep.subr.mxu0 %v54
    %1883 = vmatpush1.msra.mxu0 %v53
    %1884 = vmatprep.subr.mxu0 %v56
    %1885 = vmatpush1.msra.mxu0 %v55
    %1886 = vmatprep.subr.mxu0 %v58
    %1887 = vmatpush1.msra.mxu0 %v57
    %1888 = vmatprep.subr.mxu0 %v60
    %1889 = vmatpush1.msra.mxu0 %v59
    %1890 = vmatprep.subr.mxu0 0.0
    %1891 = vmatpush1.msra.mxu0 0.0
    %1892 = vmatprep.subr.mxu0 0.0
    %1893 = vmatpush1.msra.mxu0 0.0
    %1894 = vmatprep.subr.mxu0 0.0
    %1895 = vmatpush1.msra.mxu0 0.0
    %1896 = vmatprep.subr.mxu0 0.0
    %1897 = vmatpush1.msra.mxu0 0.0
    %1898 = vmatprep.subr.mxu0 0.0
    %1899 = vmatpush1.msra.mxu0 0.0
    %1900 = vmatprep.subr.mxu0 0.0
    %1901 = vmatpush1.msra.mxu0 0.0
    %1902 = vmatprep.subr.mxu0 0.0
    %1903 = vmatpush1.msra.mxu0 0.0
    %1904 = vmatprep.subr.mxu0 0.0
    %1905 = vmatpush1.msra.mxu0 0.0
    %1906 = vmatprep.subr.mxu0 0.0
    %1907 = vmatpush1.msra.mxu0 0.0
    %1908 = vmatprep.subr.mxu0 0.0
    %1909 = vmatpush1.msra.mxu0 0.0
    %1910 = vmatprep.subr.mxu0 0.0
    %1911 = vmatpush1.msra.mxu0 0.0
    %1912 = vmatprep.subr.mxu0 0.0
    %1913 = vmatpush1.msra.mxu0 0.0
    %1914 = vmatprep.subr.mxu0 0.0
    %1915 = vmatpush1.msra.mxu0 0.0
    %1916 = vmatprep.subr.mxu0 0.0
    %1917 = vmatpush1.msra.mxu0 0.0
    %1918 = vmatprep.subr.mxu0 0.0
    %1919 = vmatpush1.msra.mxu0 0.0
    %1920 = vmatprep.subr.mxu0 0.0
    %1921 = vmatpush1.msra.mxu0 0.0
    %1922 = vmatprep.subr.mxu0 0.0
    %1923 = vmatpush1.msra.mxu0 0.0
    %1924 = vmatprep.subr.mxu0 0.0
    %1925 = vmatpush1.msra.mxu0 0.0
    %1926 = vmatprep.subr.mxu0 0.0
    %1927 = vmatpush1.msra.mxu0 0.0
    %1928 = vmatprep.subr.mxu0 0.0
    %1929 = vmatpush1.msra.mxu0 0.0
    %1930 = vmatprep.subr.mxu0 0.0
    %1931 = vmatpush1.msra.mxu0 0.0
    %1932 = vmatprep.subr.mxu0 0.0
    %1933 = vmatpush1.msra.mxu0 0.0
    %1934 = vmatprep.subr.mxu0 0.0
    %1935 = vmatpush1.msra.mxu0 0.0
    %1936 = vmatprep.subr.mxu0 0.0
    %1937 = vmatpush1.msra.mxu0 0.0
    %1938 = vmatprep.subr.mxu0 0.0
    %1939 = vmatpush1.msra.mxu0 0.0
    %1940 = vmatprep.subr.mxu0 0.0
    %1941 = vmatpush1.msra.mxu0 0.0
    %1942 = vmatprep.subr.mxu0 0.0
    %1943 = vmatpush1.msra.mxu0 0.0
    %1944 = vmatprep.subr.mxu0 0.0
    %1945 = vmatpush1.msra.mxu0 0.0
    %1946 = vmatprep.mubr.f32.mxu0 0.0
    %1947 = vmatmul.mubr.f32.gmra.mrb[0].mxu0 %v1880
    %v1948 = vpop.f32.mrb[0].mxu0
    %v1949 = vadd.f32 0.0, %v1948
    %v1950 = vpop.f32.mrb[0].mxu0
    %v1951 = vadd.f32 0.0, %v1950
    %1952 = vdwg.mxu0
    %v1953 = vadd.f32 %v1878, %v1949
    %v1954 = vadd.f32 %v1879, %v1951
    %v1955 = vsel %vm77, %v1953, %v1954
    %v1956 = vmul.f32 %v1955, %v83
    %v1957 = vtanh.pop %v1956
    %v1958 = vmul.f32 %v1957, %v83
    %v1959 = vadd.f32 %v1958, %v84
    %v1960 = vmul.f32 %v1959, %v1853
    %1962 = vrot.lane.b32.xlu0 %v1959, 64
    %v1963 = vpop.permute.xlu0 %1962
    %v1965 = vmul.f32 %v1959, %v1963
    %1967 = vrot.lane.b32.xlu0 %v1965, 32
    %v1968 = vpop.permute.xlu0 %1967
    %v1970 = vadd.f32 %v1960, %v1968
    %v1971 = vtanh.pop %v1970
    %1973 = vrot.lane.b32.xlu0 %v1971, 64
    %v1974 = vpop.permute.xlu0 %1973
    %v1976 = vmul.f32 %v1959, %v1974
    %1978 = vrot.lane.b32.xlu0 %v1976, 32
    %v1979 = vpop.permute.xlu0 %1978
    %s1981 = scalar_lea.vmem [#allocation5], 24
    %1982 = vst.msk [vmem:[%s1981] sm:$0xff] %vm257, %v1979
    %v1983 = vrot.slane %v1976, 2
    %v1985 = vrot.slane %v1976, 6
    %v1987 = vsel %vm365, %v1983, %v1985
    %v1988 = vsel %vm367, %v1987, %v1976
    %1990 = vrot.lane.b32.xlu0 %v1988, 32
    %v1991 = vpop.permute.xlu0 %1990
    %s1993 = scalar_lea.vmem [#allocation6], 32
    %1994 = vst.msk [vmem:[%s1993] sm:$0xff] %vm257, %v1991
    %v1995 = vld [vmem:[%s729] sm:$0xff]
    %v1996 = vld [vmem:[%s729 + $0x8] sm:$0xff]
    %v1997 = vsel %vm257, %v1979, 0
    %1999 = vmatprep.subr.mxu0 %v54
    %2000 = vmatpush1.msra.mxu0 %v53
    %2001 = vmatprep.subr.mxu0 %v56
    %2002 = vmatpush1.msra.mxu0 %v55
    %2003 = vmatprep.subr.mxu0 %v58
    %2004 = vmatpush1.msra.mxu0 %v57
    %2005 = vmatprep.subr.mxu0 %v60
    %2006 = vmatpush1.msra.mxu0 %v59
    %2007 = vmatprep.subr.mxu0 0.0
    %2008 = vmatpush1.msra.mxu0 0.0
    %2009 = vmatprep.subr.mxu0 0.0
    %2010 = vmatpush1.msra.mxu0 0.0
    %2011 = vmatprep.subr.mxu0 0.0
    %2012 = vmatpush1.msra.mxu0 0.0
    %2013 = vmatprep.subr.mxu0 0.0
    %2014 = vmatpush1.msra.mxu0 0.0
    %2015 = vmatprep.subr.mxu0 0.0
    %2016 = vmatpush1.msra.mxu0 0.0
    %2017 = vmatprep.subr.mxu0 0.0
    %2018 = vmatpush1.msra.mxu0 0.0
    %2019 = vmatprep.subr.mxu0 0.0
    %2020 = vmatpush1.msra.mxu0 0.0
    %2021 = vmatprep.subr.mxu0 0.0
    %2022 = vmatpush1.msra.mxu0 0.0
    %2023 = vmatprep.subr.mxu0 0.0
    %2024 = vmatpush1.msra.mxu0 0.0
    %2025 = vmatprep.subr.mxu0 0.0
    %2026 = vmatpush1.msra.mxu0 0.0
    %2027 = vmatprep.subr.mxu0 0.0
    %2028 = vmatpush1.msra.mxu0 0.0
    %2029 = vmatprep.subr.mxu0 0.0
    %2030 = vmatpush1.msra.mxu0 0.0
    %2031 = vmatprep.subr.mxu0 0.0
    %2032 = vmatpush1.msra.mxu0 0.0
    %2033 = vmatprep.subr.mxu0 0.0
    %2034 = vmatpush1.msra.mxu0 0.0
    %2035 = vmatprep.subr.mxu0 0.0
    %2036 = vmatpush1.msra.mxu0 0.0
    %2037 = vmatprep.subr.mxu0 0.0
    %2038 = vmatpush1.msra.mxu0 0.0
    %2039 = vmatprep.subr.mxu0 0.0
    %2040 = vmatpush1.msra.mxu0 0.0
    %2041 = vmatprep.subr.mxu0 0.0
    %2042 = vmatpush1.msra.mxu0 0.0
    %2043 = vmatprep.subr.mxu0 0.0
    %2044 = vmatpush1.msra.mxu0 0.0
    %2045 = vmatprep.subr.mxu0 0.0
    %2046 = vmatpush1.msra.mxu0 0.0
    %2047 = vmatprep.subr.mxu0 0.0
    %2048 = vmatpush1.msra.mxu0 0.0
    %2049 = vmatprep.subr.mxu0 0.0
    %2050 = vmatpush1.msra.mxu0 0.0
    %2051 = vmatprep.subr.mxu0 0.0
    %2052 = vmatpush1.msra.mxu0 0.0
    %2053 = vmatprep.subr.mxu0 0.0
    %2054 = vmatpush1.msra.mxu0 0.0
    %2055 = vmatprep.subr.mxu0 0.0
    %2056 = vmatpush1.msra.mxu0 0.0
    %2057 = vmatprep.subr.mxu0 0.0
    %2058 = vmatpush1.msra.mxu0 0.0
    %2059 = vmatprep.subr.mxu0 0.0
    %2060 = vmatpush1.msra.mxu0 0.0
    %2061 = vmatprep.subr.mxu0 0.0
    %2062 = vmatpush1.msra.mxu0 0.0
    %2063 = vmatprep.mubr.f32.mxu0 0.0
    %2064 = vmatmul.mubr.f32.gmra.mrb[0].mxu0 %v1997
    %v2065 = vpop.f32.mrb[0].mxu0
    %v2066 = vadd.f32 0.0, %v2065
    %v2067 = vpop.f32.mrb[0].mxu0
    %v2068 = vadd.f32 0.0, %v2067
    %2069 = vdwg.mxu0
    %v2070 = vadd.f32 %v1995, %v2066
    %v2071 = vadd.f32 %v1996, %v2068
    %v2072 = vsel %vm77, %v2070, %v2071
    %v2073 = vmul.f32 %v2072, %v83
    %v2074 = vtanh.pop %v2073
    %v2075 = vmul.f32 %v2074, %v83
    %v2076 = vadd.f32 %v2075, %v84
    %v2077 = vmul.f32 %v2076, %v1970
    %2079 = vrot.lane.b32.xlu0 %v2076, 64
    %v2080 = vpop.permute.xlu0 %2079
    %v2082 = vmul.f32 %v2076, %v2080
    %2084 = vrot.lane.b32.xlu0 %v2082, 32
    %v2085 = vpop.permute.xlu0 %2084
    %v2087 = vadd.f32 %v2077, %v2085
    %v2088 = vtanh.pop %v2087
    %2090 = vrot.lane.b32.xlu0 %v2088, 64
    %v2091 = vpop.permute.xlu0 %2090
    %v2093 = vmul.f32 %v2076, %v2091
    %2095 = vrot.lane.b32.xlu0 %v2093, 32
    %v2096 = vpop.permute.xlu0 %2095
    %s2098 = scalar_lea.vmem [#allocation5], 32
    %2099 = vst.msk [vmem:[%s2098] sm:$0xff] %vm257, %v2096
    %v2100 = vrot.slane %v2093, 2
    %v2102 = vrot.slane %v2093, 6
    %v2104 = vsel %vm365, %v2100, %v2102
    %v2105 = vsel %vm367, %v2104, %v2093
    %2107 = vrot.lane.b32.xlu0 %v2105, 32
    %v2108 = vpop.permute.xlu0 %2107
    %s2110 = scalar_lea.vmem [#allocation6], 24
    %2111 = vst.msk [vmem:[%s2110] sm:$0xff] %vm257, %v2108
    %v2112 = vld [vmem:[%s847] sm:$0xff]
    %v2113 = vld [vmem:[%s847 + $0x8] sm:$0xff]
    %v2114 = vsel %vm257, %v2096, 0
    %2116 = vmatprep.subr.mxu0 %v54
    %2117 = vmatpush1.msra.mxu0 %v53
    %2118 = vmatprep.subr.mxu0 %v56
    %2119 = vmatpush1.msra.mxu0 %v55
    %2120 = vmatprep.subr.mxu0 %v58
    %2121 = vmatpush1.msra.mxu0 %v57
    %2122 = vmatprep.subr.mxu0 %v60
    %2123 = vmatpush1.msra.mxu0 %v59
    %2124 = vmatprep.subr.mxu0 0.0
    %2125 = vmatpush1.msra.mxu0 0.0
    %2126 = vmatprep.subr.mxu0 0.0
    %2127 = vmatpush1.msra.mxu0 0.0
    %2128 = vmatprep.subr.mxu0 0.0
    %2129 = vmatpush1.msra.mxu0 0.0
    %2130 = vmatprep.subr.mxu0 0.0
    %2131 = vmatpush1.msra.mxu0 0.0
    %2132 = vmatprep.subr.mxu0 0.0
    %2133 = vmatpush1.msra.mxu0 0.0
    %2134 = vmatprep.subr.mxu0 0.0
    %2135 = vmatpush1.msra.mxu0 0.0
    %2136 = vmatprep.subr.mxu0 0.0
    %2137 = vmatpush1.msra.mxu0 0.0
    %2138 = vmatprep.subr.mxu0 0.0
    %2139 = vmatpush1.msra.mxu0 0.0
    %2140 = vmatprep.subr.mxu0 0.0
    %2141 = vmatpush1.msra.mxu0 0.0
    %2142 = vmatprep.subr.mxu0 0.0
    %2143 = vmatpush1.msra.mxu0 0.0
    %2144 = vmatprep.subr.mxu0 0.0
    %2145 = vmatpush1.msra.mxu0 0.0
    %2146 = vmatprep.subr.mxu0 0.0
    %2147 = vmatpush1.msra.mxu0 0.0
    %2148 = vmatprep.subr.mxu0 0.0
    %2149 = vmatpush1.msra.mxu0 0.0
    %2150 = vmatprep.subr.mxu0 0.0
    %2151 = vmatpush1.msra.mxu0 0.0
    %2152 = vmatprep.subr.mxu0 0.0
    %2153 = vmatpush1.msra.mxu0 0.0
    %2154 = vmatprep.subr.mxu0 0.0
    %2155 = vmatpush1.msra.mxu0 0.0
    %2156 = vmatprep.subr.mxu0 0.0
    %2157 = vmatpush1.msra.mxu0 0.0
    %2158 = vmatprep.subr.mxu0 0.0
    %2159 = vmatpush1.msra.mxu0 0.0
    %2160 = vmatprep.subr.mxu0 0.0
    %2161 = vmatpush1.msra.mxu0 0.0
    %2162 = vmatprep.subr.mxu0 0.0
    %2163 = vmatpush1.msra.mxu0 0.0
    %2164 = vmatprep.subr.mxu0 0.0
    %2165 = vmatpush1.msra.mxu0 0.0
    %2166 = vmatprep.subr.mxu0 0.0
    %2167 = vmatpush1.msra.mxu0 0.0
    %2168 = vmatprep.subr.mxu0 0.0
    %2169 = vmatpush1.msra.mxu0 0.0
    %2170 = vmatprep.subr.mxu0 0.0
    %2171 = vmatpush1.msra.mxu0 0.0
    %2172 = vmatprep.subr.mxu0 0.0
    %2173 = vmatpush1.msra.mxu0 0.0
    %2174 = vmatprep.subr.mxu0 0.0
    %2175 = vmatpush1.msra.mxu0 0.0
    %2176 = vmatprep.subr.mxu0 0.0
    %2177 = vmatpush1.msra.mxu0 0.0
    %2178 = vmatprep.subr.mxu0 0.0
    %2179 = vmatpush1.msra.mxu0 0.0
    %2180 = vmatprep.mubr.f32.mxu0 0.0
    %2181 = vmatmul.mubr.f32.gmra.mrb[0].mxu0 %v2114
    %v2182 = vpop.f32.mrb[0].mxu0
    %v2183 = vadd.f32 0.0, %v2182
    %v2184 = vpop.f32.mrb[0].mxu0
    %v2185 = vadd.f32 0.0, %v2184
    %2186 = vdwg.mxu0
    %v2187 = vadd.f32 %v2112, %v2183
    %v2188 = vadd.f32 %v2113, %v2185
    %v2189 = vsel %vm77, %v2187, %v2188
    %v2190 = vmul.f32 %v2189, %v83
    %v2191 = vtanh.pop %v2190
    %v2192 = vmul.f32 %v2191, %v83
    %v2193 = vadd.f32 %v2192, %v84
    %v2194 = vmul.f32 %v2193, %v2087
    %2196 = vrot.lane.b32.xlu0 %v2193, 64
    %v2197 = vpop.permute.xlu0 %2196
    %v2199 = vmul.f32 %v2193, %v2197
    %2201 = vrot.lane.b32.xlu0 %v2199, 32
    %v2202 = vpop.permute.xlu0 %2201
    %v2204 = vadd.f32 %v2194, %v2202
    %v2205 = vtanh.pop %v2204
    %2207 = vrot.lane.b32.xlu0 %v2205, 64
    %v2208 = vpop.permute.xlu0 %2207
    %v2210 = vmul.f32 %v2193, %v2208
    %2212 = vrot.lane.b32.xlu0 %v2210, 32
    %v2213 = vpop.permute.xlu0 %2212
    %s2215 = scalar_lea.vmem [#allocation5], 40
    %2216 = vst.msk [vmem:[%s2215] sm:$0xff] %vm257, %v2213
    %v2217 = vrot.slane %v2210, 2
    %v2219 = vrot.slane %v2210, 6
    %v2221 = vsel %vm365, %v2217, %v2219
    %v2222 = vsel %vm367, %v2221, %v2210
    %2224 = vrot.lane.b32.xlu0 %v2222, 32
    %v2225 = vpop.permute.xlu0 %2224
    %s2227 = scalar_lea.vmem [#allocation6], 16
    %2228 = vst.msk [vmem:[%s2227] sm:$0xff] %vm257, %v2225
    %v2229 = vld [vmem:[%s965] sm:$0xff]
    %v2230 = vld [vmem:[%s965 + $0x8] sm:$0xff]
    %v2231 = vsel %vm257, %v2213, 0
    %2233 = vmatprep.subr.mxu0 %v54
    %2234 = vmatpush1.msra.mxu0 %v53
    %2235 = vmatprep.subr.mxu0 %v56
    %2236 = vmatpush1.msra.mxu0 %v55
    %2237 = vmatprep.subr.mxu0 %v58
    %2238 = vmatpush1.msra.mxu0 %v57
    %2239 = vmatprep.subr.mxu0 %v60
    %2240 = vmatpush1.msra.mxu0 %v59
    %2241 = vmatprep.subr.mxu0 0.0
    %2242 = vmatpush1.msra.mxu0 0.0
    %2243 = vmatprep.subr.mxu0 0.0
    %2244 = vmatpush1.msra.mxu0 0.0
    %2245 = vmatprep.subr.mxu0 0.0
    %2246 = vmatpush1.msra.mxu0 0.0
    %2247 = vmatprep.subr.mxu0 0.0
    %2248 = vmatpush1.msra.mxu0 0.0
    %2249 = vmatprep.subr.mxu0 0.0
    %2250 = vmatpush1.msra.mxu0 0.0
    %2251 = vmatprep.subr.mxu0 0.0
    %2252 = vmatpush1.msra.mxu0 0.0
    %2253 = vmatprep.subr.mxu0 0.0
    %2254 = vmatpush1.msra.mxu0 0.0
    %2255 = vmatprep.subr.mxu0 0.0
    %2256 = vmatpush1.msra.mxu0 0.0
    %2257 = vmatprep.subr.mxu0 0.0
    %2258 = vmatpush1.msra.mxu0 0.0
    %2259 = vmatprep.subr.mxu0 0.0
    %2260 = vmatpush1.msra.mxu0 0.0
    %2261 = vmatprep.subr.mxu0 0.0
    %2262 = vmatpush1.msra.mxu0 0.0
    %2263 = vmatprep.subr.mxu0 0.0
    %2264 = vmatpush1.msra.mxu0 0.0
    %2265 = vmatprep.subr.mxu0 0.0
    %2266 = vmatpush1.msra.mxu0 0.0
    %2267 = vmatprep.subr.mxu0 0.0
    %2268 = vmatpush1.msra.mxu0 0.0
    %2269 = vmatprep.subr.mxu0 0.0
    %2270 = vmatpush1.msra.mxu0 0.0
    %2271 = vmatprep.subr.mxu0 0.0
    %2272 = vmatpush1.msra.mxu0 0.0
    %2273 = vmatprep.subr.mxu0 0.0
    %2274 = vmatpush1.msra.mxu0 0.0
    %2275 = vmatprep.subr.mxu0 0.0
    %2276 = vmatpush1.msra.mxu0 0.0
    %2277 = vmatprep.subr.mxu0 0.0
    %2278 = vmatpush1.msra.mxu0 0.0
    %2279 = vmatprep.subr.mxu0 0.0
    %2280 = vmatpush1.msra.mxu0 0.0
    %2281 = vmatprep.subr.mxu0 0.0
    %2282 = vmatpush1.msra.mxu0 0.0
    %2283 = vmatprep.subr.mxu0 0.0
    %2284 = vmatpush1.msra.mxu0 0.0
    %2285 = vmatprep.subr.mxu0 0.0
    %2286 = vmatpush1.msra.mxu0 0.0
    %2287 = vmatprep.subr.mxu0 0.0
    %2288 = vmatpush1.msra.mxu0 0.0
    %2289 = vmatprep.subr.mxu0 0.0
    %2290 = vmatpush1.msra.mxu0 0.0
    %2291 = vmatprep.subr.mxu0 0.0
    %2292 = vmatpush1.msra.mxu0 0.0
    %2293 = vmatprep.subr.mxu0 0.0
    %2294 = vmatpush1.msra.mxu0 0.0
    %2295 = vmatprep.subr.mxu0 0.0
    %2296 = vmatpush1.msra.mxu0 0.0
    %2297 = vmatprep.mubr.f32.mxu0 0.0
    %2298 = vmatmul.mubr.f32.gmra.mrb[0].mxu0 %v2231
    %v2299 = vpop.f32.mrb[0].mxu0
    %v2300 = vadd.f32 0.0, %v2299
    %v2301 = vpop.f32.mrb[0].mxu0
    %v2302 = vadd.f32 0.0, %v2301
    %2303 = vdwg.mxu0
    %v2304 = vadd.f32 %v2229, %v2300
    %v2305 = vadd.f32 %v2230, %v2302
    %v2306 = vsel %vm77, %v2304, %v2305
    %v2307 = vmul.f32 %v2306, %v83
    %v2308 = vtanh.pop %v2307
    %v2309 = vmul.f32 %v2308, %v83
    %v2310 = vadd.f32 %v2309, %v84
    %v2311 = vmul.f32 %v2310, %v2204
    %2313 = vrot.lane.b32.xlu0 %v2310, 64
    %v2314 = vpop.permute.xlu0 %2313
    %v2316 = vmul.f32 %v2310, %v2314
    %2318 = vrot.lane.b32.xlu0 %v2316, 32
    %v2319 = vpop.permute.xlu0 %2318
    %v2321 = vadd.f32 %v2311, %v2319
    %v2322 = vtanh.pop %v2321
    %2324 = vrot.lane.b32.xlu0 %v2322, 64
    %v2325 = vpop.permute.xlu0 %2324
    %v2327 = vmul.f32 %v2310, %v2325
    %2329 = vrot.lane.b32.xlu0 %v2327, 32
    %v2330 = vpop.permute.xlu0 %2329
    %s2332 = scalar_lea.vmem [#allocation5], 48
    %2333 = vst.msk [vmem:[%s2332] sm:$0xff] %vm257, %v2330
    %v2334 = vrot.slane %v2327, 2
    %v2336 = vrot.slane %v2327, 6
    %v2338 = vsel %vm365, %v2334, %v2336
    %v2339 = vsel %vm367, %v2338, %v2327
    %2341 = vrot.lane.b32.xlu0 %v2339, 32
    %v2342 = vpop.permute.xlu0 %2341
    %s2344 = scalar_lea.vmem [#allocation6], 8
    %2345 = vst.msk [vmem:[%s2344] sm:$0xff] %vm257, %v2342
    %v2346 = vld [vmem:[%s1083] sm:$0xff]
    %v2347 = vld [vmem:[%s1083 + $0x8] sm:$0xff]
    %v2348 = vsel %vm257, %v2330, 0
    %2350 = vmatprep.subr.mxu0 %v54
    %2351 = vmatpush1.msra.mxu0 %v53
    %2352 = vmatprep.subr.mxu0 %v56
    %2353 = vmatpush1.msra.mxu0 %v55
    %2354 = vmatprep.subr.mxu0 %v58
    %2355 = vmatpush1.msra.mxu0 %v57
    %2356 = vmatprep.subr.mxu0 %v60
    %2357 = vmatpush1.msra.mxu0 %v59
    %2358 = vmatprep.subr.mxu0 0.0
    %2359 = vmatpush1.msra.mxu0 0.0
    %2360 = vmatprep.subr.mxu0 0.0
    %2361 = vmatpush1.msra.mxu0 0.0
    %2362 = vmatprep.subr.mxu0 0.0
    %2363 = vmatpush1.msra.mxu0 0.0
    %2364 = vmatprep.subr.mxu0 0.0
    %2365 = vmatpush1.msra.mxu0 0.0
    %2366 = vmatprep.subr.mxu0 0.0
    %2367 = vmatpush1.msra.mxu0 0.0
    %2368 = vmatprep.subr.mxu0 0.0
    %2369 = vmatpush1.msra.mxu0 0.0
    %2370 = vmatprep.subr.mxu0 0.0
    %2371 = vmatpush1.msra.mxu0 0.0
    %2372 = vmatprep.subr.mxu0 0.0
    %2373 = vmatpush1.msra.mxu0 0.0
    %2374 = vmatprep.subr.mxu0 0.0
    %2375 = vmatpush1.msra.mxu0 0.0
    %2376 = vmatprep.subr.mxu0 0.0
    %2377 = vmatpush1.msra.mxu0 0.0
    %2378 = vmatprep.subr.mxu0 0.0
    %2379 = vmatpush1.msra.mxu0 0.0
    %2380 = vmatprep.subr.mxu0 0.0
    %2381 = vmatpush1.msra.mxu0 0.0
    %2382 = vmatprep.subr.mxu0 0.0
    %2383 = vmatpush1.msra.mxu0 0.0
    %2384 = vmatprep.subr.mxu0 0.0
    %2385 = vmatpush1.msra.mxu0 0.0
    %2386 = vmatprep.subr.mxu0 0.0
    %2387 = vmatpush1.msra.mxu0 0.0
    %2388 = vmatprep.subr.mxu0 0.0
    %2389 = vmatpush1.msra.mxu0 0.0
    %2390 = vmatprep.subr.mxu0 0.0
    %2391 = vmatpush1.msra.mxu0 0.0
    %2392 = vmatprep.subr.mxu0 0.0
    %2393 = vmatpush1.msra.mxu0 0.0
    %2394 = vmatprep.subr.mxu0 0.0
    %2395 = vmatpush1.msra.mxu0 0.0
    %2396 = vmatprep.subr.mxu0 0.0
    %2397 = vmatpush1.msra.mxu0 0.0
    %2398 = vmatprep.subr.mxu0 0.0
    %2399 = vmatpush1.msra.mxu0 0.0
    %2400 = vmatprep.subr.mxu0 0.0
    %2401 = vmatpush1.msra.mxu0 0.0
    %2402 = vmatprep.subr.mxu0 0.0
    %2403 = vmatpush1.msra.mxu0 0.0
    %2404 = vmatprep.subr.mxu0 0.0
    %2405 = vmatpush1.msra.mxu0 0.0
    %2406 = vmatprep.subr.mxu0 0.0
    %2407 = vmatpush1.msra.mxu0 0.0
    %2408 = vmatprep.subr.mxu0 0.0
    %2409 = vmatpush1.msra.mxu0 0.0
    %2410 = vmatprep.subr.mxu0 0.0
    %2411 = vmatpush1.msra.mxu0 0.0
    %2412 = vmatprep.subr.mxu0 0.0
    %2413 = vmatpush1.msra.mxu0 0.0
    %2414 = vmatprep.mubr.f32.mxu0 0.0
    %2415 = vmatmul.mubr.f32.gmra.mrb[0].mxu0 %v2348
    %v2416 = vpop.f32.mrb[0].mxu0
    %v2417 = vadd.f32 0.0, %v2416
    %v2418 = vpop.f32.mrb[0].mxu0
    %v2419 = vadd.f32 0.0, %v2418
    %2420 = vdwg.mxu0
    %v2421 = vadd.f32 %v2346, %v2417
    %v2422 = vadd.f32 %v2347, %v2419
    %v2423 = vsel %vm77, %v2421, %v2422
    %v2424 = vmul.f32 %v2423, %v83
    %v2425 = vtanh.pop %v2424
    %v2426 = vmul.f32 %v2425, %v83
    %v2427 = vadd.f32 %v2426, %v84
    %v2428 = vmul.f32 %v2427, %v2321
    %2430 = vrot.lane.b32.xlu0 %v2427, 64
    %v2431 = vpop.permute.xlu0 %2430
    %v2433 = vmul.f32 %v2427, %v2431
    %2435 = vrot.lane.b32.xlu0 %v2433, 32
    %v2436 = vpop.permute.xlu0 %2435
    %v2438 = vadd.f32 %v2428, %v2436
    %v2439 = vtanh.pop %v2438
    %2441 = vrot.lane.b32.xlu0 %v2439, 64
    %v2442 = vpop.permute.xlu0 %2441
    %v2444 = vmul.f32 %v2427, %v2442
    %2446 = vrot.lane.b32.xlu0 %v2444, 32
    %v2447 = vpop.permute.xlu0 %2446
    %s2449 = scalar_lea.vmem [#allocation5], 56
    %2450 = vst.msk [vmem:[%s2449] sm:$0xff] %vm257, %v2447
    %v2451 = vrot.slane %v2444, 2
    %v2453 = vrot.slane %v2444, 6
    %v2455 = vsel %vm365, %v2451, %v2453
    %v2456 = vsel %vm367, %v2455, %v2444
    %2458 = vrot.lane.b32.xlu0 %v2456, 32
    %v2459 = vpop.permute.xlu0 %2458
    %2461 = vst.msk [vmem:[#allocation6] sm:$0xff] %vm257, %v2459
    %v2462 = vld [vmem:[#allocation5] sm:$0xff]
    %v2463 = vld [vmem:[#allocation5 + $0x8] sm:$0xff]
    %v2464 = vld [vmem:[#allocation5 + $0x10] sm:$0xff]
    %v2465 = vld [vmem:[#allocation5 + $0x18] sm:$0xff]
    %v2466 = vld [vmem:[#allocation5 + $0x20] sm:$0xff]
    %v2467 = vld [vmem:[#allocation5 + $0x28] sm:$0xff]
    %v2468 = vld [vmem:[#allocation5 + $0x30] sm:$0xff]
    %v2469 = vld [vmem:[#allocation5 + $0x38] sm:$0xff]
    %v2470 = vld [vmem:[#allocation6] sm:$0xff]
    %v2471 = vld [vmem:[#allocation6 + $0x8] sm:$0xff]
    %v2472 = vld [vmem:[#allocation6 + $0x10] sm:$0xff]
    %v2473 = vld [vmem:[#allocation6 + $0x18] sm:$0xff]
    %v2474 = vld [vmem:[#allocation6 + $0x20] sm:$0xff]
    %v2475 = vld [vmem:[#allocation6 + $0x28] sm:$0xff]
    %v2476 = vld [vmem:[#allocation6 + $0x30] sm:$0xff]
    %v2477 = vld [vmem:[#allocation6 + $0x38] sm:$0xff]
    %2486 = vrot.lane.b32.xlu0 %v2470, 32
    %v2487 = vpop.permute.xlu0 %2486
    %2488 = vrot.lane.b32.xlu0 %v2471, 32
    %v2489 = vpop.permute.xlu0 %2488
    %2490 = vrot.lane.b32.xlu0 %v2472, 32
    %v2491 = vpop.permute.xlu0 %2490
    %2492 = vrot.lane.b32.xlu0 %v2473, 32
    %v2493 = vpop.permute.xlu0 %2492
    %2494 = vrot.lane.b32.xlu0 %v2474, 32
    %v2495 = vpop.permute.xlu0 %2494
    %2496 = vrot.lane.b32.xlu0 %v2475, 32
    %v2497 = vpop.permute.xlu0 %2496
    %2498 = vrot.lane.b32.xlu0 %v2476, 32
    %v2499 = vpop.permute.xlu0 %2498
    %2500 = vrot.lane.b32.xlu0 %v2477, 32
    %v2501 = vpop.permute.xlu0 %2500
    %v2510 = vsel %vm257, %v2462, %v2487
    %v2511 = vsel %vm257, %v2463, %v2489
    %v2512 = vsel %vm257, %v2464, %v2491
    %v2513 = vsel %vm257, %v2465, %v2493
    %v2514 = vsel %vm257, %v2466, %v2495
    %v2515 = vsel %vm257, %v2467, %v2497
    %v2516 = vsel %vm257, %v2468, %v2499
    %v2517 = vsel %vm257, %v2469, %v2501
    %v2518 = vlaneseq
    %v2519 = vshrl.u32 %v2518, 7
    %v2520 = vsub.s32 2, %v2519
    %v2521 = vrot.slane %v73, %v2520
    %vm2522 = vcmask 523264
    %v2524 = vsel %vm2522, %v2510, 0
    %v2527 = vsel %vm2522, %v2511, 0
    %v2530 = vsel %vm2522, %v2512, 0
    %v2533 = vsel %vm2522, %v2513, 0
    %v2536 = vsel %vm2522, %v2514, 0
    %v2539 = vsel %vm2522, %v2515, 0
    %v2542 = vsel %vm2522, %v2516, 0
    %v2545 = vsel %vm2522, %v2517, 0
    %2547 = vmatprep.subr.mxu0 0.0
    %2548 = vmatpush1.msra.mxu0 %v61
    %2549 = vmatprep.subr.mxu0 0.0
    %2550 = vmatpush1.msra.mxu0 %v62
    %2551 = vmatprep.subr.mxu0 0.0
    %2552 = vmatpush1.msra.mxu0 %v63
    %2553 = vmatprep.subr.mxu0 0.0
    %2554 = vmatpush1.msra.mxu0 %v64
    %2555 = vmatprep.subr.mxu0 0.0
    %2556 = vmatpush1.msra.mxu0 %v65
    %2557 = vmatprep.subr.mxu0 0.0
    %2558 = vmatpush1.msra.mxu0 %v66
    %2559 = vmatprep.subr.mxu0 0.0
    %2560 = vmatpush1.msra.mxu0 %v67
    %2561 = vmatprep.subr.mxu0 0.0
    %2562 = vmatpush1.msra.mxu0 %v68
    %2563 = vmatprep.subr.mxu0 0.0
    %2564 = vmatpush1.msra.mxu0 0.0
    %2565 = vmatprep.subr.mxu0 0.0
    %2566 = vmatpush1.msra.mxu0 0.0
    %2567 = vmatprep.subr.mxu0 0.0
    %2568 = vmatpush1.msra.mxu0 0.0
    %2569 = vmatprep.subr.mxu0 0.0
    %2570 = vmatpush1.msra.mxu0 0.0
    %2571 = vmatprep.subr.mxu0 0.0
    %2572 = vmatpush1.msra.mxu0 0.0
    %2573 = vmatprep.subr.mxu0 0.0
    %2574 = vmatpush1.msra.mxu0 0.0
    %2575 = vmatprep.subr.mxu0 0.0
    %2576 = vmatpush1.msra.mxu0 0.0
    %2577 = vmatprep.subr.mxu0 0.0
    %2578 = vmatpush1.msra.mxu0 0.0
    %2579 = vmatprep.subr.mxu0 0.0
    %2580 = vmatpush1.msra.mxu0 0.0
    %2581 = vmatprep.subr.mxu0 0.0
    %2582 = vmatpush1.msra.mxu0 0.0
    %2583 = vmatprep.subr.mxu0 0.0
    %2584 = vmatpush1.msra.mxu0 0.0
    %2585 = vmatprep.subr.mxu0 0.0
    %2586 = vmatpush1.msra.mxu0 0.0
    %2587 = vmatprep.subr.mxu0 0.0
    %2588 = vmatpush1.msra.mxu0 0.0
    %2589 = vmatprep.subr.mxu0 0.0
    %2590 = vmatpush1.msra.mxu0 0.0
    %2591 = vmatprep.subr.mxu0 0.0
    %2592 = vmatpush1.msra.mxu0 0.0
    %2593 = vmatprep.subr.mxu0 0.0
    %2594 = vmatpush1.msra.mxu0 0.0
    %2595 = vmatprep.subr.mxu0 0.0
    %2596 = vmatpush1.msra.mxu0 0.0
    %2597 = vmatprep.subr.mxu0 0.0
    %2598 = vmatpush1.msra.mxu0 0.0
    %2599 = vmatprep.subr.mxu0 0.0
    %2600 = vmatpush1.msra.mxu0 0.0
    %2601 = vmatprep.subr.mxu0 0.0
    %2602 = vmatpush1.msra.mxu0 0.0
    %2603 = vmatprep.subr.mxu0 0.0
    %2604 = vmatpush1.msra.mxu0 0.0
    %2605 = vmatprep.subr.mxu0 0.0
    %2606 = vmatpush1.msra.mxu0 0.0
    %2607 = vmatprep.subr.mxu0 0.0
    %2608 = vmatpush1.msra.mxu0 0.0
    %2609 = vmatprep.subr.mxu0 0.0
    %2610 = vmatpush1.msra.mxu0 0.0
    %2611 = vmatprep.mubr.f32.mxu0 0.0
    %2612 = vmatmul.mubr.f32.gmra.mrb[0].mxu0 %v2524
    %v2613 = vpop.f32.mrb[0].mxu0
    %v2614 = vadd.f32 %v2521, %v2613
    %v2615 = vpop.f32.mrb[0].mxu0
    %2616 = vmatprep.mubr.f32.mxu0 0.0
    %2617 = vmatmul.mubr.f32.gmra.mrb[0].mxu0 %v2527
    %v2618 = vpop.f32.mrb[0].mxu0
    %v2619 = vadd.f32 %v2521, %v2618
    %v2620 = vpop.f32.mrb[0].mxu0
    %2621 = vmatprep.mubr.f32.mxu0 0.0
    %2622 = vmatmul.mubr.f32.gmra.mrb[0].mxu0 %v2530
    %v2623 = vpop.f32.mrb[0].mxu0
    %v2624 = vadd.f32 %v2521, %v2623
    %v2625 = vpop.f32.mrb[0].mxu0
    %2626 = vmatprep.mubr.f32.mxu0 0.0
    %2627 = vmatmul.mubr.f32.gmra.mrb[0].mxu0 %v2533
    %v2628 = vpop.f32.mrb[0].mxu0
    %v2629 = vadd.f32 %v2521, %v2628
    %v2630 = vpop.f32.mrb[0].mxu0
    %2631 = vmatprep.mubr.f32.mxu0 0.0
    %2632 = vmatmul.mubr.f32.gmra.mrb[0].mxu0 %v2536
    %v2633 = vpop.f32.mrb[0].mxu0
    %v2634 = vadd.f32 %v2521, %v2633
    %v2635 = vpop.f32.mrb[0].mxu0
    %2636 = vmatprep.mubr.f32.mxu0 0.0
    %2637 = vmatmul.mubr.f32.gmra.mrb[0].mxu0 %v2539
    %v2638 = vpop.f32.mrb[0].mxu0
    %v2639 = vadd.f32 %v2521, %v2638
    %v2640 = vpop.f32.mrb[0].mxu0
    %2641 = vmatprep.mubr.f32.mxu0 0.0
    %2642 = vmatmul.mubr.f32.gmra.mrb[0].mxu0 %v2542
    %v2643 = vpop.f32.mrb[0].mxu0
    %v2644 = vadd.f32 %v2521, %v2643
    %v2645 = vpop.f32.mrb[0].mxu0
    %2646 = vmatprep.mubr.f32.mxu0 0.0
    %2647 = vmatmul.mubr.f32.gmra.mrb[0].mxu0 %v2545
    %v2648 = vpop.f32.mrb[0].mxu0
    %v2649 = vadd.f32 %v2521, %v2648
    %v2650 = vpop.f32.mrb[0].mxu0
    %2651 = vdwg.mxu0
    %v2652 = vmax.f32 %v2614, 0.0
    %v2653 = vmax.f32 %v2619, 0.0
    %v2654 = vmax.f32 %v2624, 0.0
    %v2655 = vmax.f32 %v2629, 0.0
    %v2656 = vmax.f32 %v2634, 0.0
    %v2657 = vmax.f32 %v2639, 0.0
    %v2658 = vmax.f32 %v2644, 0.0
    %v2659 = vmax.f32 %v2649, 0.0
    %v2660 = vlaneseq
    %v2661 = vshrl.u32 %v2660, 7
    %v2662 = vsub.s32 3, %v2661
    %v2663 = vrot.slane %v73, %v2662
    %v2665 = vsel %vm257, %v2652, 0
    %v2668 = vsel %vm257, %v2653, 0
    %v2671 = vsel %vm257, %v2654, 0
    %v2674 = vsel %vm257, %v2655, 0
    %v2677 = vsel %vm257, %v2656, 0
    %v2680 = vsel %vm257, %v2657, 0
    %v2683 = vsel %vm257, %v2658, 0
    %v2686 = vsel %vm257, %v2659, 0
    %2688 = vmatprep.subr.mxu0 0.0
    %2689 = vmatpush1.msra.mxu0 %v69
    %2690 = vmatprep.subr.mxu0 0.0
    %2691 = vmatpush1.msra.mxu0 %v70
    %2692 = vmatprep.subr.mxu0 0.0
    %2693 = vmatpush1.msra.mxu0 %v71
    %2694 = vmatprep.subr.mxu0 0.0
    %2695 = vmatpush1.msra.mxu0 %v72
    %2696 = vmatprep.subr.mxu0 0.0
    %2697 = vmatpush1.msra.mxu0 0.0
    %2698 = vmatprep.subr.mxu0 0.0
    %2699 = vmatpush1.msra.mxu0 0.0
    %2700 = vmatprep.subr.mxu0 0.0
    %2701 = vmatpush1.msra.mxu0 0.0
    %2702 = vmatprep.subr.mxu0 0.0
    %2703 = vmatpush1.msra.mxu0 0.0
    %2704 = vmatprep.subr.mxu0 0.0
    %2705 = vmatpush1.msra.mxu0 0.0
    %2706 = vmatprep.subr.mxu0 0.0
    %2707 = vmatpush1.msra.mxu0 0.0
    %2708 = vmatprep.subr.mxu0 0.0
    %2709 = vmatpush1.msra.mxu0 0.0
    %2710 = vmatprep.subr.mxu0 0.0
    %2711 = vmatpush1.msra.mxu0 0.0
    %2712 = vmatprep.subr.mxu0 0.0
    %2713 = vmatpush1.msra.mxu0 0.0
    %2714 = vmatprep.subr.mxu0 0.0
    %2715 = vmatpush1.msra.mxu0 0.0
    %2716 = vmatprep.subr.mxu0 0.0
    %2717 = vmatpush1.msra.mxu0 0.0
    %2718 = vmatprep.subr.mxu0 0.0
    %2719 = vmatpush1.msra.mxu0 0.0
    %2720 = vmatprep.subr.mxu0 0.0
    %2721 = vmatpush1.msra.mxu0 0.0
    %2722 = vmatprep.subr.mxu0 0.0
    %2723 = vmatpush1.msra.mxu0 0.0
    %2724 = vmatprep.subr.mxu0 0.0
    %2725 = vmatpush1.msra.mxu0 0.0
    %2726 = vmatprep.subr.mxu0 0.0
    %2727 = vmatpush1.msra.mxu0 0.0
    %2728 = vmatprep.subr.mxu0 0.0
    %2729 = vmatpush1.msra.mxu0 0.0
    %2730 = vmatprep.subr.mxu0 0.0
    %2731 = vmatpush1.msra.mxu0 0.0
    %2732 = vmatprep.subr.mxu0 0.0
    %2733 = vmatpush1.msra.mxu0 0.0
    %2734 = vmatprep.subr.mxu0 0.0
    %2735 = vmatpush1.msra.mxu0 0.0
    %2736 = vmatprep.subr.mxu0 0.0
    %2737 = vmatpush1.msra.mxu0 0.0
    %2738 = vmatprep.subr.mxu0 0.0
    %2739 = vmatpush1.msra.mxu0 0.0
    %2740 = vmatprep.subr.mxu0 0.0
    %2741 = vmatpush1.msra.mxu0 0.0
    %2742 = vmatprep.subr.mxu0 0.0
    %2743 = vmatpush1.msra.mxu0 0.0
    %2744 = vmatprep.subr.mxu0 0.0
    %2745 = vmatpush1.msra.mxu0 0.0
    %2746 = vmatprep.subr.mxu0 0.0
    %2747 = vmatpush1.msra.mxu0 0.0
    %2748 = vmatprep.subr.mxu0 0.0
    %2749 = vmatpush1.msra.mxu0 0.0
    %2750 = vmatprep.subr.mxu0 0.0
    %2751 = vmatpush1.msra.mxu0 0.0
    %2752 = vmatprep.mubr.f32.mxu0 0.0
    %2753 = vmatmul.mubr.f32.gmra.mrb[0].mxu0 %v2665
    %v2754 = vpop.f32.mrb[0].mxu0
    %v2755 = vadd.f32 %v2663, %v2754
    %v2756 = vpop.f32.mrb[0].mxu0
    %2757 = vmatprep.mubr.f32.mxu0 0.0
    %2758 = vmatmul.mubr.f32.gmra.mrb[0].mxu0 %v2668
    %v2759 = vpop.f32.mrb[0].mxu0
    %v2760 = vadd.f32 %v2663, %v2759
    %v2761 = vpop.f32.mrb[0].mxu0
    %2762 = vmatprep.mubr.f32.mxu0 0.0
    %2763 = vmatmul.mubr.f32.gmra.mrb[0].mxu0 %v2671
    %v2764 = vpop.f32.mrb[0].mxu0
    %v2765 = vadd.f32 %v2663, %v2764
    %v2766 = vpop.f32.mrb[0].mxu0
    %2767 = vmatprep.mubr.f32.mxu0 0.0
    %2768 = vmatmul.mubr.f32.gmra.mrb[0].mxu0 %v2674
    %v2769 = vpop.f32.mrb[0].mxu0
    %v2770 = vadd.f32 %v2663, %v2769
    %v2771 = vpop.f32.mrb[0].mxu0
    %2772 = vmatprep.mubr.f32.mxu0 0.0
    %2773 = vmatmul.mubr.f32.gmra.mrb[0].mxu0 %v2677
    %v2774 = vpop.f32.mrb[0].mxu0
    %v2775 = vadd.f32 %v2663, %v2774
    %v2776 = vpop.f32.mrb[0].mxu0
    %2777 = vmatprep.mubr.f32.mxu0 0.0
    %2778 = vmatmul.mubr.f32.gmra.mrb[0].mxu0 %v2680
    %v2779 = vpop.f32.mrb[0].mxu0
    %v2780 = vadd.f32 %v2663, %v2779
    %v2781 = vpop.f32.mrb[0].mxu0
    %2782 = vmatprep.mubr.f32.mxu0 0.0
    %2783 = vmatmul.mubr.f32.gmra.mrb[0].mxu0 %v2683
    %v2784 = vpop.f32.mrb[0].mxu0
    %v2785 = vadd.f32 %v2663, %v2784
    %v2786 = vpop.f32.mrb[0].mxu0
    %2787 = vmatprep.mubr.f32.mxu0 0.0
    %2788 = vmatmul.mubr.f32.gmra.mrb[0].mxu0 %v2686
    %v2789 = vpop.f32.mrb[0].mxu0
    %v2790 = vadd.f32 %v2663, %v2789
    %v2791 = vpop.f32.mrb[0].mxu0
    %2792 = vdwg.mxu0
    %v2793 = vmax.f32 %v2755, 0.0
    %v2794 = vmax.f32 %v2760, 0.0
    %v2795 = vmax.f32 %v2765, 0.0
    %v2796 = vmax.f32 %v2770, 0.0
    %v2797 = vmax.f32 %v2775, 0.0
    %v2798 = vmax.f32 %v2780, 0.0
    %v2799 = vmax.f32 %v2785, 0.0
    %v2800 = vmax.f32 %v2790, 0.0
    %2809 = vrot.lane.b32.xlu0 %v2793, 64
    %v2810 = vpop.permute.xlu0 %2809
    %2811 = vrot.lane.b32.xlu0 %v2794, 64
    %v2812 = vpop.permute.xlu0 %2811
    %2813 = vrot.lane.b32.xlu0 %v2795, 64
    %v2814 = vpop.permute.xlu0 %2813
    %2815 = vrot.lane.b32.xlu0 %v2796, 64
    %v2816 = vpop.permute.xlu0 %2815
    %2817 = vrot.lane.b32.xlu0 %v2797, 64
    %v2818 = vpop.permute.xlu0 %2817
    %2819 = vrot.lane.b32.xlu0 %v2798, 64
    %v2820 = vpop.permute.xlu0 %2819
    %2821 = vrot.lane.b32.xlu0 %v2799, 64
    %v2822 = vpop.permute.xlu0 %2821
    %2823 = vrot.lane.b32.xlu0 %v2800, 64
    %v2824 = vpop.permute.xlu0 %2823
    %v2833 = vsel %vm2522, %v2510, %v2810
    %v2834 = vsel %vm2522, %v2511, %v2812
    %v2835 = vsel %vm2522, %v2512, %v2814
    %v2836 = vsel %vm2522, %v2513, %v2816
    %v2837 = vsel %vm2522, %v2514, %v2818
    %v2838 = vsel %vm2522, %v2515, %v2820
    %v2839 = vsel %vm2522, %v2516, %v2822
    %v2840 = vsel %vm2522, %v2517, %v2824
    %2841 = vst [vmem:[%s2] sm:$0xff] %v2833
    %2842 = vst [vmem:[%s2 + $0x8] sm:$0xff] %v2834
    %2843 = vst [vmem:[%s2 + $0x10] sm:$0xff] %v2835
    %2844 = vst [vmem:[%s2 + $0x18] sm:$0xff] %v2836
    %2845 = vst [vmem:[%s2 + $0x20] sm:$0xff] %v2837
    %2846 = vst [vmem:[%s2 + $0x28] sm:$0xff] %v2838
    %2847 = vst [vmem:[%s2 + $0x30] sm:$0xff] %v2839
    %2848 = vst [vmem:[%s2 + $0x38] sm:$0xff] %v2840
    // Predicated region
    $region14: #{ssenet_forward.1} parent=1 // pred_check
      _
    $region15: #{ssenet_forward.1} parent=1 // pred_check_branch
      %2850 = sbr.rel (0) target = $region17
    $region16: #{ssenet_forward.1} parent=1 // pred_region
      _
    $region17: #{ssenet_forward.1} parent=1 // pred_fallthru
      _
    // Predicated region
    $region18: #{ssenet_forward.1} parent=1 // pred_check
      _
    $region19: #{ssenet_forward.1} parent=1 // pred_check_branch
      %2852 = sbr.rel (0) target = $region21
    $region20: #{ssenet_forward.1} parent=1 // pred_region
      _
    $region21: #{ssenet_forward.1} parent=1 // pred_fallthru
      _
    %2853 = vsyncpa [#allocation8], 1

</llo_original>
